<compile_context>
chip_gen: v7x
topology: tpu7x:2x2x1
jax: 0.10.0
libtpu: 0.0.40
codegen_flags: <defaults>
</compile_context>

<pallas_src>
import functools

import jax
import jax.numpy as jnp
from jax.experimental import pallas as pl
from jax.experimental.pallas import tpu as pltpu


def _round_up(x, m):
    return ((x + m - 1) // m) * m


def _lstm_recurrent_kernel(gx_ref, whh_hbm, out_ref, hN_ref, cN_ref,
                           h_sc, c_sc, whh_sc, copy_sem, *,
                           hid_dim_p, t_chunk, n_time_chunks, seq_len, unroll):
    """Recurrent (serial) part of one LSTM layer.

    Grid = (batch_blocks, time_chunks); axis 1 (time) is sequential.

    gx_ref  : (T_c, B_blk, 4*Hp)  streamed, precomputed x_t @ W_ih^T + bias
    whh_hbm : (Hp, 4*Hp)          pre-transposed recurrent weight, raw HBM ref
    out_ref : (T_c, B_blk, Hp)    per-step hidden outputs
    hN_ref  : (B_blk, Hp)         final hidden (resident across time axis)
    cN_ref  : (B_blk, Hp)         final cell   (resident across time axis)
    h_sc    : (B_blk, Hp)         hidden carry (compute dtype)
    c_sc    : (B_blk, Hp)         cell carry (f32)
    whh_sc  : (Hp, 4*Hp)          single-buffered VMEM copy of W_hh^T
    copy_sem: DMA semaphore for the one-time weight copy
    """
    t_idx = pl.program_id(1)
    Hp = hid_dim_p

    @pl.when(t_idx == 0)
    def _init():
        # One-time (per batch block) HBM -> VMEM weight copy.  Single copy:
        # half the VMEM of the default double-buffered BlockSpec pipeline.
        cp = pltpu.make_async_copy(whh_hbm, whh_sc, copy_sem)
        cp.start()
        cp.wait()
        h_sc[...] = jnp.zeros_like(h_sc)
        c_sc[...] = jnp.zeros_like(c_sc)

    w_hh = whh_sc[...]                       # loop-invariant, VMEM-resident

    def cell_step(i, carry):
        h_prev = h_sc[...]
        c_prev = c_sc[...]
        # Only the recurrent matmul sits on the serial critical path.
        gates = gx_ref[i].astype(jnp.float32) + jnp.dot(
            h_prev, w_hh, preferred_element_type=jnp.float32)
        # Hp is a multiple of 128 -> every gate slice is lane-aligned.
        i_g = jax.nn.sigmoid(gates[:, 0 * Hp:1 * Hp])
        f_g = jax.nn.sigmoid(gates[:, 1 * Hp:2 * Hp])
        g_g = jnp.tanh(gates[:, 2 * Hp:3 * Hp])
        o_g = jax.nn.sigmoid(gates[:, 3 * Hp:4 * Hp])
        c_new = f_g * c_prev + i_g * g_g
        h_new = o_g * jnp.tanh(c_new)
        h_sc[...] = h_new.astype(h_sc.dtype)
        c_sc[...] = c_new
        out_ref[i] = h_new.astype(out_ref.dtype)
        return carry

    def run(n_steps):
        jax.lax.fori_loop(0, n_steps, cell_step, 0,
                          unroll=min(unroll, n_steps))

    # Number of valid steps in the last chunk (static Python int).
    rem = seq_len - (n_time_chunks - 1) * t_chunk
    if rem == t_chunk:
        run(t_chunk)                         # uniform chunks: mask-free path
    else:
        # Padded steps exist only in the last chunk: common path is mask-free,
        # the final chunk simply runs fewer iterations (carry stops at S-1).
        @pl.when(t_idx < n_time_chunks - 1)
        def _full():
            run(t_chunk)

        @pl.when(t_idx == n_time_chunks - 1)
        def _tail():
            run(rem)

    @pl.when(t_idx == n_time_chunks - 1)
    def _finalize():
        hN_ref[...] = h_sc[...].astype(hN_ref.dtype)
        cN_ref[...] = c_sc[...].astype(cN_ref.dtype)


def _vmem_capacity_bytes():
    try:
        return int(pltpu.get_tpu_info().vmem_capacity_bytes)
    except Exception:
        return 64 * 1024 * 1024              # conservative (v7x per-TC VMEM)


def _pick_tiles(S, B_pad, Hp, gbytes, vmem_cap, t_chunk_max=128):
    """Capacity-aware (b_blk, t_chunk) selection."""
    # Batch block: multiple of 8 dividing B_pad.  Keep >= 2 batch blocks when
    # B_pad >= 16 so the "parallel" grid axis can feed v7x's second TC (the
    # time axis is inherently sequential).
    if B_pad >= 16:
        cap = max(8, (B_pad // 2) // 8 * 8)
    else:
        cap = B_pad
    b_blk = min(256, cap)
    while B_pad % b_blk:
        b_blk -= 8

    # Time chunk: largest that keeps the working set under ~37.5% of physical
    # VMEM (~24 MiB on v7x, ~48 MiB on v5e/v6e), amortizing the ~0.35 us
    # per-grid-step pipeline overhead.
    budget = int(vmem_cap * 0.375)
    fixed = (Hp * 4 * Hp * gbytes             # single-buffered W_hh
             + 2 * 2 * b_blk * Hp * 4         # hN + cN output blocks
             + b_blk * Hp * (gbytes + 4)      # h/c carries
             + (4 << 20))                     # headroom for unrolled temps
    per_t = (2 * b_blk * 4 * Hp * gbytes      # gates_x blocks (double-buffer)
             + 2 * b_blk * Hp * 4)            # output blocks (double-buffer)
    t_fit = max(1, (budget - fixed) // per_t) if budget > fixed else 1
    t_c = int(max(1, min(t_chunk_max, S, t_fit)))
    return b_blk, t_c


def lstm_layer(x, w_ih_t, w_hh_t, bias, *, compute_dtype=jnp.float32):
    """One LSTM layer over the whole sequence.

    x       : (S, B, in_dim) f32
    w_ih_t  : (in_dim, 4H)   f32   (pre-transposed)
    w_hh_t  : (H, 4H)        f32   (pre-transposed)
    bias    : (4H,)          f32   (b_ih + b_hh)
    returns (outputs (S,B,H), h_final (B,H), c_final (B,H))
    """
    S, B, in_dim = x.shape
    H = w_hh_t.shape[0]
    Hp = _round_up(H, 128)                    # lane-aligned gate width
    Gp = 4 * Hp

    # ---- Zero-pad each gate's H slots up to Hp (lane alignment).  Padded
    # weights/biases are zero, so padded hidden/cell stay exactly zero through
    # the recurrence; padding is stripped at the end. ----
    def pad_gates_last(a, h):                 # (..., 4h) -> (..., 4*Hp)
        a = a.reshape(a.shape[:-1] + (4, h))
        a = jnp.pad(a, [(0, 0)] * (a.ndim - 1) + [(0, Hp - h)])
        return a.reshape(a.shape[:-2] + (4 * Hp,))

    w_ih_p = pad_gates_last(w_ih_t, H)                         # (in, 4Hp)
    w_hh_p = pad_gates_last(w_hh_t, H)                         # (H, 4Hp)
    w_hh_p = jnp.pad(w_hh_p, ((0, Hp - H), (0, 0)))            # (Hp, 4Hp)
    bias_p = pad_gates_last(bias, H)                           # (4Hp,)

    # ---- Hoisted input projection: one big, default-precision matmul
    # (M = S*B).  Only the recurrent matmul remains inside the kernel. ----
    gates_x = jnp.einsum("sbe,eg->sbg", x, w_ih_p) + bias_p    # (S, B, 4Hp)
    gates_x = gates_x.astype(compute_dtype)
    w_hh_p = w_hh_p.astype(compute_dtype)

    gbytes = jnp.dtype(compute_dtype).itemsize
    vmem_cap = _vmem_capacity_bytes()

    B_pad = _round_up(max(B, 1), 8)
    b_blk, T_c = _pick_tiles(S, B_pad, Hp, gbytes, vmem_cap)
    nb = B_pad // b_blk
    nt = int(pl.cdiv(S, T_c))
    S_pad = nt * T_c
    if (S_pad, B_pad) != (S, B):
        gates_x = jnp.pad(gates_x,
                          ((0, S_pad - S), (0, B_pad - B), (0, 0)))

    kernel = functools.partial(
        _lstm_recurrent_kernel, hid_dim_p=Hp, t_chunk=T_c,
        n_time_chunks=nt, seq_len=S, unroll=8)

    out_shapes = (
        jax.ShapeDtypeStruct((S_pad, B_pad, Hp), jnp.float32),   # step outputs
        jax.ShapeDtypeStruct((B_pad, Hp), jnp.float32),          # final hidden
        jax.ShapeDtypeStruct((B_pad, Hp), jnp.float32),          # final cell
    )

    grid_spec = pltpu.PrefetchScalarGridSpec(
        num_scalar_prefetch=0,
        grid=(nb, nt),
        in_specs=[
            pl.BlockSpec((T_c, b_blk, Gp), lambda b, t: (t, b, 0)),  # gates_x
            pl.BlockSpec(memory_space=pl.ANY),                       # W_hh HBM
        ],
        out_specs=[
            pl.BlockSpec((T_c, b_blk, Hp), lambda b, t: (t, b, 0)),  # outputs
            pl.BlockSpec((b_blk, Hp), lambda b, t: (b, 0)),          # h_final
            pl.BlockSpec((b_blk, Hp), lambda b, t: (b, 0)),          # c_final
        ],
        scratch_shapes=[
            pltpu.VMEM((b_blk, Hp), compute_dtype),                  # h carry
            pltpu.VMEM((b_blk, Hp), jnp.float32),                    # c carry
            pltpu.VMEM((Hp, Gp), compute_dtype),                     # W_hh copy
            pltpu.SemaphoreType.DMA(()),                             # copy sem
        ],
    )

    # VMEM budget: streamed blocks (double-buffered) + resident weight +
    # carries, with headroom for unrolled in-kernel temporaries.
    est = (Hp * Gp * gbytes
           + 2 * T_c * b_blk * Gp * gbytes
           + 2 * T_c * b_blk * Hp * 4
           + 2 * 2 * b_blk * Hp * 4
           + b_blk * Hp * (gbytes + 4))
    vmem_limit = int(min(int(0.8 * vmem_cap), max(32 << 20, 2 * est)))

    outputs, h_final, c_final = pl.pallas_call(
        kernel,
        out_shape=out_shapes,
        grid_spec=grid_spec,
        compiler_params=pltpu.CompilerParams(
            dimension_semantics=("parallel", "arbitrary"),
            vmem_limit_bytes=vmem_limit),
    )(gates_x, w_hh_p)

    outputs = outputs[:S, :B, :H]            # strip time/batch/lane padding
    h_final = h_final[:B, :H]
    c_final = c_final[:B, :H]
    return outputs, h_final, c_final


def encoder_forward(tokens, params, *, compute_dtype=jnp.float32):
    """Full Encoder forward. tokens: (S, B) int32.  Returns (hidden, cell),
    each of shape (n_layers, B, H) — exactly like PyTorch nn.LSTM."""
    embedded = jnp.take(params["embedding"], tokens, axis=0)     # (S, B, E)
    # Dropout: inference-mode identity.

    x = embedded
    h_finals, c_finals = [], []
    for layer in params["lstm"]:
        outputs, h_n, c_n = lstm_layer(x, layer["w_ih_t"], layer["w_hh_t"],
                                       layer["bias"],
                                       compute_dtype=compute_dtype)
        h_finals.append(h_n)
        c_finals.append(c_n)
        x = outputs                          # inter-layer dropout: identity

    hidden = jnp.stack(h_finals, axis=0)     # (n_layers, B, H)
    cell = jnp.stack(c_finals, axis=0)       # (n_layers, B, H)
    return hidden, cell


def init_params(key, num_embeddings, emb_dim, hid_dim, n_layers):
    """Deterministic synthetic parameter init (PyTorch-shaped, pre-transposed
    once here so the kernel never transposes)."""
    keys = jax.random.split(key, 1 + 4 * n_layers)
    params = {
        "embedding": jax.random.normal(keys[0], (num_embeddings, emb_dim),
                                       jnp.float32) * 0.1,
        "lstm": [],
    }
    k = 1.0 / jnp.sqrt(hid_dim)
    for l in range(n_layers):
        in_dim = emb_dim if l == 0 else hid_dim
        kw = keys[1 + 4 * l: 1 + 4 * (l + 1)]
        w_ih = jax.random.uniform(kw[0], (4 * hid_dim, in_dim), jnp.float32,
                                  -k, k)
        w_hh = jax.random.uniform(kw[1], (4 * hid_dim, hid_dim), jnp.float32,
                                  -k, k)
        b_ih = jax.random.uniform(kw[2], (4 * hid_dim,), jnp.float32, -k, k)
        b_hh = jax.random.uniform(kw[3], (4 * hid_dim,), jnp.float32, -k, k)
        params["lstm"].append({
            "w_ih_t": w_ih.T,                # (in_dim, 4H)
            "w_hh_t": w_hh.T,                # (H, 4H)
            "bias": b_ih + b_hh,             # (4H,)
        })
    return params


def encoder_reference(tokens, params):
    """Pure-JAX reference (lax.scan, default precision) for correctness."""
    embedded = jnp.take(params["embedding"], tokens, axis=0)
    x = embedded
    h_finals, c_finals = [], []
    H = params["lstm"][0]["w_hh_t"].shape[0]
    B = tokens.shape[1]
    for layer in params["lstm"]:
        w_ih_t, w_hh_t, bias = layer["w_ih_t"], layer["w_hh_t"], layer["bias"]

        def step(carry, x_t):
            h, c = carry
            gates = jnp.dot(x_t, w_ih_t) + jnp.dot(h, w_hh_t) + bias
            i = jax.nn.sigmoid(gates[:, 0 * H:1 * H])
            f = jax.nn.sigmoid(gates[:, 1 * H:2 * H])
            g = jnp.tanh(gates[:, 2 * H:3 * H])
            o = jax.nn.sigmoid(gates[:, 3 * H:4 * H])
            c = f * c + i * g
            h = o * jnp.tanh(c)
            return (h, c), h

        init = (jnp.zeros((B, H), jnp.float32), jnp.zeros((B, H), jnp.float32))
        (h_n, c_n), outs = jax.lax.scan(step, init, x)
        h_finals.append(h_n)
        c_finals.append(c_n)
        x = outs
    return jnp.stack(h_finals, 0), jnp.stack(c_finals, 0)


if __name__ == "__main__":
    # Small shapes consistent with the module's forward.
    num_embeddings = 16
    emb_dim = 16
    hid_dim = 32
    n_layers = 2
    seq_len = 8
    batch = 2

    key = jax.random.PRNGKey(0)
    k_tok, k_par = jax.random.split(key)
    tokens = jax.random.randint(k_tok, (seq_len, batch), 0, num_embeddings,
                                dtype=jnp.int32)
    params = init_params(k_par, num_embeddings, emb_dim, hid_dim, n_layers)

    hidden, cell = jax.jit(encoder_forward)(tokens, params)
    jax.block_until_ready((hidden, cell))

    # Sanity check against pure-JAX reference.
    h_ref, c_ref = encoder_reference(tokens, params)
    assert hidden.shape == (n_layers, batch, hid_dim)
    assert cell.shape == (n_layers, batch, hid_dim)
    assert jnp.allclose(hidden, h_ref, atol=2e-3, rtol=2e-3)
    assert jnp.allclose(cell, c_ref, atol=2e-3, rtol=2e-3)

    print("KERNEL_OK")
</pallas_src>

<mosaic_0001>
module attributes {stable_mosaic.version = 11 : i64} {
  func.func @_lstm_recurrent_kernel(%arg0: i32, %arg1: i32, %arg2: memref<8x8x512xf32, #tpu.memory_space<vmem>>, %arg3: memref<128x512xf32, #tpu.memory_space<any>>, %arg4: memref<8x8x128xf32, #tpu.memory_space<vmem>>, %arg5: memref<8x128xf32, #tpu.memory_space<vmem>>, %arg6: memref<8x128xf32, #tpu.memory_space<vmem>>, %arg7: memref<8x128xf32, #tpu.memory_space<vmem>>, %arg8: memref<8x128xf32, #tpu.memory_space<vmem>>, %arg9: memref<128x512xf32, #tpu.memory_space<vmem>>, %arg10: memref<!tpu.dma_semaphore, #tpu.memory_space<semaphore_mem>>) attributes {dimension_semantics = [#tpu.dimension_semantics<parallel>, #tpu.dimension_semantics<arbitrary>], iteration_bounds = array<i64: 1, 1>, scalar_prefetch = 0 : i64, scratch_operands = 4 : i64, tpu.core_type = #tpu.core_type<tc>, window_params = [{transform_indices = @transform_0, window_bounds = array<i64: 8, 8, 512>}, {}, {transform_indices = @transform_2, window_bounds = array<i64: 8, 8, 128>}, {transform_indices = @transform_3, window_bounds = array<i64: 8, 128>}, {transform_indices = @transform_4, window_bounds = array<i64: 8, 128>}]} {
    %c0_i32 = arith.constant 0 : i32
    %0 = arith.cmpi eq, %arg1, %c0_i32 : i32
    %1 = arith.extui %0 : i1 to i32
    %c0_i32_0 = arith.constant 0 : i32
    %2 = arith.cmpi ne, %1, %c0_i32_0 : i32
    scf.if %2 {
      tpu.enqueue_dma source(%arg3 : memref<128x512xf32, #tpu.memory_space<any>>) target(%arg9 : memref<128x512xf32, #tpu.memory_space<vmem>>) target_semaphore(%arg10 : memref<!tpu.dma_semaphore, #tpu.memory_space<semaphore_mem>>)
      tpu.wait_dma2 semaphore(%arg10 : memref<!tpu.dma_semaphore, #tpu.memory_space<semaphore_mem>>) src(%arg3 : memref<128x512xf32, #tpu.memory_space<any>>) dst(%arg9 : memref<128x512xf32, #tpu.memory_space<vmem>>)
      %cst_132 = arith.constant 0.000000e+00 : f32
      %311 = vector.broadcast %cst_132 : f32 to vector<8x128xf32>
      %c0_133 = arith.constant 0 : index
      %c0_134 = arith.constant 0 : index
      %312 = vector.load %arg7[%c0_133, %c0_134] : memref<8x128xf32, #tpu.memory_space<vmem>>, vector<8x128xf32>
      tpu.vector_store %arg7[%c0_133, %c0_134], %311 {strides = array<i32>} : memref<8x128xf32, #tpu.memory_space<vmem>>, vector<8x128xf32>,
      %cst_135 = arith.constant 0.000000e+00 : f32
      %313 = vector.broadcast %cst_135 : f32 to vector<8x128xf32>
      %c0_136 = arith.constant 0 : index
      %c0_137 = arith.constant 0 : index
      %314 = vector.load %arg8[%c0_136, %c0_137] : memref<8x128xf32, #tpu.memory_space<vmem>>, vector<8x128xf32>
      tpu.vector_store %arg8[%c0_136, %c0_137], %313 {strides = array<i32>} : memref<8x128xf32, #tpu.memory_space<vmem>>, vector<8x128xf32>,
    } else {
    }
    %c0 = arith.constant 0 : index
    %c0_1 = arith.constant 0 : index
    %3 = vector.load %arg9[%c0, %c0_1] : memref<128x512xf32, #tpu.memory_space<vmem>>, vector<128x512xf32>
    %c0_i32_2 = arith.constant 0 : i32
    %c0_3 = arith.constant 0 : index
    %c0_4 = arith.constant 0 : index
    %4 = vector.load %arg7[%c0_3, %c0_4] : memref<8x128xf32, #tpu.memory_space<vmem>>, vector<8x128xf32>
    %c0_5 = arith.constant 0 : index
    %c0_6 = arith.constant 0 : index
    %5 = vector.load %arg8[%c0_5, %c0_6] : memref<8x128xf32, #tpu.memory_space<vmem>>, vector<8x128xf32>
    %6 = arith.index_cast %c0_i32_2 : i32 to index
    %c0_7 = arith.constant 0 : index
    %c0_8 = arith.constant 0 : index
    %7 = vector.load %arg2[%6, %c0_7, %c0_8] : memref<8x8x512xf32, #tpu.memory_space<vmem>>, vector<1x8x512xf32>
    %8 = vector.shape_cast %7 : vector<1x8x512xf32> to vector<8x512xf32>
    %cst = arith.constant dense<0.000000e+00> : vector<8x512xf32>
    %9 = tpu.matmul %4, %3, %cst {dimension_numbers = #tpu.dot_dimension_numbers<[1], [0], [0], [1], [0, 0, 1, 1], [], []>} : vector<8x128xf32>, vector<128x512xf32>, vector<8x512xf32> -> vector<8x512xf32>
    %10 = arith.addf %8, %9 : vector<8x512xf32>
    %11 = vector.extract_strided_slice %10 {offsets = [0, 0], sizes = [8, 128], strides = [1, 1]} : vector<8x512xf32> to vector<8x128xf32>
    %12 = arith.negf %11 : vector<8x128xf32>
    %13 = math.exp %12 : vector<8x128xf32>
    %cst_9 = arith.constant 1.000000e+00 : f32
    %14 = vector.broadcast %cst_9 : f32 to vector<8x128xf32>
    %15 = arith.addf %14, %13 : vector<8x128xf32>
    %16 = arith.divf %14, %15 : vector<8x128xf32>
    %17 = vector.extract_strided_slice %10 {offsets = [0, 128], sizes = [8, 128], strides = [1, 1]} : vector<8x512xf32> to vector<8x128xf32>
    %18 = arith.negf %17 : vector<8x128xf32>
    %19 = math.exp %18 : vector<8x128xf32>
    %cst_10 = arith.constant 1.000000e+00 : f32
    %20 = vector.broadcast %cst_10 : f32 to vector<8x128xf32>
    %21 = arith.addf %20, %19 : vector<8x128xf32>
    %22 = arith.divf %20, %21 : vector<8x128xf32>
    %23 = vector.extract_strided_slice %10 {offsets = [0, 256], sizes = [8, 128], strides = [1, 1]} : vector<8x512xf32> to vector<8x128xf32>
    %24 = math.tanh %23 : vector<8x128xf32>
    %25 = vector.extract_strided_slice %10 {offsets = [0, 384], sizes = [8, 128], strides = [1, 1]} : vector<8x512xf32> to vector<8x128xf32>
    %26 = arith.negf %25 : vector<8x128xf32>
    %27 = math.exp %26 : vector<8x128xf32>
    %cst_11 = arith.constant 1.000000e+00 : f32
    %28 = vector.broadcast %cst_11 : f32 to vector<8x128xf32>
    %29 = arith.addf %28, %27 : vector<8x128xf32>
    %30 = arith.divf %28, %29 : vector<8x128xf32>
    %31 = arith.mulf %22, %5 : vector<8x128xf32>
    %32 = arith.mulf %16, %24 : vector<8x128xf32>
    %33 = arith.addf %31, %32 : vector<8x128xf32>
    %34 = math.tanh %33 : vector<8x128xf32>
    %35 = arith.mulf %30, %34 : vector<8x128xf32>
    %c0_12 = arith.constant 0 : index
    %c0_13 = arith.constant 0 : index
    %36 = vector.load %arg7[%c0_12, %c0_13] : memref<8x128xf32, #tpu.memory_space<vmem>>, vector<8x128xf32>
    tpu.vector_store %arg7[%c0_12, %c0_13], %35 {strides = array<i32>} : memref<8x128xf32, #tpu.memory_space<vmem>>, vector<8x128xf32>,
    %c0_14 = arith.constant 0 : index
    %c0_15 = arith.constant 0 : index
    %37 = vector.load %arg8[%c0_14, %c0_15] : memref<8x128xf32, #tpu.memory_space<vmem>>, vector<8x128xf32>
    tpu.vector_store %arg8[%c0_14, %c0_15], %33 {strides = array<i32>} : memref<8x128xf32, #tpu.memory_space<vmem>>, vector<8x128xf32>,
    %38 = arith.index_cast %c0_i32_2 : i32 to index
    %c0_16 = arith.constant 0 : index
    %c0_17 = arith.constant 0 : index
    %39 = vector.load %arg4[%38, %c0_16, %c0_17] : memref<8x8x128xf32, #tpu.memory_space<vmem>>, vector<1x8x128xf32>
    %40 = vector.shape_cast %39 : vector<1x8x128xf32> to vector<8x128xf32>
    %41 = vector.shape_cast %35 : vector<8x128xf32> to vector<1x8x128xf32>
    tpu.vector_store %arg4[%38, %c0_16, %c0_17], %41 {strides = array<i32>} : memref<8x8x128xf32, #tpu.memory_space<vmem>>, vector<1x8x128xf32>,
    %c1_i32 = arith.constant 1 : i32
    %c0_18 = arith.constant 0 : index
    %c0_19 = arith.constant 0 : index
    %42 = vector.load %arg7[%c0_18, %c0_19] : memref<8x128xf32, #tpu.memory_space<vmem>>, vector<8x128xf32>
    %c0_20 = arith.constant 0 : index
    %c0_21 = arith.constant 0 : index
    %43 = vector.load %arg8[%c0_20, %c0_21] : memref<8x128xf32, #tpu.memory_space<vmem>>, vector<8x128xf32>
    %44 = arith.index_cast %c1_i32 : i32 to index
    %c0_22 = arith.constant 0 : index
    %c0_23 = arith.constant 0 : index
    %45 = vector.load %arg2[%44, %c0_22, %c0_23] : memref<8x8x512xf32, #tpu.memory_space<vmem>>, vector<1x8x512xf32>
    %46 = vector.shape_cast %45 : vector<1x8x512xf32> to vector<8x512xf32>
    %cst_24 = arith.constant dense<0.000000e+00> : vector<8x512xf32>
    %47 = tpu.matmul %42, %3, %cst_24 {dimension_numbers = #tpu.dot_dimension_numbers<[1], [0], [0], [1], [0, 0, 1, 1], [], []>} : vector<8x128xf32>, vector<128x512xf32>, vector<8x512xf32> -> vector<8x512xf32>
    %48 = arith.addf %46, %47 : vector<8x512xf32>
    %49 = vector.extract_strided_slice %48 {offsets = [0, 0], sizes = [8, 128], strides = [1, 1]} : vector<8x512xf32> to vector<8x128xf32>
    %50 = arith.negf %49 : vector<8x128xf32>
    %51 = math.exp %50 : vector<8x128xf32>
    %cst_25 = arith.constant 1.000000e+00 : f32
    %52 = vector.broadcast %cst_25 : f32 to vector<8x128xf32>
    %53 = arith.addf %52, %51 : vector<8x128xf32>
    %54 = arith.divf %52, %53 : vector<8x128xf32>
    %55 = vector.extract_strided_slice %48 {offsets = [0, 128], sizes = [8, 128], strides = [1, 1]} : vector<8x512xf32> to vector<8x128xf32>
    %56 = arith.negf %55 : vector<8x128xf32>
    %57 = math.exp %56 : vector<8x128xf32>
    %cst_26 = arith.constant 1.000000e+00 : f32
    %58 = vector.broadcast %cst_26 : f32 to vector<8x128xf32>
    %59 = arith.addf %58, %57 : vector<8x128xf32>
    %60 = arith.divf %58, %59 : vector<8x128xf32>
    %61 = vector.extract_strided_slice %48 {offsets = [0, 256], sizes = [8, 128], strides = [1, 1]} : vector<8x512xf32> to vector<8x128xf32>
    %62 = math.tanh %61 : vector<8x128xf32>
    %63 = vector.extract_strided_slice %48 {offsets = [0, 384], sizes = [8, 128], strides = [1, 1]} : vector<8x512xf32> to vector<8x128xf32>
    %64 = arith.negf %63 : vector<8x128xf32>
    %65 = math.exp %64 : vector<8x128xf32>
    %cst_27 = arith.constant 1.000000e+00 : f32
    %66 = vector.broadcast %cst_27 : f32 to vector<8x128xf32>
    %67 = arith.addf %66, %65 : vector<8x128xf32>
    %68 = arith.divf %66, %67 : vector<8x128xf32>
    %69 = arith.mulf %60, %43 : vector<8x128xf32>
    %70 = arith.mulf %54, %62 : vector<8x128xf32>
    %71 = arith.addf %69, %70 : vector<8x128xf32>
    %72 = math.tanh %71 : vector<8x128xf32>
    %73 = arith.mulf %68, %72 : vector<8x128xf32>
    %c0_28 = arith.constant 0 : index
    %c0_29 = arith.constant 0 : index
    %74 = vector.load %arg7[%c0_28, %c0_29] : memref<8x128xf32, #tpu.memory_space<vmem>>, vector<8x128xf32>
    tpu.vector_store %arg7[%c0_28, %c0_29], %73 {strides = array<i32>} : memref<8x128xf32, #tpu.memory_space<vmem>>, vector<8x128xf32>,
    %c0_30 = arith.constant 0 : index
    %c0_31 = arith.constant 0 : index
    %75 = vector.load %arg8[%c0_30, %c0_31] : memref<8x128xf32, #tpu.memory_space<vmem>>, vector<8x128xf32>
    tpu.vector_store %arg8[%c0_30, %c0_31], %71 {strides = array<i32>} : memref<8x128xf32, #tpu.memory_space<vmem>>, vector<8x128xf32>,
    %76 = arith.index_cast %c1_i32 : i32 to index
    %c0_32 = arith.constant 0 : index
    %c0_33 = arith.constant 0 : index
    %77 = vector.load %arg4[%76, %c0_32, %c0_33] : memref<8x8x128xf32, #tpu.memory_space<vmem>>, vector<1x8x128xf32>
    %78 = vector.shape_cast %77 : vector<1x8x128xf32> to vector<8x128xf32>
    %79 = vector.shape_cast %73 : vector<8x128xf32> to vector<1x8x128xf32>
    tpu.vector_store %arg4[%76, %c0_32, %c0_33], %79 {strides = array<i32>} : memref<8x8x128xf32, #tpu.memory_space<vmem>>, vector<1x8x128xf32>,
    %c2_i32 = arith.constant 2 : i32
    %c0_34 = arith.constant 0 : index
    %c0_35 = arith.constant 0 : index
    %80 = vector.load %arg7[%c0_34, %c0_35] : memref<8x128xf32, #tpu.memory_space<vmem>>, vector<8x128xf32>
    %c0_36 = arith.constant 0 : index
    %c0_37 = arith.constant 0 : index
    %81 = vector.load %arg8[%c0_36, %c0_37] : memref<8x128xf32, #tpu.memory_space<vmem>>, vector<8x128xf32>
    %82 = arith.index_cast %c2_i32 : i32 to index
    %c0_38 = arith.constant 0 : index
    %c0_39 = arith.constant 0 : index
    %83 = vector.load %arg2[%82, %c0_38, %c0_39] : memref<8x8x512xf32, #tpu.memory_space<vmem>>, vector<1x8x512xf32>
    %84 = vector.shape_cast %83 : vector<1x8x512xf32> to vector<8x512xf32>
    %cst_40 = arith.constant dense<0.000000e+00> : vector<8x512xf32>
    %85 = tpu.matmul %80, %3, %cst_40 {dimension_numbers = #tpu.dot_dimension_numbers<[1], [0], [0], [1], [0, 0, 1, 1], [], []>} : vector<8x128xf32>, vector<128x512xf32>, vector<8x512xf32> -> vector<8x512xf32>
    %86 = arith.addf %84, %85 : vector<8x512xf32>
    %87 = vector.extract_strided_slice %86 {offsets = [0, 0], sizes = [8, 128], strides = [1, 1]} : vector<8x512xf32> to vector<8x128xf32>
    %88 = arith.negf %87 : vector<8x128xf32>
    %89 = math.exp %88 : vector<8x128xf32>
    %cst_41 = arith.constant 1.000000e+00 : f32
    %90 = vector.broadcast %cst_41 : f32 to vector<8x128xf32>
    %91 = arith.addf %90, %89 : vector<8x128xf32>
    %92 = arith.divf %90, %91 : vector<8x128xf32>
    %93 = vector.extract_strided_slice %86 {offsets = [0, 128], sizes = [8, 128], strides = [1, 1]} : vector<8x512xf32> to vector<8x128xf32>
    %94 = arith.negf %93 : vector<8x128xf32>
    %95 = math.exp %94 : vector<8x128xf32>
    %cst_42 = arith.constant 1.000000e+00 : f32
    %96 = vector.broadcast %cst_42 : f32 to vector<8x128xf32>
    %97 = arith.addf %96, %95 : vector<8x128xf32>
    %98 = arith.divf %96, %97 : vector<8x128xf32>
    %99 = vector.extract_strided_slice %86 {offsets = [0, 256], sizes = [8, 128], strides = [1, 1]} : vector<8x512xf32> to vector<8x128xf32>
    %100 = math.tanh %99 : vector<8x128xf32>
    %101 = vector.extract_strided_slice %86 {offsets = [0, 384], sizes = [8, 128], strides = [1, 1]} : vector<8x512xf32> to vector<8x128xf32>
    %102 = arith.negf %101 : vector<8x128xf32>
    %103 = math.exp %102 : vector<8x128xf32>
    %cst_43 = arith.constant 1.000000e+00 : f32
    %104 = vector.broadcast %cst_43 : f32 to vector<8x128xf32>
    %105 = arith.addf %104, %103 : vector<8x128xf32>
    %106 = arith.divf %104, %105 : vector<8x128xf32>
    %107 = arith.mulf %98, %81 : vector<8x128xf32>
    %108 = arith.mulf %92, %100 : vector<8x128xf32>
    %109 = arith.addf %107, %108 : vector<8x128xf32>
    %110 = math.tanh %109 : vector<8x128xf32>
    %111 = arith.mulf %106, %110 : vector<8x128xf32>
    %c0_44 = arith.constant 0 : index
    %c0_45 = arith.constant 0 : index
    %112 = vector.load %arg7[%c0_44, %c0_45] : memref<8x128xf32, #tpu.memory_space<vmem>>, vector<8x128xf32>
    tpu.vector_store %arg7[%c0_44, %c0_45], %111 {strides = array<i32>} : memref<8x128xf32, #tpu.memory_space<vmem>>, vector<8x128xf32>,
    %c0_46 = arith.constant 0 : index
    %c0_47 = arith.constant 0 : index
    %113 = vector.load %arg8[%c0_46, %c0_47] : memref<8x128xf32, #tpu.memory_space<vmem>>, vector<8x128xf32>
    tpu.vector_store %arg8[%c0_46, %c0_47], %109 {strides = array<i32>} : memref<8x128xf32, #tpu.memory_space<vmem>>, vector<8x128xf32>,
    %114 = arith.index_cast %c2_i32 : i32 to index
    %c0_48 = arith.constant 0 : index
    %c0_49 = arith.constant 0 : index
    %115 = vector.load %arg4[%114, %c0_48, %c0_49] : memref<8x8x128xf32, #tpu.memory_space<vmem>>, vector<1x8x128xf32>
    %116 = vector.shape_cast %115 : vector<1x8x128xf32> to vector<8x128xf32>
    %117 = vector.shape_cast %111 : vector<8x128xf32> to vector<1x8x128xf32>
    tpu.vector_store %arg4[%114, %c0_48, %c0_49], %117 {strides = array<i32>} : memref<8x8x128xf32, #tpu.memory_space<vmem>>, vector<1x8x128xf32>,
    %c3_i32 = arith.constant 3 : i32
    %c0_50 = arith.constant 0 : index
    %c0_51 = arith.constant 0 : index
    %118 = vector.load %arg7[%c0_50, %c0_51] : memref<8x128xf32, #tpu.memory_space<vmem>>, vector<8x128xf32>
    %c0_52 = arith.constant 0 : index
    %c0_53 = arith.constant 0 : index
    %119 = vector.load %arg8[%c0_52, %c0_53] : memref<8x128xf32, #tpu.memory_space<vmem>>, vector<8x128xf32>
    %120 = arith.index_cast %c3_i32 : i32 to index
    %c0_54 = arith.constant 0 : index
    %c0_55 = arith.constant 0 : index
    %121 = vector.load %arg2[%120, %c0_54, %c0_55] : memref<8x8x512xf32, #tpu.memory_space<vmem>>, vector<1x8x512xf32>
    %122 = vector.shape_cast %121 : vector<1x8x512xf32> to vector<8x512xf32>
    %cst_56 = arith.constant dense<0.000000e+00> : vector<8x512xf32>
    %123 = tpu.matmul %118, %3, %cst_56 {dimension_numbers = #tpu.dot_dimension_numbers<[1], [0], [0], [1], [0, 0, 1, 1], [], []>} : vector<8x128xf32>, vector<128x512xf32>, vector<8x512xf32> -> vector<8x512xf32>
    %124 = arith.addf %122, %123 : vector<8x512xf32>
    %125 = vector.extract_strided_slice %124 {offsets = [0, 0], sizes = [8, 128], strides = [1, 1]} : vector<8x512xf32> to vector<8x128xf32>
    %126 = arith.negf %125 : vector<8x128xf32>
    %127 = math.exp %126 : vector<8x128xf32>
    %cst_57 = arith.constant 1.000000e+00 : f32
    %128 = vector.broadcast %cst_57 : f32 to vector<8x128xf32>
    %129 = arith.addf %128, %127 : vector<8x128xf32>
    %130 = arith.divf %128, %129 : vector<8x128xf32>
    %131 = vector.extract_strided_slice %124 {offsets = [0, 128], sizes = [8, 128], strides = [1, 1]} : vector<8x512xf32> to vector<8x128xf32>
    %132 = arith.negf %131 : vector<8x128xf32>
    %133 = math.exp %132 : vector<8x128xf32>
    %cst_58 = arith.constant 1.000000e+00 : f32
    %134 = vector.broadcast %cst_58 : f32 to vector<8x128xf32>
    %135 = arith.addf %134, %133 : vector<8x128xf32>
    %136 = arith.divf %134, %135 : vector<8x128xf32>
    %137 = vector.extract_strided_slice %124 {offsets = [0, 256], sizes = [8, 128], strides = [1, 1]} : vector<8x512xf32> to vector<8x128xf32>
    %138 = math.tanh %137 : vector<8x128xf32>
    %139 = vector.extract_strided_slice %124 {offsets = [0, 384], sizes = [8, 128], strides = [1, 1]} : vector<8x512xf32> to vector<8x128xf32>
    %140 = arith.negf %139 : vector<8x128xf32>
    %141 = math.exp %140 : vector<8x128xf32>
    %cst_59 = arith.constant 1.000000e+00 : f32
    %142 = vector.broadcast %cst_59 : f32 to vector<8x128xf32>
    %143 = arith.addf %142, %141 : vector<8x128xf32>
    %144 = arith.divf %142, %143 : vector<8x128xf32>
    %145 = arith.mulf %136, %119 : vector<8x128xf32>
    %146 = arith.mulf %130, %138 : vector<8x128xf32>
    %147 = arith.addf %145, %146 : vector<8x128xf32>
    %148 = math.tanh %147 : vector<8x128xf32>
    %149 = arith.mulf %144, %148 : vector<8x128xf32>
    %c0_60 = arith.constant 0 : index
    %c0_61 = arith.constant 0 : index
    %150 = vector.load %arg7[%c0_60, %c0_61] : memref<8x128xf32, #tpu.memory_space<vmem>>, vector<8x128xf32>
    tpu.vector_store %arg7[%c0_60, %c0_61], %149 {strides = array<i32>} : memref<8x128xf32, #tpu.memory_space<vmem>>, vector<8x128xf32>,
    %c0_62 = arith.constant 0 : index
    %c0_63 = arith.constant 0 : index
    %151 = vector.load %arg8[%c0_62, %c0_63] : memref<8x128xf32, #tpu.memory_space<vmem>>, vector<8x128xf32>
    tpu.vector_store %arg8[%c0_62, %c0_63], %147 {strides = array<i32>} : memref<8x128xf32, #tpu.memory_space<vmem>>, vector<8x128xf32>,
    %152 = arith.index_cast %c3_i32 : i32 to index
    %c0_64 = arith.constant 0 : index
    %c0_65 = arith.constant 0 : index
    %153 = vector.load %arg4[%152, %c0_64, %c0_65] : memref<8x8x128xf32, #tpu.memory_space<vmem>>, vector<1x8x128xf32>
    %154 = vector.shape_cast %153 : vector<1x8x128xf32> to vector<8x128xf32>
    %155 = vector.shape_cast %149 : vector<8x128xf32> to vector<1x8x128xf32>
    tpu.vector_store %arg4[%152, %c0_64, %c0_65], %155 {strides = array<i32>} : memref<8x8x128xf32, #tpu.memory_space<vmem>>, vector<1x8x128xf32>,
    %c4_i32 = arith.constant 4 : i32
    %c0_66 = arith.constant 0 : index
    %c0_67 = arith.constant 0 : index
    %156 = vector.load %arg7[%c0_66, %c0_67] : memref<8x128xf32, #tpu.memory_space<vmem>>, vector<8x128xf32>
    %c0_68 = arith.constant 0 : index
    %c0_69 = arith.constant 0 : index
    %157 = vector.load %arg8[%c0_68, %c0_69] : memref<8x128xf32, #tpu.memory_space<vmem>>, vector<8x128xf32>
    %158 = arith.index_cast %c4_i32 : i32 to index
    %c0_70 = arith.constant 0 : index
    %c0_71 = arith.constant 0 : index
    %159 = vector.load %arg2[%158, %c0_70, %c0_71] : memref<8x8x512xf32, #tpu.memory_space<vmem>>, vector<1x8x512xf32>
    %160 = vector.shape_cast %159 : vector<1x8x512xf32> to vector<8x512xf32>
    %cst_72 = arith.constant dense<0.000000e+00> : vector<8x512xf32>
    %161 = tpu.matmul %156, %3, %cst_72 {dimension_numbers = #tpu.dot_dimension_numbers<[1], [0], [0], [1], [0, 0, 1, 1], [], []>} : vector<8x128xf32>, vector<128x512xf32>, vector<8x512xf32> -> vector<8x512xf32>
    %162 = arith.addf %160, %161 : vector<8x512xf32>
    %163 = vector.extract_strided_slice %162 {offsets = [0, 0], sizes = [8, 128], strides = [1, 1]} : vector<8x512xf32> to vector<8x128xf32>
    %164 = arith.negf %163 : vector<8x128xf32>
    %165 = math.exp %164 : vector<8x128xf32>
    %cst_73 = arith.constant 1.000000e+00 : f32
    %166 = vector.broadcast %cst_73 : f32 to vector<8x128xf32>
    %167 = arith.addf %166, %165 : vector<8x128xf32>
    %168 = arith.divf %166, %167 : vector<8x128xf32>
    %169 = vector.extract_strided_slice %162 {offsets = [0, 128], sizes = [8, 128], strides = [1, 1]} : vector<8x512xf32> to vector<8x128xf32>
    %170 = arith.negf %169 : vector<8x128xf32>
    %171 = math.exp %170 : vector<8x128xf32>
    %cst_74 = arith.constant 1.000000e+00 : f32
    %172 = vector.broadcast %cst_74 : f32 to vector<8x128xf32>
    %173 = arith.addf %172, %171 : vector<8x128xf32>
    %174 = arith.divf %172, %173 : vector<8x128xf32>
    %175 = vector.extract_strided_slice %162 {offsets = [0, 256], sizes = [8, 128], strides = [1, 1]} : vector<8x512xf32> to vector<8x128xf32>
    %176 = math.tanh %175 : vector<8x128xf32>
    %177 = vector.extract_strided_slice %162 {offsets = [0, 384], sizes = [8, 128], strides = [1, 1]} : vector<8x512xf32> to vector<8x128xf32>
    %178 = arith.negf %177 : vector<8x128xf32>
    %179 = math.exp %178 : vector<8x128xf32>
    %cst_75 = arith.constant 1.000000e+00 : f32
    %180 = vector.broadcast %cst_75 : f32 to vector<8x128xf32>
    %181 = arith.addf %180, %179 : vector<8x128xf32>
    %182 = arith.divf %180, %181 : vector<8x128xf32>
    %183 = arith.mulf %174, %157 : vector<8x128xf32>
    %184 = arith.mulf %168, %176 : vector<8x128xf32>
    %185 = arith.addf %183, %184 : vector<8x128xf32>
    %186 = math.tanh %185 : vector<8x128xf32>
    %187 = arith.mulf %182, %186 : vector<8x128xf32>
    %c0_76 = arith.constant 0 : index
    %c0_77 = arith.constant 0 : index
    %188 = vector.load %arg7[%c0_76, %c0_77] : memref<8x128xf32, #tpu.memory_space<vmem>>, vector<8x128xf32>
    tpu.vector_store %arg7[%c0_76, %c0_77], %187 {strides = array<i32>} : memref<8x128xf32, #tpu.memory_space<vmem>>, vector<8x128xf32>,
    %c0_78 = arith.constant 0 : index
    %c0_79 = arith.constant 0 : index
    %189 = vector.load %arg8[%c0_78, %c0_79] : memref<8x128xf32, #tpu.memory_space<vmem>>, vector<8x128xf32>
    tpu.vector_store %arg8[%c0_78, %c0_79], %185 {strides = array<i32>} : memref<8x128xf32, #tpu.memory_space<vmem>>, vector<8x128xf32>,
    %190 = arith.index_cast %c4_i32 : i32 to index
    %c0_80 = arith.constant 0 : index
    %c0_81 = arith.constant 0 : index
    %191 = vector.load %arg4[%190, %c0_80, %c0_81] : memref<8x8x128xf32, #tpu.memory_space<vmem>>, vector<1x8x128xf32>
    %192 = vector.shape_cast %191 : vector<1x8x128xf32> to vector<8x128xf32>
    %193 = vector.shape_cast %187 : vector<8x128xf32> to vector<1x8x128xf32>
    tpu.vector_store %arg4[%190, %c0_80, %c0_81], %193 {strides = array<i32>} : memref<8x8x128xf32, #tpu.memory_space<vmem>>, vector<1x8x128xf32>,
    %c5_i32 = arith.constant 5 : i32
    %c0_82 = arith.constant 0 : index
    %c0_83 = arith.constant 0 : index
    %194 = vector.load %arg7[%c0_82, %c0_83] : memref<8x128xf32, #tpu.memory_space<vmem>>, vector<8x128xf32>
    %c0_84 = arith.constant 0 : index
    %c0_85 = arith.constant 0 : index
    %195 = vector.load %arg8[%c0_84, %c0_85] : memref<8x128xf32, #tpu.memory_space<vmem>>, vector<8x128xf32>
    %196 = arith.index_cast %c5_i32 : i32 to index
    %c0_86 = arith.constant 0 : index
    %c0_87 = arith.constant 0 : index
    %197 = vector.load %arg2[%196, %c0_86, %c0_87] : memref<8x8x512xf32, #tpu.memory_space<vmem>>, vector<1x8x512xf32>
    %198 = vector.shape_cast %197 : vector<1x8x512xf32> to vector<8x512xf32>
    %cst_88 = arith.constant dense<0.000000e+00> : vector<8x512xf32>
    %199 = tpu.matmul %194, %3, %cst_88 {dimension_numbers = #tpu.dot_dimension_numbers<[1], [0], [0], [1], [0, 0, 1, 1], [], []>} : vector<8x128xf32>, vector<128x512xf32>, vector<8x512xf32> -> vector<8x512xf32>
    %200 = arith.addf %198, %199 : vector<8x512xf32>
    %201 = vector.extract_strided_slice %200 {offsets = [0, 0], sizes = [8, 128], strides = [1, 1]} : vector<8x512xf32> to vector<8x128xf32>
    %202 = arith.negf %201 : vector<8x128xf32>
    %203 = math.exp %202 : vector<8x128xf32>
    %cst_89 = arith.constant 1.000000e+00 : f32
    %204 = vector.broadcast %cst_89 : f32 to vector<8x128xf32>
    %205 = arith.addf %204, %203 : vector<8x128xf32>
    %206 = arith.divf %204, %205 : vector<8x128xf32>
    %207 = vector.extract_strided_slice %200 {offsets = [0, 128], sizes = [8, 128], strides = [1, 1]} : vector<8x512xf32> to vector<8x128xf32>
    %208 = arith.negf %207 : vector<8x128xf32>
    %209 = math.exp %208 : vector<8x128xf32>
    %cst_90 = arith.constant 1.000000e+00 : f32
    %210 = vector.broadcast %cst_90 : f32 to vector<8x128xf32>
    %211 = arith.addf %210, %209 : vector<8x128xf32>
    %212 = arith.divf %210, %211 : vector<8x128xf32>
    %213 = vector.extract_strided_slice %200 {offsets = [0, 256], sizes = [8, 128], strides = [1, 1]} : vector<8x512xf32> to vector<8x128xf32>
    %214 = math.tanh %213 : vector<8x128xf32>
    %215 = vector.extract_strided_slice %200 {offsets = [0, 384], sizes = [8, 128], strides = [1, 1]} : vector<8x512xf32> to vector<8x128xf32>
    %216 = arith.negf %215 : vector<8x128xf32>
    %217 = math.exp %216 : vector<8x128xf32>
    %cst_91 = arith.constant 1.000000e+00 : f32
    %218 = vector.broadcast %cst_91 : f32 to vector<8x128xf32>
    %219 = arith.addf %218, %217 : vector<8x128xf32>
    %220 = arith.divf %218, %219 : vector<8x128xf32>
    %221 = arith.mulf %212, %195 : vector<8x128xf32>
    %222 = arith.mulf %206, %214 : vector<8x128xf32>
    %223 = arith.addf %221, %222 : vector<8x128xf32>
    %224 = math.tanh %223 : vector<8x128xf32>
    %225 = arith.mulf %220, %224 : vector<8x128xf32>
    %c0_92 = arith.constant 0 : index
    %c0_93 = arith.constant 0 : index
    %226 = vector.load %arg7[%c0_92, %c0_93] : memref<8x128xf32, #tpu.memory_space<vmem>>, vector<8x128xf32>
    tpu.vector_store %arg7[%c0_92, %c0_93], %225 {strides = array<i32>} : memref<8x128xf32, #tpu.memory_space<vmem>>, vector<8x128xf32>,
    %c0_94 = arith.constant 0 : index
    %c0_95 = arith.constant 0 : index
    %227 = vector.load %arg8[%c0_94, %c0_95] : memref<8x128xf32, #tpu.memory_space<vmem>>, vector<8x128xf32>
    tpu.vector_store %arg8[%c0_94, %c0_95], %223 {strides = array<i32>} : memref<8x128xf32, #tpu.memory_space<vmem>>, vector<8x128xf32>,
    %228 = arith.index_cast %c5_i32 : i32 to index
    %c0_96 = arith.constant 0 : index
    %c0_97 = arith.constant 0 : index
    %229 = vector.load %arg4[%228, %c0_96, %c0_97] : memref<8x8x128xf32, #tpu.memory_space<vmem>>, vector<1x8x128xf32>
    %230 = vector.shape_cast %229 : vector<1x8x128xf32> to vector<8x128xf32>
    %231 = vector.shape_cast %225 : vector<8x128xf32> to vector<1x8x128xf32>
    tpu.vector_store %arg4[%228, %c0_96, %c0_97], %231 {strides = array<i32>} : memref<8x8x128xf32, #tpu.memory_space<vmem>>, vector<1x8x128xf32>,
    %c6_i32 = arith.constant 6 : i32
    %c0_98 = arith.constant 0 : index
    %c0_99 = arith.constant 0 : index
    %232 = vector.load %arg7[%c0_98, %c0_99] : memref<8x128xf32, #tpu.memory_space<vmem>>, vector<8x128xf32>
    %c0_100 = arith.constant 0 : index
    %c0_101 = arith.constant 0 : index
    %233 = vector.load %arg8[%c0_100, %c0_101] : memref<8x128xf32, #tpu.memory_space<vmem>>, vector<8x128xf32>
    %234 = arith.index_cast %c6_i32 : i32 to index
    %c0_102 = arith.constant 0 : index
    %c0_103 = arith.constant 0 : index
    %235 = vector.load %arg2[%234, %c0_102, %c0_103] : memref<8x8x512xf32, #tpu.memory_space<vmem>>, vector<1x8x512xf32>
    %236 = vector.shape_cast %235 : vector<1x8x512xf32> to vector<8x512xf32>
    %cst_104 = arith.constant dense<0.000000e+00> : vector<8x512xf32>
    %237 = tpu.matmul %232, %3, %cst_104 {dimension_numbers = #tpu.dot_dimension_numbers<[1], [0], [0], [1], [0, 0, 1, 1], [], []>} : vector<8x128xf32>, vector<128x512xf32>, vector<8x512xf32> -> vector<8x512xf32>
    %238 = arith.addf %236, %237 : vector<8x512xf32>
    %239 = vector.extract_strided_slice %238 {offsets = [0, 0], sizes = [8, 128], strides = [1, 1]} : vector<8x512xf32> to vector<8x128xf32>
    %240 = arith.negf %239 : vector<8x128xf32>
    %241 = math.exp %240 : vector<8x128xf32>
    %cst_105 = arith.constant 1.000000e+00 : f32
    %242 = vector.broadcast %cst_105 : f32 to vector<8x128xf32>
    %243 = arith.addf %242, %241 : vector<8x128xf32>
    %244 = arith.divf %242, %243 : vector<8x128xf32>
    %245 = vector.extract_strided_slice %238 {offsets = [0, 128], sizes = [8, 128], strides = [1, 1]} : vector<8x512xf32> to vector<8x128xf32>
    %246 = arith.negf %245 : vector<8x128xf32>
    %247 = math.exp %246 : vector<8x128xf32>
    %cst_106 = arith.constant 1.000000e+00 : f32
    %248 = vector.broadcast %cst_106 : f32 to vector<8x128xf32>
    %249 = arith.addf %248, %247 : vector<8x128xf32>
    %250 = arith.divf %248, %249 : vector<8x128xf32>
    %251 = vector.extract_strided_slice %238 {offsets = [0, 256], sizes = [8, 128], strides = [1, 1]} : vector<8x512xf32> to vector<8x128xf32>
    %252 = math.tanh %251 : vector<8x128xf32>
    %253 = vector.extract_strided_slice %238 {offsets = [0, 384], sizes = [8, 128], strides = [1, 1]} : vector<8x512xf32> to vector<8x128xf32>
    %254 = arith.negf %253 : vector<8x128xf32>
    %255 = math.exp %254 : vector<8x128xf32>
    %cst_107 = arith.constant 1.000000e+00 : f32
    %256 = vector.broadcast %cst_107 : f32 to vector<8x128xf32>
    %257 = arith.addf %256, %255 : vector<8x128xf32>
    %258 = arith.divf %256, %257 : vector<8x128xf32>
    %259 = arith.mulf %250, %233 : vector<8x128xf32>
    %260 = arith.mulf %244, %252 : vector<8x128xf32>
    %261 = arith.addf %259, %260 : vector<8x128xf32>
    %262 = math.tanh %261 : vector<8x128xf32>
    %263 = arith.mulf %258, %262 : vector<8x128xf32>
    %c0_108 = arith.constant 0 : index
    %c0_109 = arith.constant 0 : index
    %264 = vector.load %arg7[%c0_108, %c0_109] : memref<8x128xf32, #tpu.memory_space<vmem>>, vector<8x128xf32>
    tpu.vector_store %arg7[%c0_108, %c0_109], %263 {strides = array<i32>} : memref<8x128xf32, #tpu.memory_space<vmem>>, vector<8x128xf32>,
    %c0_110 = arith.constant 0 : index
    %c0_111 = arith.constant 0 : index
    %265 = vector.load %arg8[%c0_110, %c0_111] : memref<8x128xf32, #tpu.memory_space<vmem>>, vector<8x128xf32>
    tpu.vector_store %arg8[%c0_110, %c0_111], %261 {strides = array<i32>} : memref<8x128xf32, #tpu.memory_space<vmem>>, vector<8x128xf32>,
    %266 = arith.index_cast %c6_i32 : i32 to index
    %c0_112 = arith.constant 0 : index
    %c0_113 = arith.constant 0 : index
    %267 = vector.load %arg4[%266, %c0_112, %c0_113] : memref<8x8x128xf32, #tpu.memory_space<vmem>>, vector<1x8x128xf32>
    %268 = vector.shape_cast %267 : vector<1x8x128xf32> to vector<8x128xf32>
    %269 = vector.shape_cast %263 : vector<8x128xf32> to vector<1x8x128xf32>
    tpu.vector_store %arg4[%266, %c0_112, %c0_113], %269 {strides = array<i32>} : memref<8x8x128xf32, #tpu.memory_space<vmem>>, vector<1x8x128xf32>,
    %c7_i32 = arith.constant 7 : i32
    %c0_114 = arith.constant 0 : index
    %c0_115 = arith.constant 0 : index
    %270 = vector.load %arg7[%c0_114, %c0_115] : memref<8x128xf32, #tpu.memory_space<vmem>>, vector<8x128xf32>
    %c0_116 = arith.constant 0 : index
    %c0_117 = arith.constant 0 : index
    %271 = vector.load %arg8[%c0_116, %c0_117] : memref<8x128xf32, #tpu.memory_space<vmem>>, vector<8x128xf32>
    %272 = arith.index_cast %c7_i32 : i32 to index
    %c0_118 = arith.constant 0 : index
    %c0_119 = arith.constant 0 : index
    %273 = vector.load %arg2[%272, %c0_118, %c0_119] : memref<8x8x512xf32, #tpu.memory_space<vmem>>, vector<1x8x512xf32>
    %274 = vector.shape_cast %273 : vector<1x8x512xf32> to vector<8x512xf32>
    %cst_120 = arith.constant dense<0.000000e+00> : vector<8x512xf32>
    %275 = tpu.matmul %270, %3, %cst_120 {dimension_numbers = #tpu.dot_dimension_numbers<[1], [0], [0], [1], [0, 0, 1, 1], [], []>} : vector<8x128xf32>, vector<128x512xf32>, vector<8x512xf32> -> vector<8x512xf32>
    %276 = arith.addf %274, %275 : vector<8x512xf32>
    %277 = vector.extract_strided_slice %276 {offsets = [0, 0], sizes = [8, 128], strides = [1, 1]} : vector<8x512xf32> to vector<8x128xf32>
    %278 = arith.negf %277 : vector<8x128xf32>
    %279 = math.exp %278 : vector<8x128xf32>
    %cst_121 = arith.constant 1.000000e+00 : f32
    %280 = vector.broadcast %cst_121 : f32 to vector<8x128xf32>
    %281 = arith.addf %280, %279 : vector<8x128xf32>
    %282 = arith.divf %280, %281 : vector<8x128xf32>
    %283 = vector.extract_strided_slice %276 {offsets = [0, 128], sizes = [8, 128], strides = [1, 1]} : vector<8x512xf32> to vector<8x128xf32>
    %284 = arith.negf %283 : vector<8x128xf32>
    %285 = math.exp %284 : vector<8x128xf32>
    %cst_122 = arith.constant 1.000000e+00 : f32
    %286 = vector.broadcast %cst_122 : f32 to vector<8x128xf32>
    %287 = arith.addf %286, %285 : vector<8x128xf32>
    %288 = arith.divf %286, %287 : vector<8x128xf32>
    %289 = vector.extract_strided_slice %276 {offsets = [0, 256], sizes = [8, 128], strides = [1, 1]} : vector<8x512xf32> to vector<8x128xf32>
    %290 = math.tanh %289 : vector<8x128xf32>
    %291 = vector.extract_strided_slice %276 {offsets = [0, 384], sizes = [8, 128], strides = [1, 1]} : vector<8x512xf32> to vector<8x128xf32>
    %292 = arith.negf %291 : vector<8x128xf32>
    %293 = math.exp %292 : vector<8x128xf32>
    %cst_123 = arith.constant 1.000000e+00 : f32
    %294 = vector.broadcast %cst_123 : f32 to vector<8x128xf32>
    %295 = arith.addf %294, %293 : vector<8x128xf32>
    %296 = arith.divf %294, %295 : vector<8x128xf32>
    %297 = arith.mulf %288, %271 : vector<8x128xf32>
    %298 = arith.mulf %282, %290 : vector<8x128xf32>
    %299 = arith.addf %297, %298 : vector<8x128xf32>
    %300 = math.tanh %299 : vector<8x128xf32>
    %301 = arith.mulf %296, %300 : vector<8x128xf32>
    %c0_124 = arith.constant 0 : index
    %c0_125 = arith.constant 0 : index
    %302 = vector.load %arg7[%c0_124, %c0_125] : memref<8x128xf32, #tpu.memory_space<vmem>>, vector<8x128xf32>
    tpu.vector_store %arg7[%c0_124, %c0_125], %301 {strides = array<i32>} : memref<8x128xf32, #tpu.memory_space<vmem>>, vector<8x128xf32>,
    %c0_126 = arith.constant 0 : index
    %c0_127 = arith.constant 0 : index
    %303 = vector.load %arg8[%c0_126, %c0_127] : memref<8x128xf32, #tpu.memory_space<vmem>>, vector<8x128xf32>
    tpu.vector_store %arg8[%c0_126, %c0_127], %299 {strides = array<i32>} : memref<8x128xf32, #tpu.memory_space<vmem>>, vector<8x128xf32>,
    %304 = arith.index_cast %c7_i32 : i32 to index
    %c0_128 = arith.constant 0 : index
    %c0_129 = arith.constant 0 : index
    %305 = vector.load %arg4[%304, %c0_128, %c0_129] : memref<8x8x128xf32, #tpu.memory_space<vmem>>, vector<1x8x128xf32>
    %306 = vector.shape_cast %305 : vector<1x8x128xf32> to vector<8x128xf32>
    %307 = vector.shape_cast %301 : vector<8x128xf32> to vector<1x8x128xf32>
    tpu.vector_store %arg4[%304, %c0_128, %c0_129], %307 {strides = array<i32>} : memref<8x8x128xf32, #tpu.memory_space<vmem>>, vector<1x8x128xf32>,
    %c8_i32 = arith.constant 8 : i32
    %c0_i32_130 = arith.constant 0 : i32
    %308 = arith.cmpi eq, %arg1, %c0_i32_130 : i32
    %309 = arith.extui %308 : i1 to i32
    %c0_i32_131 = arith.constant 0 : i32
    %310 = arith.cmpi ne, %309, %c0_i32_131 : i32
    scf.if %310 {
      %c0_132 = arith.constant 0 : index
      %c0_133 = arith.constant 0 : index
      %311 = vector.load %arg7[%c0_132, %c0_133] : memref<8x128xf32, #tpu.memory_space<vmem>>, vector<8x128xf32>
      %c0_134 = arith.constant 0 : index
      %c0_135 = arith.constant 0 : index
      %312 = vector.load %arg5[%c0_134, %c0_135] : memref<8x128xf32, #tpu.memory_space<vmem>>, vector<8x128xf32>
      tpu.vector_store %arg5[%c0_134, %c0_135], %311 {strides = array<i32>} : memref<8x128xf32, #tpu.memory_space<vmem>>, vector<8x128xf32>,
      %c0_136 = arith.constant 0 : index
      %c0_137 = arith.constant 0 : index
      %313 = vector.load %arg8[%c0_136, %c0_137] : memref<8x128xf32, #tpu.memory_space<vmem>>, vector<8x128xf32>
      %c0_138 = arith.constant 0 : index
      %c0_139 = arith.constant 0 : index
      %314 = vector.load %arg6[%c0_138, %c0_139] : memref<8x128xf32, #tpu.memory_space<vmem>>, vector<8x128xf32>
      tpu.vector_store %arg6[%c0_138, %c0_139], %313 {strides = array<i32>} : memref<8x128xf32, #tpu.memory_space<vmem>>, vector<8x128xf32>,
    } else {
    }
    return
  }
  func.func @transform_0(%arg0: i32, %arg1: i32) -> (i32, i32, i32) {
    %c0_i32 = arith.constant 0 : i32
    %c0_i32_0 = arith.constant 0 : i32
    return %arg1, %arg0, %c0_i32 : i32, i32, i32
  }
  func.func @transform_2(%arg0: i32, %arg1: i32) -> (i32, i32, i32) {
    %c0_i32 = arith.constant 0 : i32
    %c0_i32_0 = arith.constant 0 : i32
    return %arg1, %arg0, %c0_i32 : i32, i32, i32
  }
  func.func @transform_3(%arg0: i32, %arg1: i32) -> (i32, i32) {
    %c0_i32 = arith.constant 0 : i32
    %c0_i32_0 = arith.constant 0 : i32
    return %arg0, %c0_i32 : i32, i32
  }
  func.func @transform_4(%arg0: i32, %arg1: i32) -> (i32, i32) {
    %c0_i32 = arith.constant 0 : i32
    %c0_i32_0 = arith.constant 0 : i32
    return %arg0, %c0_i32 : i32, i32
  }
}

module attributes {stable_mosaic.version = 11 : i64} {
  func.func @_lstm_recurrent_kernel(%arg0: i32, %arg1: i32, %arg2: memref<8x8x512xf32, #tpu.memory_space<vmem>>, %arg3: memref<128x512xf32, #tpu.memory_space<any>>, %arg4: memref<8x8x128xf32, #tpu.memory_space<vmem>>, %arg5: memref<8x128xf32, #tpu.memory_space<vmem>>, %arg6: memref<8x128xf32, #tpu.memory_space<vmem>>, %arg7: memref<8x128xf32, #tpu.memory_space<vmem>>, %arg8: memref<8x128xf32, #tpu.memory_space<vmem>>, %arg9: memref<128x512xf32, #tpu.memory_space<vmem>>, %arg10: memref<!tpu.dma_semaphore, #tpu.memory_space<semaphore_mem>>) attributes {dimension_semantics = [#tpu.dimension_semantics<parallel>, #tpu.dimension_semantics<arbitrary>], iteration_bounds = array<i64: 1, 1>, scalar_prefetch = 0 : i64, scratch_operands = 4 : i64, tpu.core_type = #tpu.core_type<tc>, window_params = [{transform_indices = @transform_0, window_bounds = array<i64: 8, 8, 512>}, {}, {transform_indices = @transform_2, window_bounds = array<i64: 8, 8, 128>}, {transform_indices = @transform_3, window_bounds = array<i64: 8, 128>}, {transform_indices = @transform_4, window_bounds = array<i64: 8, 128>}]} {
    %c0_i32 = arith.constant 0 : i32
    %0 = arith.cmpi eq, %arg1, %c0_i32 : i32
    %1 = arith.extui %0 : i1 to i32
    %c0_i32_0 = arith.constant 0 : i32
    %2 = arith.cmpi ne, %1, %c0_i32_0 : i32
    scf.if %2 {
      tpu.enqueue_dma source(%arg3 : memref<128x512xf32, #tpu.memory_space<any>>) target(%arg9 : memref<128x512xf32, #tpu.memory_space<vmem>>) target_semaphore(%arg10 : memref<!tpu.dma_semaphore, #tpu.memory_space<semaphore_mem>>)
      tpu.wait_dma2 semaphore(%arg10 : memref<!tpu.dma_semaphore, #tpu.memory_space<semaphore_mem>>) src(%arg3 : memref<128x512xf32, #tpu.memory_space<any>>) dst(%arg9 : memref<128x512xf32, #tpu.memory_space<vmem>>)
      %cst_132 = arith.constant 0.000000e+00 : f32
      %311 = vector.broadcast %cst_132 : f32 to vector<8x128xf32>
      %c0_133 = arith.constant 0 : index
      %c0_134 = arith.constant 0 : index
      %312 = vector.load %arg7[%c0_133, %c0_134] : memref<8x128xf32, #tpu.memory_space<vmem>>, vector<8x128xf32>
      tpu.vector_store %arg7[%c0_133, %c0_134], %311 {strides = array<i32>} : memref<8x128xf32, #tpu.memory_space<vmem>>, vector<8x128xf32>,
      %cst_135 = arith.constant 0.000000e+00 : f32
      %313 = vector.broadcast %cst_135 : f32 to vector<8x128xf32>
      %c0_136 = arith.constant 0 : index
      %c0_137 = arith.constant 0 : index
      %314 = vector.load %arg8[%c0_136, %c0_137] : memref<8x128xf32, #tpu.memory_space<vmem>>, vector<8x128xf32>
      tpu.vector_store %arg8[%c0_136, %c0_137], %313 {strides = array<i32>} : memref<8x128xf32, #tpu.memory_space<vmem>>, vector<8x128xf32>,
    } else {
    }
    %c0 = arith.constant 0 : index
    %c0_1 = arith.constant 0 : index
    %3 = vector.load %arg9[%c0, %c0_1] : memref<128x512xf32, #tpu.memory_space<vmem>>, vector<128x512xf32>
    %c0_i32_2 = arith.constant 0 : i32
    %c0_3 = arith.constant 0 : index
    %c0_4 = arith.constant 0 : index
    %4 = vector.load %arg7[%c0_3, %c0_4] : memref<8x128xf32, #tpu.memory_space<vmem>>, vector<8x128xf32>
    %c0_5 = arith.constant 0 : index
    %c0_6 = arith.constant 0 : index
    %5 = vector.load %arg8[%c0_5, %c0_6] : memref<8x128xf32, #tpu.memory_space<vmem>>, vector<8x128xf32>
    %6 = arith.index_cast %c0_i32_2 : i32 to index
    %c0_7 = arith.constant 0 : index
    %c0_8 = arith.constant 0 : index
    %7 = vector.load %arg2[%6, %c0_7, %c0_8] : memref<8x8x512xf32, #tpu.memory_space<vmem>>, vector<1x8x512xf32>
    %8 = vector.shape_cast %7 : vector<1x8x512xf32> to vector<8x512xf32>
    %cst = arith.constant dense<0.000000e+00> : vector<8x512xf32>
    %9 = tpu.matmul %4, %3, %cst {dimension_numbers = #tpu.dot_dimension_numbers<[1], [0], [0], [1], [0, 0, 1, 1], [], []>} : vector<8x128xf32>, vector<128x512xf32>, vector<8x512xf32> -> vector<8x512xf32>
    %10 = arith.addf %8, %9 : vector<8x512xf32>
    %11 = vector.extract_strided_slice %10 {offsets = [0, 0], sizes = [8, 128], strides = [1, 1]} : vector<8x512xf32> to vector<8x128xf32>
    %12 = arith.negf %11 : vector<8x128xf32>
    %13 = math.exp %12 : vector<8x128xf32>
    %cst_9 = arith.constant 1.000000e+00 : f32
    %14 = vector.broadcast %cst_9 : f32 to vector<8x128xf32>
    %15 = arith.addf %14, %13 : vector<8x128xf32>
    %16 = arith.divf %14, %15 : vector<8x128xf32>
    %17 = vector.extract_strided_slice %10 {offsets = [0, 128], sizes = [8, 128], strides = [1, 1]} : vector<8x512xf32> to vector<8x128xf32>
    %18 = arith.negf %17 : vector<8x128xf32>
    %19 = math.exp %18 : vector<8x128xf32>
    %cst_10 = arith.constant 1.000000e+00 : f32
    %20 = vector.broadcast %cst_10 : f32 to vector<8x128xf32>
    %21 = arith.addf %20, %19 : vector<8x128xf32>
    %22 = arith.divf %20, %21 : vector<8x128xf32>
    %23 = vector.extract_strided_slice %10 {offsets = [0, 256], sizes = [8, 128], strides = [1, 1]} : vector<8x512xf32> to vector<8x128xf32>
    %24 = math.tanh %23 : vector<8x128xf32>
    %25 = vector.extract_strided_slice %10 {offsets = [0, 384], sizes = [8, 128], strides = [1, 1]} : vector<8x512xf32> to vector<8x128xf32>
    %26 = arith.negf %25 : vector<8x128xf32>
    %27 = math.exp %26 : vector<8x128xf32>
    %cst_11 = arith.constant 1.000000e+00 : f32
    %28 = vector.broadcast %cst_11 : f32 to vector<8x128xf32>
    %29 = arith.addf %28, %27 : vector<8x128xf32>
    %30 = arith.divf %28, %29 : vector<8x128xf32>
    %31 = arith.mulf %22, %5 : vector<8x128xf32>
    %32 = arith.mulf %16, %24 : vector<8x128xf32>
    %33 = arith.addf %31, %32 : vector<8x128xf32>
    %34 = math.tanh %33 : vector<8x128xf32>
    %35 = arith.mulf %30, %34 : vector<8x128xf32>
    %c0_12 = arith.constant 0 : index
    %c0_13 = arith.constant 0 : index
    %36 = vector.load %arg7[%c0_12, %c0_13] : memref<8x128xf32, #tpu.memory_space<vmem>>, vector<8x128xf32>
    tpu.vector_store %arg7[%c0_12, %c0_13], %35 {strides = array<i32>} : memref<8x128xf32, #tpu.memory_space<vmem>>, vector<8x128xf32>,
    %c0_14 = arith.constant 0 : index
    %c0_15 = arith.constant 0 : index
    %37 = vector.load %arg8[%c0_14, %c0_15] : memref<8x128xf32, #tpu.memory_space<vmem>>, vector<8x128xf32>
    tpu.vector_store %arg8[%c0_14, %c0_15], %33 {strides = array<i32>} : memref<8x128xf32, #tpu.memory_space<vmem>>, vector<8x128xf32>,
    %38 = arith.index_cast %c0_i32_2 : i32 to index
    %c0_16 = arith.constant 0 : index
    %c0_17 = arith.constant 0 : index
    %39 = vector.load %arg4[%38, %c0_16, %c0_17] : memref<8x8x128xf32, #tpu.memory_space<vmem>>, vector<1x8x128xf32>
    %40 = vector.shape_cast %39 : vector<1x8x128xf32> to vector<8x128xf32>
    %41 = vector.shape_cast %35 : vector<8x128xf32> to vector<1x8x128xf32>
    tpu.vector_store %arg4[%38, %c0_16, %c0_17], %41 {strides = array<i32>} : memref<8x8x128xf32, #tpu.memory_space<vmem>>, vector<1x8x128xf32>,
    %c1_i32 = arith.constant 1 : i32
    %c0_18 = arith.constant 0 : index
    %c0_19 = arith.constant 0 : index
    %42 = vector.load %arg7[%c0_18, %c0_19] : memref<8x128xf32, #tpu.memory_space<vmem>>, vector<8x128xf32>
    %c0_20 = arith.constant 0 : index
    %c0_21 = arith.constant 0 : index
    %43 = vector.load %arg8[%c0_20, %c0_21] : memref<8x128xf32, #tpu.memory_space<vmem>>, vector<8x128xf32>
    %44 = arith.index_cast %c1_i32 : i32 to index
    %c0_22 = arith.constant 0 : index
    %c0_23 = arith.constant 0 : index
    %45 = vector.load %arg2[%44, %c0_22, %c0_23] : memref<8x8x512xf32, #tpu.memory_space<vmem>>, vector<1x8x512xf32>
    %46 = vector.shape_cast %45 : vector<1x8x512xf32> to vector<8x512xf32>
    %cst_24 = arith.constant dense<0.000000e+00> : vector<8x512xf32>
    %47 = tpu.matmul %42, %3, %cst_24 {dimension_numbers = #tpu.dot_dimension_numbers<[1], [0], [0], [1], [0, 0, 1, 1], [], []>} : vector<8x128xf32>, vector<128x512xf32>, vector<8x512xf32> -> vector<8x512xf32>
    %48 = arith.addf %46, %47 : vector<8x512xf32>
    %49 = vector.extract_strided_slice %48 {offsets = [0, 0], sizes = [8, 128], strides = [1, 1]} : vector<8x512xf32> to vector<8x128xf32>
    %50 = arith.negf %49 : vector<8x128xf32>
    %51 = math.exp %50 : vector<8x128xf32>
    %cst_25 = arith.constant 1.000000e+00 : f32
    %52 = vector.broadcast %cst_25 : f32 to vector<8x128xf32>
    %53 = arith.addf %52, %51 : vector<8x128xf32>
    %54 = arith.divf %52, %53 : vector<8x128xf32>
    %55 = vector.extract_strided_slice %48 {offsets = [0, 128], sizes = [8, 128], strides = [1, 1]} : vector<8x512xf32> to vector<8x128xf32>
    %56 = arith.negf %55 : vector<8x128xf32>
    %57 = math.exp %56 : vector<8x128xf32>
    %cst_26 = arith.constant 1.000000e+00 : f32
    %58 = vector.broadcast %cst_26 : f32 to vector<8x128xf32>
    %59 = arith.addf %58, %57 : vector<8x128xf32>
    %60 = arith.divf %58, %59 : vector<8x128xf32>
    %61 = vector.extract_strided_slice %48 {offsets = [0, 256], sizes = [8, 128], strides = [1, 1]} : vector<8x512xf32> to vector<8x128xf32>
    %62 = math.tanh %61 : vector<8x128xf32>
    %63 = vector.extract_strided_slice %48 {offsets = [0, 384], sizes = [8, 128], strides = [1, 1]} : vector<8x512xf32> to vector<8x128xf32>
    %64 = arith.negf %63 : vector<8x128xf32>
    %65 = math.exp %64 : vector<8x128xf32>
    %cst_27 = arith.constant 1.000000e+00 : f32
    %66 = vector.broadcast %cst_27 : f32 to vector<8x128xf32>
    %67 = arith.addf %66, %65 : vector<8x128xf32>
    %68 = arith.divf %66, %67 : vector<8x128xf32>
    %69 = arith.mulf %60, %43 : vector<8x128xf32>
    %70 = arith.mulf %54, %62 : vector<8x128xf32>
    %71 = arith.addf %69, %70 : vector<8x128xf32>
    %72 = math.tanh %71 : vector<8x128xf32>
    %73 = arith.mulf %68, %72 : vector<8x128xf32>
    %c0_28 = arith.constant 0 : index
    %c0_29 = arith.constant 0 : index
    %74 = vector.load %arg7[%c0_28, %c0_29] : memref<8x128xf32, #tpu.memory_space<vmem>>, vector<8x128xf32>
    tpu.vector_store %arg7[%c0_28, %c0_29], %73 {strides = array<i32>} : memref<8x128xf32, #tpu.memory_space<vmem>>, vector<8x128xf32>,
    %c0_30 = arith.constant 0 : index
    %c0_31 = arith.constant 0 : index
    %75 = vector.load %arg8[%c0_30, %c0_31] : memref<8x128xf32, #tpu.memory_space<vmem>>, vector<8x128xf32>
    tpu.vector_store %arg8[%c0_30, %c0_31], %71 {strides = array<i32>} : memref<8x128xf32, #tpu.memory_space<vmem>>, vector<8x128xf32>,
    %76 = arith.index_cast %c1_i32 : i32 to index
    %c0_32 = arith.constant 0 : index
    %c0_33 = arith.constant 0 : index
    %77 = vector.load %arg4[%76, %c0_32, %c0_33] : memref<8x8x128xf32, #tpu.memory_space<vmem>>, vector<1x8x128xf32>
    %78 = vector.shape_cast %77 : vector<1x8x128xf32> to vector<8x128xf32>
    %79 = vector.shape_cast %73 : vector<8x128xf32> to vector<1x8x128xf32>
    tpu.vector_store %arg4[%76, %c0_32, %c0_33], %79 {strides = array<i32>} : memref<8x8x128xf32, #tpu.memory_space<vmem>>, vector<1x8x128xf32>,
    %c2_i32 = arith.constant 2 : i32
    %c0_34 = arith.constant 0 : index
    %c0_35 = arith.constant 0 : index
    %80 = vector.load %arg7[%c0_34, %c0_35] : memref<8x128xf32, #tpu.memory_space<vmem>>, vector<8x128xf32>
    %c0_36 = arith.constant 0 : index
    %c0_37 = arith.constant 0 : index
    %81 = vector.load %arg8[%c0_36, %c0_37] : memref<8x128xf32, #tpu.memory_space<vmem>>, vector<8x128xf32>
    %82 = arith.index_cast %c2_i32 : i32 to index
    %c0_38 = arith.constant 0 : index
    %c0_39 = arith.constant 0 : index
    %83 = vector.load %arg2[%82, %c0_38, %c0_39] : memref<8x8x512xf32, #tpu.memory_space<vmem>>, vector<1x8x512xf32>
    %84 = vector.shape_cast %83 : vector<1x8x512xf32> to vector<8x512xf32>
    %cst_40 = arith.constant dense<0.000000e+00> : vector<8x512xf32>
    %85 = tpu.matmul %80, %3, %cst_40 {dimension_numbers = #tpu.dot_dimension_numbers<[1], [0], [0], [1], [0, 0, 1, 1], [], []>} : vector<8x128xf32>, vector<128x512xf32>, vector<8x512xf32> -> vector<8x512xf32>
    %86 = arith.addf %84, %85 : vector<8x512xf32>
    %87 = vector.extract_strided_slice %86 {offsets = [0, 0], sizes = [8, 128], strides = [1, 1]} : vector<8x512xf32> to vector<8x128xf32>
    %88 = arith.negf %87 : vector<8x128xf32>
    %89 = math.exp %88 : vector<8x128xf32>
    %cst_41 = arith.constant 1.000000e+00 : f32
    %90 = vector.broadcast %cst_41 : f32 to vector<8x128xf32>
    %91 = arith.addf %90, %89 : vector<8x128xf32>
    %92 = arith.divf %90, %91 : vector<8x128xf32>
    %93 = vector.extract_strided_slice %86 {offsets = [0, 128], sizes = [8, 128], strides = [1, 1]} : vector<8x512xf32> to vector<8x128xf32>
    %94 = arith.negf %93 : vector<8x128xf32>
    %95 = math.exp %94 : vector<8x128xf32>
    %cst_42 = arith.constant 1.000000e+00 : f32
    %96 = vector.broadcast %cst_42 : f32 to vector<8x128xf32>
    %97 = arith.addf %96, %95 : vector<8x128xf32>
    %98 = arith.divf %96, %97 : vector<8x128xf32>
    %99 = vector.extract_strided_slice %86 {offsets = [0, 256], sizes = [8, 128], strides = [1, 1]} : vector<8x512xf32> to vector<8x128xf32>
    %100 = math.tanh %99 : vector<8x128xf32>
    %101 = vector.extract_strided_slice %86 {offsets = [0, 384], sizes = [8, 128], strides = [1, 1]} : vector<8x512xf32> to vector<8x128xf32>
    %102 = arith.negf %101 : vector<8x128xf32>
    %103 = math.exp %102 : vector<8x128xf32>
    %cst_43 = arith.constant 1.000000e+00 : f32
    %104 = vector.broadcast %cst_43 : f32 to vector<8x128xf32>
    %105 = arith.addf %104, %103 : vector<8x128xf32>
    %106 = arith.divf %104, %105 : vector<8x128xf32>
    %107 = arith.mulf %98, %81 : vector<8x128xf32>
    %108 = arith.mulf %92, %100 : vector<8x128xf32>
    %109 = arith.addf %107, %108 : vector<8x128xf32>
    %110 = math.tanh %109 : vector<8x128xf32>
    %111 = arith.mulf %106, %110 : vector<8x128xf32>
    %c0_44 = arith.constant 0 : index
    %c0_45 = arith.constant 0 : index
    %112 = vector.load %arg7[%c0_44, %c0_45] : memref<8x128xf32, #tpu.memory_space<vmem>>, vector<8x128xf32>
    tpu.vector_store %arg7[%c0_44, %c0_45], %111 {strides = array<i32>} : memref<8x128xf32, #tpu.memory_space<vmem>>, vector<8x128xf32>,
    %c0_46 = arith.constant 0 : index
    %c0_47 = arith.constant 0 : index
    %113 = vector.load %arg8[%c0_46, %c0_47] : memref<8x128xf32, #tpu.memory_space<vmem>>, vector<8x128xf32>
    tpu.vector_store %arg8[%c0_46, %c0_47], %109 {strides = array<i32>} : memref<8x128xf32, #tpu.memory_space<vmem>>, vector<8x128xf32>,
    %114 = arith.index_cast %c2_i32 : i32 to index
    %c0_48 = arith.constant 0 : index
    %c0_49 = arith.constant 0 : index
    %115 = vector.load %arg4[%114, %c0_48, %c0_49] : memref<8x8x128xf32, #tpu.memory_space<vmem>>, vector<1x8x128xf32>
    %116 = vector.shape_cast %115 : vector<1x8x128xf32> to vector<8x128xf32>
    %117 = vector.shape_cast %111 : vector<8x128xf32> to vector<1x8x128xf32>
    tpu.vector_store %arg4[%114, %c0_48, %c0_49], %117 {strides = array<i32>} : memref<8x8x128xf32, #tpu.memory_space<vmem>>, vector<1x8x128xf32>,
    %c3_i32 = arith.constant 3 : i32
    %c0_50 = arith.constant 0 : index
    %c0_51 = arith.constant 0 : index
    %118 = vector.load %arg7[%c0_50, %c0_51] : memref<8x128xf32, #tpu.memory_space<vmem>>, vector<8x128xf32>
    %c0_52 = arith.constant 0 : index
    %c0_53 = arith.constant 0 : index
    %119 = vector.load %arg8[%c0_52, %c0_53] : memref<8x128xf32, #tpu.memory_space<vmem>>, vector<8x128xf32>
    %120 = arith.index_cast %c3_i32 : i32 to index
    %c0_54 = arith.constant 0 : index
    %c0_55 = arith.constant 0 : index
    %121 = vector.load %arg2[%120, %c0_54, %c0_55] : memref<8x8x512xf32, #tpu.memory_space<vmem>>, vector<1x8x512xf32>
    %122 = vector.shape_cast %121 : vector<1x8x512xf32> to vector<8x512xf32>
    %cst_56 = arith.constant dense<0.000000e+00> : vector<8x512xf32>
    %123 = tpu.matmul %118, %3, %cst_56 {dimension_numbers = #tpu.dot_dimension_numbers<[1], [0], [0], [1], [0, 0, 1, 1], [], []>} : vector<8x128xf32>, vector<128x512xf32>, vector<8x512xf32> -> vector<8x512xf32>
    %124 = arith.addf %122, %123 : vector<8x512xf32>
    %125 = vector.extract_strided_slice %124 {offsets = [0, 0], sizes = [8, 128], strides = [1, 1]} : vector<8x512xf32> to vector<8x128xf32>
    %126 = arith.negf %125 : vector<8x128xf32>
    %127 = math.exp %126 : vector<8x128xf32>
    %cst_57 = arith.constant 1.000000e+00 : f32
    %128 = vector.broadcast %cst_57 : f32 to vector<8x128xf32>
    %129 = arith.addf %128, %127 : vector<8x128xf32>
    %130 = arith.divf %128, %129 : vector<8x128xf32>
    %131 = vector.extract_strided_slice %124 {offsets = [0, 128], sizes = [8, 128], strides = [1, 1]} : vector<8x512xf32> to vector<8x128xf32>
    %132 = arith.negf %131 : vector<8x128xf32>
    %133 = math.exp %132 : vector<8x128xf32>
    %cst_58 = arith.constant 1.000000e+00 : f32
    %134 = vector.broadcast %cst_58 : f32 to vector<8x128xf32>
    %135 = arith.addf %134, %133 : vector<8x128xf32>
    %136 = arith.divf %134, %135 : vector<8x128xf32>
    %137 = vector.extract_strided_slice %124 {offsets = [0, 256], sizes = [8, 128], strides = [1, 1]} : vector<8x512xf32> to vector<8x128xf32>
    %138 = math.tanh %137 : vector<8x128xf32>
    %139 = vector.extract_strided_slice %124 {offsets = [0, 384], sizes = [8, 128], strides = [1, 1]} : vector<8x512xf32> to vector<8x128xf32>
    %140 = arith.negf %139 : vector<8x128xf32>
    %141 = math.exp %140 : vector<8x128xf32>
    %cst_59 = arith.constant 1.000000e+00 : f32
    %142 = vector.broadcast %cst_59 : f32 to vector<8x128xf32>
    %143 = arith.addf %142, %141 : vector<8x128xf32>
    %144 = arith.divf %142, %143 : vector<8x128xf32>
    %145 = arith.mulf %136, %119 : vector<8x128xf32>
    %146 = arith.mulf %130, %138 : vector<8x128xf32>
    %147 = arith.addf %145, %146 : vector<8x128xf32>
    %148 = math.tanh %147 : vector<8x128xf32>
    %149 = arith.mulf %144, %148 : vector<8x128xf32>
    %c0_60 = arith.constant 0 : index
    %c0_61 = arith.constant 0 : index
    %150 = vector.load %arg7[%c0_60, %c0_61] : memref<8x128xf32, #tpu.memory_space<vmem>>, vector<8x128xf32>
    tpu.vector_store %arg7[%c0_60, %c0_61], %149 {strides = array<i32>} : memref<8x128xf32, #tpu.memory_space<vmem>>, vector<8x128xf32>,
    %c0_62 = arith.constant 0 : index
    %c0_63 = arith.constant 0 : index
    %151 = vector.load %arg8[%c0_62, %c0_63] : memref<8x128xf32, #tpu.memory_space<vmem>>, vector<8x128xf32>
    tpu.vector_store %arg8[%c0_62, %c0_63], %147 {strides = array<i32>} : memref<8x128xf32, #tpu.memory_space<vmem>>, vector<8x128xf32>,
    %152 = arith.index_cast %c3_i32 : i32 to index
    %c0_64 = arith.constant 0 : index
    %c0_65 = arith.constant 0 : index
    %153 = vector.load %arg4[%152, %c0_64, %c0_65] : memref<8x8x128xf32, #tpu.memory_space<vmem>>, vector<1x8x128xf32>
    %154 = vector.shape_cast %153 : vector<1x8x128xf32> to vector<8x128xf32>
    %155 = vector.shape_cast %149 : vector<8x128xf32> to vector<1x8x128xf32>
    tpu.vector_store %arg4[%152, %c0_64, %c0_65], %155 {strides = array<i32>} : memref<8x8x128xf32, #tpu.memory_space<vmem>>, vector<1x8x128xf32>,
    %c4_i32 = arith.constant 4 : i32
    %c0_66 = arith.constant 0 : index
    %c0_67 = arith.constant 0 : index
    %156 = vector.load %arg7[%c0_66, %c0_67] : memref<8x128xf32, #tpu.memory_space<vmem>>, vector<8x128xf32>
    %c0_68 = arith.constant 0 : index
    %c0_69 = arith.constant 0 : index
    %157 = vector.load %arg8[%c0_68, %c0_69] : memref<8x128xf32, #tpu.memory_space<vmem>>, vector<8x128xf32>
    %158 = arith.index_cast %c4_i32 : i32 to index
    %c0_70 = arith.constant 0 : index
    %c0_71 = arith.constant 0 : index
    %159 = vector.load %arg2[%158, %c0_70, %c0_71] : memref<8x8x512xf32, #tpu.memory_space<vmem>>, vector<1x8x512xf32>
    %160 = vector.shape_cast %159 : vector<1x8x512xf32> to vector<8x512xf32>
    %cst_72 = arith.constant dense<0.000000e+00> : vector<8x512xf32>
    %161 = tpu.matmul %156, %3, %cst_72 {dimension_numbers = #tpu.dot_dimension_numbers<[1], [0], [0], [1], [0, 0, 1, 1], [], []>} : vector<8x128xf32>, vector<128x512xf32>, vector<8x512xf32> -> vector<8x512xf32>
    %162 = arith.addf %160, %161 : vector<8x512xf32>
    %163 = vector.extract_strided_slice %162 {offsets = [0, 0], sizes = [8, 128], strides = [1, 1]} : vector<8x512xf32> to vector<8x128xf32>
    %164 = arith.negf %163 : vector<8x128xf32>
    %165 = math.exp %164 : vector<8x128xf32>
    %cst_73 = arith.constant 1.000000e+00 : f32
    %166 = vector.broadcast %cst_73 : f32 to vector<8x128xf32>
    %167 = arith.addf %166, %165 : vector<8x128xf32>
    %168 = arith.divf %166, %167 : vector<8x128xf32>
    %169 = vector.extract_strided_slice %162 {offsets = [0, 128], sizes = [8, 128], strides = [1, 1]} : vector<8x512xf32> to vector<8x128xf32>
    %170 = arith.negf %169 : vector<8x128xf32>
    %171 = math.exp %170 : vector<8x128xf32>
    %cst_74 = arith.constant 1.000000e+00 : f32
    %172 = vector.broadcast %cst_74 : f32 to vector<8x128xf32>
    %173 = arith.addf %172, %171 : vector<8x128xf32>
    %174 = arith.divf %172, %173 : vector<8x128xf32>
    %175 = vector.extract_strided_slice %162 {offsets = [0, 256], sizes = [8, 128], strides = [1, 1]} : vector<8x512xf32> to vector<8x128xf32>
    %176 = math.tanh %175 : vector<8x128xf32>
    %177 = vector.extract_strided_slice %162 {offsets = [0, 384], sizes = [8, 128], strides = [1, 1]} : vector<8x512xf32> to vector<8x128xf32>
    %178 = arith.negf %177 : vector<8x128xf32>
    %179 = math.exp %178 : vector<8x128xf32>
    %cst_75 = arith.constant 1.000000e+00 : f32
    %180 = vector.broadcast %cst_75 : f32 to vector<8x128xf32>
    %181 = arith.addf %180, %179 : vector<8x128xf32>
    %182 = arith.divf %180, %181 : vector<8x128xf32>
    %183 = arith.mulf %174, %157 : vector<8x128xf32>
    %184 = arith.mulf %168, %176 : vector<8x128xf32>
    %185 = arith.addf %183, %184 : vector<8x128xf32>
    %186 = math.tanh %185 : vector<8x128xf32>
    %187 = arith.mulf %182, %186 : vector<8x128xf32>
    %c0_76 = arith.constant 0 : index
    %c0_77 = arith.constant 0 : index
    %188 = vector.load %arg7[%c0_76, %c0_77] : memref<8x128xf32, #tpu.memory_space<vmem>>, vector<8x128xf32>
    tpu.vector_store %arg7[%c0_76, %c0_77], %187 {strides = array<i32>} : memref<8x128xf32, #tpu.memory_space<vmem>>, vector<8x128xf32>,
    %c0_78 = arith.constant 0 : index
    %c0_79 = arith.constant 0 : index
    %189 = vector.load %arg8[%c0_78, %c0_79] : memref<8x128xf32, #tpu.memory_space<vmem>>, vector<8x128xf32>
    tpu.vector_store %arg8[%c0_78, %c0_79], %185 {strides = array<i32>} : memref<8x128xf32, #tpu.memory_space<vmem>>, vector<8x128xf32>,
    %190 = arith.index_cast %c4_i32 : i32 to index
    %c0_80 = arith.constant 0 : index
    %c0_81 = arith.constant 0 : index
    %191 = vector.load %arg4[%190, %c0_80, %c0_81] : memref<8x8x128xf32, #tpu.memory_space<vmem>>, vector<1x8x128xf32>
    %192 = vector.shape_cast %191 : vector<1x8x128xf32> to vector<8x128xf32>
    %193 = vector.shape_cast %187 : vector<8x128xf32> to vector<1x8x128xf32>
    tpu.vector_store %arg4[%190, %c0_80, %c0_81], %193 {strides = array<i32>} : memref<8x8x128xf32, #tpu.memory_space<vmem>>, vector<1x8x128xf32>,
    %c5_i32 = arith.constant 5 : i32
    %c0_82 = arith.constant 0 : index
    %c0_83 = arith.constant 0 : index
    %194 = vector.load %arg7[%c0_82, %c0_83] : memref<8x128xf32, #tpu.memory_space<vmem>>, vector<8x128xf32>
    %c0_84 = arith.constant 0 : index
    %c0_85 = arith.constant 0 : index
    %195 = vector.load %arg8[%c0_84, %c0_85] : memref<8x128xf32, #tpu.memory_space<vmem>>, vector<8x128xf32>
    %196 = arith.index_cast %c5_i32 : i32 to index
    %c0_86 = arith.constant 0 : index
    %c0_87 = arith.constant 0 : index
    %197 = vector.load %arg2[%196, %c0_86, %c0_87] : memref<8x8x512xf32, #tpu.memory_space<vmem>>, vector<1x8x512xf32>
    %198 = vector.shape_cast %197 : vector<1x8x512xf32> to vector<8x512xf32>
    %cst_88 = arith.constant dense<0.000000e+00> : vector<8x512xf32>
    %199 = tpu.matmul %194, %3, %cst_88 {dimension_numbers = #tpu.dot_dimension_numbers<[1], [0], [0], [1], [0, 0, 1, 1], [], []>} : vector<8x128xf32>, vector<128x512xf32>, vector<8x512xf32> -> vector<8x512xf32>
    %200 = arith.addf %198, %199 : vector<8x512xf32>
    %201 = vector.extract_strided_slice %200 {offsets = [0, 0], sizes = [8, 128], strides = [1, 1]} : vector<8x512xf32> to vector<8x128xf32>
    %202 = arith.negf %201 : vector<8x128xf32>
    %203 = math.exp %202 : vector<8x128xf32>
    %cst_89 = arith.constant 1.000000e+00 : f32
    %204 = vector.broadcast %cst_89 : f32 to vector<8x128xf32>
    %205 = arith.addf %204, %203 : vector<8x128xf32>
    %206 = arith.divf %204, %205 : vector<8x128xf32>
    %207 = vector.extract_strided_slice %200 {offsets = [0, 128], sizes = [8, 128], strides = [1, 1]} : vector<8x512xf32> to vector<8x128xf32>
    %208 = arith.negf %207 : vector<8x128xf32>
    %209 = math.exp %208 : vector<8x128xf32>
    %cst_90 = arith.constant 1.000000e+00 : f32
    %210 = vector.broadcast %cst_90 : f32 to vector<8x128xf32>
    %211 = arith.addf %210, %209 : vector<8x128xf32>
    %212 = arith.divf %210, %211 : vector<8x128xf32>
    %213 = vector.extract_strided_slice %200 {offsets = [0, 256], sizes = [8, 128], strides = [1, 1]} : vector<8x512xf32> to vector<8x128xf32>
    %214 = math.tanh %213 : vector<8x128xf32>
    %215 = vector.extract_strided_slice %200 {offsets = [0, 384], sizes = [8, 128], strides = [1, 1]} : vector<8x512xf32> to vector<8x128xf32>
    %216 = arith.negf %215 : vector<8x128xf32>
    %217 = math.exp %216 : vector<8x128xf32>
    %cst_91 = arith.constant 1.000000e+00 : f32
    %218 = vector.broadcast %cst_91 : f32 to vector<8x128xf32>
    %219 = arith.addf %218, %217 : vector<8x128xf32>
    %220 = arith.divf %218, %219 : vector<8x128xf32>
    %221 = arith.mulf %212, %195 : vector<8x128xf32>
    %222 = arith.mulf %206, %214 : vector<8x128xf32>
    %223 = arith.addf %221, %222 : vector<8x128xf32>
    %224 = math.tanh %223 : vector<8x128xf32>
    %225 = arith.mulf %220, %224 : vector<8x128xf32>
    %c0_92 = arith.constant 0 : index
    %c0_93 = arith.constant 0 : index
    %226 = vector.load %arg7[%c0_92, %c0_93] : memref<8x128xf32, #tpu.memory_space<vmem>>, vector<8x128xf32>
    tpu.vector_store %arg7[%c0_92, %c0_93], %225 {strides = array<i32>} : memref<8x128xf32, #tpu.memory_space<vmem>>, vector<8x128xf32>,
    %c0_94 = arith.constant 0 : index
    %c0_95 = arith.constant 0 : index
    %227 = vector.load %arg8[%c0_94, %c0_95] : memref<8x128xf32, #tpu.memory_space<vmem>>, vector<8x128xf32>
    tpu.vector_store %arg8[%c0_94, %c0_95], %223 {strides = array<i32>} : memref<8x128xf32, #tpu.memory_space<vmem>>, vector<8x128xf32>,
    %228 = arith.index_cast %c5_i32 : i32 to index
    %c0_96 = arith.constant 0 : index
    %c0_97 = arith.constant 0 : index
    %229 = vector.load %arg4[%228, %c0_96, %c0_97] : memref<8x8x128xf32, #tpu.memory_space<vmem>>, vector<1x8x128xf32>
    %230 = vector.shape_cast %229 : vector<1x8x128xf32> to vector<8x128xf32>
    %231 = vector.shape_cast %225 : vector<8x128xf32> to vector<1x8x128xf32>
    tpu.vector_store %arg4[%228, %c0_96, %c0_97], %231 {strides = array<i32>} : memref<8x8x128xf32, #tpu.memory_space<vmem>>, vector<1x8x128xf32>,
    %c6_i32 = arith.constant 6 : i32
    %c0_98 = arith.constant 0 : index
    %c0_99 = arith.constant 0 : index
    %232 = vector.load %arg7[%c0_98, %c0_99] : memref<8x128xf32, #tpu.memory_space<vmem>>, vector<8x128xf32>
    %c0_100 = arith.constant 0 : index
    %c0_101 = arith.constant 0 : index
    %233 = vector.load %arg8[%c0_100, %c0_101] : memref<8x128xf32, #tpu.memory_space<vmem>>, vector<8x128xf32>
    %234 = arith.index_cast %c6_i32 : i32 to index
    %c0_102 = arith.constant 0 : index
    %c0_103 = arith.constant 0 : index
    %235 = vector.load %arg2[%234, %c0_102, %c0_103] : memref<8x8x512xf32, #tpu.memory_space<vmem>>, vector<1x8x512xf32>
    %236 = vector.shape_cast %235 : vector<1x8x512xf32> to vector<8x512xf32>
    %cst_104 = arith.constant dense<0.000000e+00> : vector<8x512xf32>
    %237 = tpu.matmul %232, %3, %cst_104 {dimension_numbers = #tpu.dot_dimension_numbers<[1], [0], [0], [1], [0, 0, 1, 1], [], []>} : vector<8x128xf32>, vector<128x512xf32>, vector<8x512xf32> -> vector<8x512xf32>
    %238 = arith.addf %236, %237 : vector<8x512xf32>
    %239 = vector.extract_strided_slice %238 {offsets = [0, 0], sizes = [8, 128], strides = [1, 1]} : vector<8x512xf32> to vector<8x128xf32>
    %240 = arith.negf %239 : vector<8x128xf32>
    %241 = math.exp %240 : vector<8x128xf32>
    %cst_105 = arith.constant 1.000000e+00 : f32
    %242 = vector.broadcast %cst_105 : f32 to vector<8x128xf32>
    %243 = arith.addf %242, %241 : vector<8x128xf32>
    %244 = arith.divf %242, %243 : vector<8x128xf32>
    %245 = vector.extract_strided_slice %238 {offsets = [0, 128], sizes = [8, 128], strides = [1, 1]} : vector<8x512xf32> to vector<8x128xf32>
    %246 = arith.negf %245 : vector<8x128xf32>
    %247 = math.exp %246 : vector<8x128xf32>
    %cst_106 = arith.constant 1.000000e+00 : f32
    %248 = vector.broadcast %cst_106 : f32 to vector<8x128xf32>
    %249 = arith.addf %248, %247 : vector<8x128xf32>
    %250 = arith.divf %248, %249 : vector<8x128xf32>
    %251 = vector.extract_strided_slice %238 {offsets = [0, 256], sizes = [8, 128], strides = [1, 1]} : vector<8x512xf32> to vector<8x128xf32>
    %252 = math.tanh %251 : vector<8x128xf32>
    %253 = vector.extract_strided_slice %238 {offsets = [0, 384], sizes = [8, 128], strides = [1, 1]} : vector<8x512xf32> to vector<8x128xf32>
    %254 = arith.negf %253 : vector<8x128xf32>
    %255 = math.exp %254 : vector<8x128xf32>
    %cst_107 = arith.constant 1.000000e+00 : f32
    %256 = vector.broadcast %cst_107 : f32 to vector<8x128xf32>
    %257 = arith.addf %256, %255 : vector<8x128xf32>
    %258 = arith.divf %256, %257 : vector<8x128xf32>
    %259 = arith.mulf %250, %233 : vector<8x128xf32>
    %260 = arith.mulf %244, %252 : vector<8x128xf32>
    %261 = arith.addf %259, %260 : vector<8x128xf32>
    %262 = math.tanh %261 : vector<8x128xf32>
    %263 = arith.mulf %258, %262 : vector<8x128xf32>
    %c0_108 = arith.constant 0 : index
    %c0_109 = arith.constant 0 : index
    %264 = vector.load %arg7[%c0_108, %c0_109] : memref<8x128xf32, #tpu.memory_space<vmem>>, vector<8x128xf32>
    tpu.vector_store %arg7[%c0_108, %c0_109], %263 {strides = array<i32>} : memref<8x128xf32, #tpu.memory_space<vmem>>, vector<8x128xf32>,
    %c0_110 = arith.constant 0 : index
    %c0_111 = arith.constant 0 : index
    %265 = vector.load %arg8[%c0_110, %c0_111] : memref<8x128xf32, #tpu.memory_space<vmem>>, vector<8x128xf32>
    tpu.vector_store %arg8[%c0_110, %c0_111], %261 {strides = array<i32>} : memref<8x128xf32, #tpu.memory_space<vmem>>, vector<8x128xf32>,
    %266 = arith.index_cast %c6_i32 : i32 to index
    %c0_112 = arith.constant 0 : index
    %c0_113 = arith.constant 0 : index
    %267 = vector.load %arg4[%266, %c0_112, %c0_113] : memref<8x8x128xf32, #tpu.memory_space<vmem>>, vector<1x8x128xf32>
    %268 = vector.shape_cast %267 : vector<1x8x128xf32> to vector<8x128xf32>
    %269 = vector.shape_cast %263 : vector<8x128xf32> to vector<1x8x128xf32>
    tpu.vector_store %arg4[%266, %c0_112, %c0_113], %269 {strides = array<i32>} : memref<8x8x128xf32, #tpu.memory_space<vmem>>, vector<1x8x128xf32>,
    %c7_i32 = arith.constant 7 : i32
    %c0_114 = arith.constant 0 : index
    %c0_115 = arith.constant 0 : index
    %270 = vector.load %arg7[%c0_114, %c0_115] : memref<8x128xf32, #tpu.memory_space<vmem>>, vector<8x128xf32>
    %c0_116 = arith.constant 0 : index
    %c0_117 = arith.constant 0 : index
    %271 = vector.load %arg8[%c0_116, %c0_117] : memref<8x128xf32, #tpu.memory_space<vmem>>, vector<8x128xf32>
    %272 = arith.index_cast %c7_i32 : i32 to index
    %c0_118 = arith.constant 0 : index
    %c0_119 = arith.constant 0 : index
    %273 = vector.load %arg2[%272, %c0_118, %c0_119] : memref<8x8x512xf32, #tpu.memory_space<vmem>>, vector<1x8x512xf32>
    %274 = vector.shape_cast %273 : vector<1x8x512xf32> to vector<8x512xf32>
    %cst_120 = arith.constant dense<0.000000e+00> : vector<8x512xf32>
    %275 = tpu.matmul %270, %3, %cst_120 {dimension_numbers = #tpu.dot_dimension_numbers<[1], [0], [0], [1], [0, 0, 1, 1], [], []>} : vector<8x128xf32>, vector<128x512xf32>, vector<8x512xf32> -> vector<8x512xf32>
    %276 = arith.addf %274, %275 : vector<8x512xf32>
    %277 = vector.extract_strided_slice %276 {offsets = [0, 0], sizes = [8, 128], strides = [1, 1]} : vector<8x512xf32> to vector<8x128xf32>
    %278 = arith.negf %277 : vector<8x128xf32>
    %279 = math.exp %278 : vector<8x128xf32>
    %cst_121 = arith.constant 1.000000e+00 : f32
    %280 = vector.broadcast %cst_121 : f32 to vector<8x128xf32>
    %281 = arith.addf %280, %279 : vector<8x128xf32>
    %282 = arith.divf %280, %281 : vector<8x128xf32>
    %283 = vector.extract_strided_slice %276 {offsets = [0, 128], sizes = [8, 128], strides = [1, 1]} : vector<8x512xf32> to vector<8x128xf32>
    %284 = arith.negf %283 : vector<8x128xf32>
    %285 = math.exp %284 : vector<8x128xf32>
    %cst_122 = arith.constant 1.000000e+00 : f32
    %286 = vector.broadcast %cst_122 : f32 to vector<8x128xf32>
    %287 = arith.addf %286, %285 : vector<8x128xf32>
    %288 = arith.divf %286, %287 : vector<8x128xf32>
    %289 = vector.extract_strided_slice %276 {offsets = [0, 256], sizes = [8, 128], strides = [1, 1]} : vector<8x512xf32> to vector<8x128xf32>
    %290 = math.tanh %289 : vector<8x128xf32>
    %291 = vector.extract_strided_slice %276 {offsets = [0, 384], sizes = [8, 128], strides = [1, 1]} : vector<8x512xf32> to vector<8x128xf32>
    %292 = arith.negf %291 : vector<8x128xf32>
    %293 = math.exp %292 : vector<8x128xf32>
    %cst_123 = arith.constant 1.000000e+00 : f32
    %294 = vector.broadcast %cst_123 : f32 to vector<8x128xf32>
    %295 = arith.addf %294, %293 : vector<8x128xf32>
    %296 = arith.divf %294, %295 : vector<8x128xf32>
    %297 = arith.mulf %288, %271 : vector<8x128xf32>
    %298 = arith.mulf %282, %290 : vector<8x128xf32>
    %299 = arith.addf %297, %298 : vector<8x128xf32>
    %300 = math.tanh %299 : vector<8x128xf32>
    %301 = arith.mulf %296, %300 : vector<8x128xf32>
    %c0_124 = arith.constant 0 : index
    %c0_125 = arith.constant 0 : index
    %302 = vector.load %arg7[%c0_124, %c0_125] : memref<8x128xf32, #tpu.memory_space<vmem>>, vector<8x128xf32>
    tpu.vector_store %arg7[%c0_124, %c0_125], %301 {strides = array<i32>} : memref<8x128xf32, #tpu.memory_space<vmem>>, vector<8x128xf32>,
    %c0_126 = arith.constant 0 : index
    %c0_127 = arith.constant 0 : index
    %303 = vector.load %arg8[%c0_126, %c0_127] : memref<8x128xf32, #tpu.memory_space<vmem>>, vector<8x128xf32>
    tpu.vector_store %arg8[%c0_126, %c0_127], %299 {strides = array<i32>} : memref<8x128xf32, #tpu.memory_space<vmem>>, vector<8x128xf32>,
    %304 = arith.index_cast %c7_i32 : i32 to index
    %c0_128 = arith.constant 0 : index
    %c0_129 = arith.constant 0 : index
    %305 = vector.load %arg4[%304, %c0_128, %c0_129] : memref<8x8x128xf32, #tpu.memory_space<vmem>>, vector<1x8x128xf32>
    %306 = vector.shape_cast %305 : vector<1x8x128xf32> to vector<8x128xf32>
    %307 = vector.shape_cast %301 : vector<8x128xf32> to vector<1x8x128xf32>
    tpu.vector_store %arg4[%304, %c0_128, %c0_129], %307 {strides = array<i32>} : memref<8x8x128xf32, #tpu.memory_space<vmem>>, vector<1x8x128xf32>,
    %c8_i32 = arith.constant 8 : i32
    %c0_i32_130 = arith.constant 0 : i32
    %308 = arith.cmpi eq, %arg1, %c0_i32_130 : i32
    %309 = arith.extui %308 : i1 to i32
    %c0_i32_131 = arith.constant 0 : i32
    %310 = arith.cmpi ne, %309, %c0_i32_131 : i32
    scf.if %310 {
      %c0_132 = arith.constant 0 : index
      %c0_133 = arith.constant 0 : index
      %311 = vector.load %arg7[%c0_132, %c0_133] : memref<8x128xf32, #tpu.memory_space<vmem>>, vector<8x128xf32>
      %c0_134 = arith.constant 0 : index
      %c0_135 = arith.constant 0 : index
      %312 = vector.load %arg5[%c0_134, %c0_135] : memref<8x128xf32, #tpu.memory_space<vmem>>, vector<8x128xf32>
      tpu.vector_store %arg5[%c0_134, %c0_135], %311 {strides = array<i32>} : memref<8x128xf32, #tpu.memory_space<vmem>>, vector<8x128xf32>,
      %c0_136 = arith.constant 0 : index
      %c0_137 = arith.constant 0 : index
      %313 = vector.load %arg8[%c0_136, %c0_137] : memref<8x128xf32, #tpu.memory_space<vmem>>, vector<8x128xf32>
      %c0_138 = arith.constant 0 : index
      %c0_139 = arith.constant 0 : index
      %314 = vector.load %arg6[%c0_138, %c0_139] : memref<8x128xf32, #tpu.memory_space<vmem>>, vector<8x128xf32>
      tpu.vector_store %arg6[%c0_138, %c0_139], %313 {strides = array<i32>} : memref<8x128xf32, #tpu.memory_space<vmem>>, vector<8x128xf32>,
    } else {
    }
    return
  }
  func.func @transform_0(%arg0: i32, %arg1: i32) -> (i32, i32, i32) {
    %c0_i32 = arith.constant 0 : i32
    %c0_i32_0 = arith.constant 0 : i32
    return %arg1, %arg0, %c0_i32 : i32, i32, i32
  }
  func.func @transform_2(%arg0: i32, %arg1: i32) -> (i32, i32, i32) {
    %c0_i32 = arith.constant 0 : i32
    %c0_i32_0 = arith.constant 0 : i32
    return %arg1, %arg0, %c0_i32 : i32, i32, i32
  }
  func.func @transform_3(%arg0: i32, %arg1: i32) -> (i32, i32) {
    %c0_i32 = arith.constant 0 : i32
    %c0_i32_0 = arith.constant 0 : i32
    return %arg0, %c0_i32 : i32, i32
  }
  func.func @transform_4(%arg0: i32, %arg1: i32) -> (i32, i32) {
    %c0_i32 = arith.constant 0 : i32
    %c0_i32_0 = arith.constant 0 : i32
    return %arg0, %c0_i32 : i32, i32
  }
}

</mosaic_0001>

<llo_original>
// kernel: encoder_forward.3
$region0: #{encoder_forward.3}
  #allocation0 [shape = 'u32[]', space=smem, size = 0x4, offset = 0x4, fixed_abs, tag = 'smem constant byte address 0x4 - core index']
  #allocation1 [shape = 'u32[144,128]{1,0:T(1,128)}', space=vmem, size = 0x12000, scoped, tag = 'internal scratch']
  #allocation2 [shape = 'f32[8,128]{1,0:T(8,128)}', space=vmem, size = 0x1000, scoped, tag = 'scratch operand']
  #allocation3 [shape = 'f32[8,128]{1,0:T(8,128)}', space=vmem, size = 0x1000, scoped, tag = 'scratch operand']
  #allocation4 [shape = 'f32[128,512]{1,0:T(8,128)}', space=vmem, size = 0x40000, scoped, tag = 'scratch operand']
  #allocation5 [shape = 's32[1]{0}', space=sflag, size = 0x4, scoped, tag = 'scratch operand']
  #allocation8 [shape = 's32[]', space=sflag, size = 0x4, offset = 0, fixed_abs, tag = 'sflag constant byte address 0x0 - dummy sync flag']
  %s0 = inlined_call_operand.vmem [shape: f32[8,8,512], index: 0, kind: input, shape index: {}]
  %s1 = inlined_call_operand.vmem [shape: f32[128,512], index: 1, kind: input, shape index: {}]
  %s2 = inlined_call_operand.hbm [shape: f32[8,8,128], index: 2, kind: output, shape index: {0}]
  %s3 = inlined_call_operand.vmem [shape: f32[8,128], index: 3, kind: output, shape index: {1}]
  %s4 = inlined_call_operand.vmem [shape: f32[8,128], index: 4, kind: output, shape index: {2}]
  %5 = xla_tuple %s2, %s3, %s4
  %s6 = sld [smem:[#allocation0]]
  $region72: #{encoder_forward.3} parent=0
    _
  %s8 = ssub.s32 1, %s6
  %s9 = scalar_select 0, %s8, %s6
  $region1: #{encoder_forward.3} parent=0
    #allocation6 [shape = 'u8[32768]{0}', space=vmem, size = 0x8000, scoped, tag = 'output window, operand 0, single buffered']
    #allocation7 [shape = 's32[1]{0}', space=sflag, size = 0x4, scoped, tag = 'scoped memory for encoder_forward.3']
    %10 = vsyncpa [#allocation7], 0
    // Predicated region
    $region2: #{encoder_forward.3} parent=1 // pred_check
      _
    $region3: #{encoder_forward.3} parent=1 // pred_check_branch
      %12 = sbr.rel (0) target = $region5
    $region4: #{encoder_forward.3} parent=1 // pred_region
      _
    $region5: #{encoder_forward.3} parent=1 // pred_fallthru
      _
    %p13 = scmp.eq.s32.totalorder 0, 0
    // Predicated region
    $region6: #{encoder_forward.3} parent=1 // pred_check
      %p14 = pneg %p13
    $region7: #{encoder_forward.3} parent=1 // pred_check_branch
      %16 = sbr.rel (%p14) target = $region9
    $region8: #{encoder_forward.3} parent=1 // pred_region
      %p18 = scmp.lt.u32.totalorder 512, 8
      %p19 = pneg %p18
      // Predicated region
      $region10: #{encoder_forward.3} parent=8 // pred_check
        _
      $region11: #{encoder_forward.3} parent=8 // pred_check_branch
        %21 = sbr.rel (%p18) target = $region13
      $region12: #{encoder_forward.3} parent=8 // pred_region
        %s36 = sand.u32 512, 7
        %p37 = scmp.eq.s32.totalorder %s36, 0
        // Predicated region
        $region25: #{encoder_forward.3} parent=12 // pred_check
          %p38 = pneg %p37
        $region26: #{encoder_forward.3} parent=12 // pred_check_branch
          %40 = sbr.rel (%p38) target = $region28
        $region27: #{encoder_forward.3} parent=12 // pred_region
          loop: start=0, step=1, limit=1
          $region29: #{encoder_forward.3} parent=27 // loop_pre_header
            _
          $region30: #{encoder_forward.3} parent=27 // loop_header
            %s42 = sphi 0, %s46
            %p43 = scmp.ge.s32.totalorder %s42, 1
            %s47 = sphi %s1, %s1
            %s48 = sphi [#allocation4], [#allocation4]
          $region31: #{encoder_forward.3} parent=27 // loop_header_branch
            %45 = sbr.rel (%p43) target = $region35
          $region32: #{encoder_forward.3} parent=27 // loop_body
            %v49 = vld [vmem:[%s47] sm:$0xff]
            %50 = vst [vmem:[%s48] sm:$0xff] %v49
            %v51 = vld [vmem:[%s47 + $0x8] sm:$0xff]
            %52 = vst [vmem:[%s48 + $0x8] sm:$0xff] %v51
            %v53 = vld [vmem:[%s47 + $0x10] sm:$0xff]
            %54 = vst [vmem:[%s48 + $0x10] sm:$0xff] %v53
            %v55 = vld [vmem:[%s47 + $0x18] sm:$0xff]
            %56 = vst [vmem:[%s48 + $0x18] sm:$0xff] %v55
            %v57 = vld [vmem:[%s47 + $0x20] sm:$0xff]
            %58 = vst [vmem:[%s48 + $0x20] sm:$0xff] %v57
            %v59 = vld [vmem:[%s47 + $0x28] sm:$0xff]
            %60 = vst [vmem:[%s48 + $0x28] sm:$0xff] %v59
            %v61 = vld [vmem:[%s47 + $0x30] sm:$0xff]
            %62 = vst [vmem:[%s48 + $0x30] sm:$0xff] %v61
            %v63 = vld [vmem:[%s47 + $0x38] sm:$0xff]
            %64 = vst [vmem:[%s48 + $0x38] sm:$0xff] %v63
            %v65 = vld [vmem:[%s47 + $0x40] sm:$0xff]
            %66 = vst [vmem:[%s48 + $0x40] sm:$0xff] %v65
            %v67 = vld [vmem:[%s47 + $0x48] sm:$0xff]
            %68 = vst [vmem:[%s48 + $0x48] sm:$0xff] %v67
            %v69 = vld [vmem:[%s47 + $0x50] sm:$0xff]
            %70 = vst [vmem:[%s48 + $0x50] sm:$0xff] %v69
            %v71 = vld [vmem:[%s47 + $0x58] sm:$0xff]
            %72 = vst [vmem:[%s48 + $0x58] sm:$0xff] %v71
            %v73 = vld [vmem:[%s47 + $0x60] sm:$0xff]
            %74 = vst [vmem:[%s48 + $0x60] sm:$0xff] %v73
            %v75 = vld [vmem:[%s47 + $0x68] sm:$0xff]
            %76 = vst [vmem:[%s48 + $0x68] sm:$0xff] %v75
            %v77 = vld [vmem:[%s47 + $0x70] sm:$0xff]
            %78 = vst [vmem:[%s48 + $0x70] sm:$0xff] %v77
            %v79 = vld [vmem:[%s47 + $0x78] sm:$0xff]
            %80 = vst [vmem:[%s48 + $0x78] sm:$0xff] %v79
            %v81 = vld [vmem:[%s47 + $0x80] sm:$0xff]
            %82 = vst [vmem:[%s48 + $0x80] sm:$0xff] %v81
            %v83 = vld [vmem:[%s47 + $0x88] sm:$0xff]
            %84 = vst [vmem:[%s48 + $0x88] sm:$0xff] %v83
            %v85 = vld [vmem:[%s47 + $0x90] sm:$0xff]
            %86 = vst [vmem:[%s48 + $0x90] sm:$0xff] %v85
            %v87 = vld [vmem:[%s47 + $0x98] sm:$0xff]
            %88 = vst [vmem:[%s48 + $0x98] sm:$0xff] %v87
            %v89 = vld [vmem:[%s47 + $0xa0] sm:$0xff]
            %90 = vst [vmem:[%s48 + $0xa0] sm:$0xff] %v89
            %v91 = vld [vmem:[%s47 + $0xa8] sm:$0xff]
            %92 = vst [vmem:[%s48 + $0xa8] sm:$0xff] %v91
            %v93 = vld [vmem:[%s47 + $0xb0] sm:$0xff]
            %94 = vst [vmem:[%s48 + $0xb0] sm:$0xff] %v93
            %v95 = vld [vmem:[%s47 + $0xb8] sm:$0xff]
            %96 = vst [vmem:[%s48 + $0xb8] sm:$0xff] %v95
            %v97 = vld [vmem:[%s47 + $0xc0] sm:$0xff]
            %98 = vst [vmem:[%s48 + $0xc0] sm:$0xff] %v97
            %v99 = vld [vmem:[%s47 + $0xc8] sm:$0xff]
            %100 = vst [vmem:[%s48 + $0xc8] sm:$0xff] %v99
            %v101 = vld [vmem:[%s47 + $0xd0] sm:$0xff]
            %102 = vst [vmem:[%s48 + $0xd0] sm:$0xff] %v101
            %v103 = vld [vmem:[%s47 + $0xd8] sm:$0xff]
            %104 = vst [vmem:[%s48 + $0xd8] sm:$0xff] %v103
            %v105 = vld [vmem:[%s47 + $0xe0] sm:$0xff]
            %106 = vst [vmem:[%s48 + $0xe0] sm:$0xff] %v105
            %v107 = vld [vmem:[%s47 + $0xe8] sm:$0xff]
            %108 = vst [vmem:[%s48 + $0xe8] sm:$0xff] %v107
            %v109 = vld [vmem:[%s47 + $0xf0] sm:$0xff]
            %110 = vst [vmem:[%s48 + $0xf0] sm:$0xff] %v109
            %v111 = vld [vmem:[%s47 + $0xf8] sm:$0xff]
            %112 = vst [vmem:[%s48 + $0xf8] sm:$0xff] %v111
            %v113 = vld [vmem:[%s47 + $0x100] sm:$0xff]
            %114 = vst [vmem:[%s48 + $0x100] sm:$0xff] %v113
            %v115 = vld [vmem:[%s47 + $0x108] sm:$0xff]
            %116 = vst [vmem:[%s48 + $0x108] sm:$0xff] %v115
            %v117 = vld [vmem:[%s47 + $0x110] sm:$0xff]
            %118 = vst [vmem:[%s48 + $0x110] sm:$0xff] %v117
            %v119 = vld [vmem:[%s47 + $0x118] sm:$0xff]
            %120 = vst [vmem:[%s48 + $0x118] sm:$0xff] %v119
            %v121 = vld [vmem:[%s47 + $0x120] sm:$0xff]
            %122 = vst [vmem:[%s48 + $0x120] sm:$0xff] %v121
            %v123 = vld [vmem:[%s47 + $0x128] sm:$0xff]
            %124 = vst [vmem:[%s48 + $0x128] sm:$0xff] %v123
            %v125 = vld [vmem:[%s47 + $0x130] sm:$0xff]
            %126 = vst [vmem:[%s48 + $0x130] sm:$0xff] %v125
            %v127 = vld [vmem:[%s47 + $0x138] sm:$0xff]
            %128 = vst [vmem:[%s48 + $0x138] sm:$0xff] %v127
            %v129 = vld [vmem:[%s47 + $0x140] sm:$0xff]
            %130 = vst [vmem:[%s48 + $0x140] sm:$0xff] %v129
            %v131 = vld [vmem:[%s47 + $0x148] sm:$0xff]
            %132 = vst [vmem:[%s48 + $0x148] sm:$0xff] %v131
            %v133 = vld [vmem:[%s47 + $0x150] sm:$0xff]
            %134 = vst [vmem:[%s48 + $0x150] sm:$0xff] %v133
            %v135 = vld [vmem:[%s47 + $0x158] sm:$0xff]
            %136 = vst [vmem:[%s48 + $0x158] sm:$0xff] %v135
            %v137 = vld [vmem:[%s47 + $0x160] sm:$0xff]
            %138 = vst [vmem:[%s48 + $0x160] sm:$0xff] %v137
            %v139 = vld [vmem:[%s47 + $0x168] sm:$0xff]
            %140 = vst [vmem:[%s48 + $0x168] sm:$0xff] %v139
            %v141 = vld [vmem:[%s47 + $0x170] sm:$0xff]
            %142 = vst [vmem:[%s48 + $0x170] sm:$0xff] %v141
            %v143 = vld [vmem:[%s47 + $0x178] sm:$0xff]
            %144 = vst [vmem:[%s48 + $0x178] sm:$0xff] %v143
            %v145 = vld [vmem:[%s47 + $0x180] sm:$0xff]
            %146 = vst [vmem:[%s48 + $0x180] sm:$0xff] %v145
            %v147 = vld [vmem:[%s47 + $0x188] sm:$0xff]
            %148 = vst [vmem:[%s48 + $0x188] sm:$0xff] %v147
            %v149 = vld [vmem:[%s47 + $0x190] sm:$0xff]
            %150 = vst [vmem:[%s48 + $0x190] sm:$0xff] %v149
            %v151 = vld [vmem:[%s47 + $0x198] sm:$0xff]
            %152 = vst [vmem:[%s48 + $0x198] sm:$0xff] %v151
            %v153 = vld [vmem:[%s47 + $0x1a0] sm:$0xff]
            %154 = vst [vmem:[%s48 + $0x1a0] sm:$0xff] %v153
            %v155 = vld [vmem:[%s47 + $0x1a8] sm:$0xff]
            %156 = vst [vmem:[%s48 + $0x1a8] sm:$0xff] %v155
            %v157 = vld [vmem:[%s47 + $0x1b0] sm:$0xff]
            %158 = vst [vmem:[%s48 + $0x1b0] sm:$0xff] %v157
            %v159 = vld [vmem:[%s47 + $0x1b8] sm:$0xff]
            %160 = vst [vmem:[%s48 + $0x1b8] sm:$0xff] %v159
            %v161 = vld [vmem:[%s47 + $0x1c0] sm:$0xff]
            %162 = vst [vmem:[%s48 + $0x1c0] sm:$0xff] %v161
            %v163 = vld [vmem:[%s47 + $0x1c8] sm:$0xff]
            %164 = vst [vmem:[%s48 + $0x1c8] sm:$0xff] %v163
            %v165 = vld [vmem:[%s47 + $0x1d0] sm:$0xff]
            %166 = vst [vmem:[%s48 + $0x1d0] sm:$0xff] %v165
            %v167 = vld [vmem:[%s47 + $0x1d8] sm:$0xff]
            %168 = vst [vmem:[%s48 + $0x1d8] sm:$0xff] %v167
            %v169 = vld [vmem:[%s47 + $0x1e0] sm:$0xff]
            %170 = vst [vmem:[%s48 + $0x1e0] sm:$0xff] %v169
            %v171 = vld [vmem:[%s47 + $0x1e8] sm:$0xff]
            %172 = vst [vmem:[%s48 + $0x1e8] sm:$0xff] %v171
            %v173 = vld [vmem:[%s47 + $0x1f0] sm:$0xff]
            %174 = vst [vmem:[%s48 + $0x1f0] sm:$0xff] %v173
            %v175 = vld [vmem:[%s47 + $0x1f8] sm:$0xff]
            %176 = vst [vmem:[%s48 + $0x1f8] sm:$0xff] %v175
          $region33: #{encoder_forward.3} parent=27 // loop_footer
            %s46 = sadd.s32 1, %s42
          $region34: #{encoder_forward.3} parent=27 // loop_footer_branch
            %41 = sbr.rel target = $region30
          $region35: #{encoder_forward.3} parent=27 // loop_exit
            _
        $region28: #{encoder_forward.3} parent=12 // pred_fallthru
          _
        %p177 = pneg %p37
        // Predicated region
        $region36: #{encoder_forward.3} parent=12 // pred_check
          _
        $region37: #{encoder_forward.3} parent=12 // pred_check_branch
          %179 = sbr.rel (%p37) target = $region39
        $region38: #{encoder_forward.3} parent=12 // pred_region
          %s180 = sand.u32 512, 7
        $region39: #{encoder_forward.3} parent=12 // pred_fallthru
          _
      $region13: #{encoder_forward.3} parent=8 // pred_fallthru
        _
      // Predicated region
      $region14: #{encoder_forward.3} parent=8 // pred_check
        %p22 = pneg %p18
      $region15: #{encoder_forward.3} parent=8 // pred_check_branch
        %24 = sbr.rel (%p22) target = $region17
      $region16: #{encoder_forward.3} parent=8 // pred_region
        %s25 = sshllo.u32 0, 512
        loop: start=0, step=1, limit=1
        $region18: #{encoder_forward.3} parent=16 // loop_pre_header
          _
        $region19: #{encoder_forward.3} parent=16 // loop_header
          %s27 = sphi 0, %s31
          %p28 = scmp.ge.s32.totalorder %s27, 1
          %s32 = sphi %s1, %s1
          %s33 = sphi [#allocation4], [#allocation4]
        $region20: #{encoder_forward.3} parent=16 // loop_header_branch
          %30 = sbr.rel (%p28) target = $region24
        $region21: #{encoder_forward.3} parent=16 // loop_body
          %v34 = vld [vmem:[%s32] sm:%s25]
          %35 = vst [vmem:[%s33] sm:%s25] %v34
        $region22: #{encoder_forward.3} parent=16 // loop_footer
          %s31 = sadd.s32 1, %s27
        $region23: #{encoder_forward.3} parent=16 // loop_footer_branch
          %26 = sbr.rel target = $region19
        $region24: #{encoder_forward.3} parent=16 // loop_exit
          _
      $region17: #{encoder_forward.3} parent=8 // pred_fallthru
        _
      // Predicated region
      $region40: #{encoder_forward.3} parent=8 // pred_check
        _
      $region41: #{encoder_forward.3} parent=8 // pred_check_branch
        %183 = sbr.rel (0) target = $region43
      $region42: #{encoder_forward.3} parent=8 // pred_region
        %184 = vsyncadd [#allocation5], 8192
      $region43: #{encoder_forward.3} parent=8 // pred_fallthru
        _
      %s185 = smul.u32 8, 16
      %s186 = smul.u32 %s185, 4
      %s187 = sshll.u32 %s186, 4
      %188 = dma.done [#allocation5], %s187
      %189 = vst [vmem:[#allocation2] sm:$0xff] 0.0
      %190 = vst [vmem:[#allocation3] sm:$0xff] 0.0
    $region9: #{encoder_forward.3} parent=1 // pred_fallthru
      _
    %v191 = vld [vmem:[#allocation4] sm:$0xff]
    %v192 = vld [vmem:[#allocation4 + $0x8] sm:$0xff]
    %v193 = vld [vmem:[#allocation4 + $0x10] sm:$0xff]
    %v194 = vld [vmem:[#allocation4 + $0x18] sm:$0xff]
    %v195 = vld [vmem:[#allocation4 + $0x20] sm:$0xff]
    %v196 = vld [vmem:[#allocation4 + $0x28] sm:$0xff]
    %v197 = vld [vmem:[#allocation4 + $0x30] sm:$0xff]
    %v198 = vld [vmem:[#allocation4 + $0x38] sm:$0xff]
    %v199 = vld [vmem:[#allocation4 + $0x40] sm:$0xff]
    %v200 = vld [vmem:[#allocation4 + $0x48] sm:$0xff]
    %v201 = vld [vmem:[#allocation4 + $0x50] sm:$0xff]
    %v202 = vld [vmem:[#allocation4 + $0x58] sm:$0xff]
    %v203 = vld [vmem:[#allocation4 + $0x60] sm:$0xff]
    %v204 = vld [vmem:[#allocation4 + $0x68] sm:$0xff]
    %v205 = vld [vmem:[#allocation4 + $0x70] sm:$0xff]
    %v206 = vld [vmem:[#allocation4 + $0x78] sm:$0xff]
    %v207 = vld [vmem:[#allocation4 + $0x80] sm:$0xff]
    %v208 = vld [vmem:[#allocation4 + $0x88] sm:$0xff]
    %v209 = vld [vmem:[#allocation4 + $0x90] sm:$0xff]
    %v210 = vld [vmem:[#allocation4 + $0x98] sm:$0xff]
    %v211 = vld [vmem:[#allocation4 + $0xa0] sm:$0xff]
    %v212 = vld [vmem:[#allocation4 + $0xa8] sm:$0xff]
    %v213 = vld [vmem:[#allocation4 + $0xb0] sm:$0xff]
    %v214 = vld [vmem:[#allocation4 + $0xb8] sm:$0xff]
    %v215 = vld [vmem:[#allocation4 + $0xc0] sm:$0xff]
    %v216 = vld [vmem:[#allocation4 + $0xc8] sm:$0xff]
    %v217 = vld [vmem:[#allocation4 + $0xd0] sm:$0xff]
    %v218 = vld [vmem:[#allocation4 + $0xd8] sm:$0xff]
    %v219 = vld [vmem:[#allocation4 + $0xe0] sm:$0xff]
    %v220 = vld [vmem:[#allocation4 + $0xe8] sm:$0xff]
    %v221 = vld [vmem:[#allocation4 + $0xf0] sm:$0xff]
    %v222 = vld [vmem:[#allocation4 + $0xf8] sm:$0xff]
    %v223 = vld [vmem:[#allocation4 + $0x100] sm:$0xff]
    %v224 = vld [vmem:[#allocation4 + $0x108] sm:$0xff]
    %v225 = vld [vmem:[#allocation4 + $0x110] sm:$0xff]
    %v226 = vld [vmem:[#allocation4 + $0x118] sm:$0xff]
    %v227 = vld [vmem:[#allocation4 + $0x120] sm:$0xff]
    %v228 = vld [vmem:[#allocation4 + $0x128] sm:$0xff]
    %v229 = vld [vmem:[#allocation4 + $0x130] sm:$0xff]
    %v230 = vld [vmem:[#allocation4 + $0x138] sm:$0xff]
    %v231 = vld [vmem:[#allocation4 + $0x140] sm:$0xff]
    %v232 = vld [vmem:[#allocation4 + $0x148] sm:$0xff]
    %v233 = vld [vmem:[#allocation4 + $0x150] sm:$0xff]
    %v234 = vld [vmem:[#allocation4 + $0x158] sm:$0xff]
    %v235 = vld [vmem:[#allocation4 + $0x160] sm:$0xff]
    %v236 = vld [vmem:[#allocation4 + $0x168] sm:$0xff]
    %v237 = vld [vmem:[#allocation4 + $0x170] sm:$0xff]
    %v238 = vld [vmem:[#allocation4 + $0x178] sm:$0xff]
    %v239 = vld [vmem:[#allocation4 + $0x180] sm:$0xff]
    %v240 = vld [vmem:[#allocation4 + $0x188] sm:$0xff]
    %v241 = vld [vmem:[#allocation4 + $0x190] sm:$0xff]
    %v242 = vld [vmem:[#allocation4 + $0x198] sm:$0xff]
    %v243 = vld [vmem:[#allocation4 + $0x1a0] sm:$0xff]
    %v244 = vld [vmem:[#allocation4 + $0x1a8] sm:$0xff]
    %v245 = vld [vmem:[#allocation4 + $0x1b0] sm:$0xff]
    %v246 = vld [vmem:[#allocation4 + $0x1b8] sm:$0xff]
    %v247 = vld [vmem:[#allocation4 + $0x1c0] sm:$0xff]
    %v248 = vld [vmem:[#allocation4 + $0x1c8] sm:$0xff]
    %v249 = vld [vmem:[#allocation4 + $0x1d0] sm:$0xff]
    %v250 = vld [vmem:[#allocation4 + $0x1d8] sm:$0xff]
    %v251 = vld [vmem:[#allocation4 + $0x1e0] sm:$0xff]
    %v252 = vld [vmem:[#allocation4 + $0x1e8] sm:$0xff]
    %v253 = vld [vmem:[#allocation4 + $0x1f0] sm:$0xff]
    %v254 = vld [vmem:[#allocation4 + $0x1f8] sm:$0xff]
    %v255 = vld [vmem:[#allocation2] sm:$0xff]
    %v256 = vld [vmem:[#allocation3] sm:$0xff]
    %v257 = vld [vmem:[%s0] sm:$0xff]
    %v258 = vld [vmem:[%s0 + $0x8] sm:$0xff]
    %v259 = vld [vmem:[%s0 + $0x10] sm:$0xff]
    %v260 = vld [vmem:[%s0 + $0x18] sm:$0xff]
    %261 = vmatprep.subr.mxu0 %v192
    %262 = vmatpush1.msra.mxu0 %v191
    %263 = vmatprep.subr.mxu0 %v196
    %264 = vmatpush1.msra.mxu0 %v195
    %265 = vmatprep.subr.mxu0 %v200
    %266 = vmatpush1.msra.mxu0 %v199
    %267 = vmatprep.subr.mxu0 %v204
    %268 = vmatpush1.msra.mxu0 %v203
    %269 = vmatprep.subr.mxu0 %v208
    %270 = vmatpush1.msra.mxu0 %v207
    %271 = vmatprep.subr.mxu0 %v212
    %272 = vmatpush1.msra.mxu0 %v211
    %273 = vmatprep.subr.mxu0 %v216
    %274 = vmatpush1.msra.mxu0 %v215
    %275 = vmatprep.subr.mxu0 %v220
    %276 = vmatpush1.msra.mxu0 %v219
    %277 = vmatprep.subr.mxu0 %v224
    %278 = vmatpush1.msra.mxu0 %v223
    %279 = vmatprep.subr.mxu0 %v228
    %280 = vmatpush1.msra.mxu0 %v227
    %281 = vmatprep.subr.mxu0 %v232
    %282 = vmatpush1.msra.mxu0 %v231
    %283 = vmatprep.subr.mxu0 %v236
    %284 = vmatpush1.msra.mxu0 %v235
    %285 = vmatprep.subr.mxu0 %v240
    %286 = vmatpush1.msra.mxu0 %v239
    %287 = vmatprep.subr.mxu0 %v244
    %288 = vmatpush1.msra.mxu0 %v243
    %289 = vmatprep.subr.mxu0 %v248
    %290 = vmatpush1.msra.mxu0 %v247
    %291 = vmatprep.subr.mxu0 %v252
    %292 = vmatpush1.msra.mxu0 %v251
    %293 = vmatprep.subr.mxu0 0.0
    %294 = vmatpush1.msra.mxu0 0.0
    %295 = vmatprep.subr.mxu0 0.0
    %296 = vmatpush1.msra.mxu0 0.0
    %297 = vmatprep.subr.mxu0 0.0
    %298 = vmatpush1.msra.mxu0 0.0
    %299 = vmatprep.subr.mxu0 0.0
    %300 = vmatpush1.msra.mxu0 0.0
    %301 = vmatprep.subr.mxu0 0.0
    %302 = vmatpush1.msra.mxu0 0.0
    %303 = vmatprep.subr.mxu0 0.0
    %304 = vmatpush1.msra.mxu0 0.0
    %305 = vmatprep.subr.mxu0 0.0
    %306 = vmatpush1.msra.mxu0 0.0
    %307 = vmatprep.subr.mxu0 0.0
    %308 = vmatpush1.msra.mxu0 0.0
    %309 = vmatprep.subr.mxu0 0.0
    %310 = vmatpush1.msra.mxu0 0.0
    %311 = vmatprep.subr.mxu0 0.0
    %312 = vmatpush1.msra.mxu0 0.0
    %313 = vmatprep.subr.mxu0 0.0
    %314 = vmatpush1.msra.mxu0 0.0
    %315 = vmatprep.subr.mxu0 0.0
    %316 = vmatpush1.msra.mxu0 0.0
    %317 = vmatprep.subr.mxu0 0.0
    %318 = vmatpush1.msra.mxu0 0.0
    %319 = vmatprep.subr.mxu0 0.0
    %320 = vmatpush1.msra.mxu0 0.0
    %321 = vmatprep.subr.mxu0 0.0
    %322 = vmatpush1.msra.mxu0 0.0
    %323 = vmatprep.subr.mxu0 0.0
    %324 = vmatpush1.msra.mxu0 0.0
    %325 = vmatprep.mubr.f32.mxu0 0.0
    %326 = vmatmul.mubr.f32.gmra.mrb[0].mxu0 %v255
    %v327 = vpop.f32.mrb[0].mxu0
    %v328 = vadd.f32 0.0, %v327
    %v329 = vpop.f32.mrb[0].mxu0
    %v330 = vadd.f32 0.0, %v329
    %331 = vdwg.mxu0
    %332 = vmatprep.subr.mxu0 %v194
    %333 = vmatpush1.msra.mxu0 %v193
    %334 = vmatprep.subr.mxu0 %v198
    %335 = vmatpush1.msra.mxu0 %v197
    %336 = vmatprep.subr.mxu0 %v202
    %337 = vmatpush1.msra.mxu0 %v201
    %338 = vmatprep.subr.mxu0 %v206
    %339 = vmatpush1.msra.mxu0 %v205
    %340 = vmatprep.subr.mxu0 %v210
    %341 = vmatpush1.msra.mxu0 %v209
    %342 = vmatprep.subr.mxu0 %v214
    %343 = vmatpush1.msra.mxu0 %v213
    %344 = vmatprep.subr.mxu0 %v218
    %345 = vmatpush1.msra.mxu0 %v217
    %346 = vmatprep.subr.mxu0 %v222
    %347 = vmatpush1.msra.mxu0 %v221
    %348 = vmatprep.subr.mxu0 %v226
    %349 = vmatpush1.msra.mxu0 %v225
    %350 = vmatprep.subr.mxu0 %v230
    %351 = vmatpush1.msra.mxu0 %v229
    %352 = vmatprep.subr.mxu0 %v234
    %353 = vmatpush1.msra.mxu0 %v233
    %354 = vmatprep.subr.mxu0 %v238
    %355 = vmatpush1.msra.mxu0 %v237
    %356 = vmatprep.subr.mxu0 %v242
    %357 = vmatpush1.msra.mxu0 %v241
    %358 = vmatprep.subr.mxu0 %v246
    %359 = vmatpush1.msra.mxu0 %v245
    %360 = vmatprep.subr.mxu0 %v250
    %361 = vmatpush1.msra.mxu0 %v249
    %362 = vmatprep.subr.mxu0 %v254
    %363 = vmatpush1.msra.mxu0 %v253
    %364 = vmatprep.subr.mxu0 0.0
    %365 = vmatpush1.msra.mxu0 0.0
    %366 = vmatprep.subr.mxu0 0.0
    %367 = vmatpush1.msra.mxu0 0.0
    %368 = vmatprep.subr.mxu0 0.0
    %369 = vmatpush1.msra.mxu0 0.0
    %370 = vmatprep.subr.mxu0 0.0
    %371 = vmatpush1.msra.mxu0 0.0
    %372 = vmatprep.subr.mxu0 0.0
    %373 = vmatpush1.msra.mxu0 0.0
    %374 = vmatprep.subr.mxu0 0.0
    %375 = vmatpush1.msra.mxu0 0.0
    %376 = vmatprep.subr.mxu0 0.0
    %377 = vmatpush1.msra.mxu0 0.0
    %378 = vmatprep.subr.mxu0 0.0
    %379 = vmatpush1.msra.mxu0 0.0
    %380 = vmatprep.subr.mxu0 0.0
    %381 = vmatpush1.msra.mxu0 0.0
    %382 = vmatprep.subr.mxu0 0.0
    %383 = vmatpush1.msra.mxu0 0.0
    %384 = vmatprep.subr.mxu0 0.0
    %385 = vmatpush1.msra.mxu0 0.0
    %386 = vmatprep.subr.mxu0 0.0
    %387 = vmatpush1.msra.mxu0 0.0
    %388 = vmatprep.subr.mxu0 0.0
    %389 = vmatpush1.msra.mxu0 0.0
    %390 = vmatprep.subr.mxu0 0.0
    %391 = vmatpush1.msra.mxu0 0.0
    %392 = vmatprep.subr.mxu0 0.0
    %393 = vmatpush1.msra.mxu0 0.0
    %394 = vmatprep.subr.mxu0 0.0
    %395 = vmatpush1.msra.mxu0 0.0
    %396 = vmatprep.mubr.f32.mxu0 0.0
    %397 = vmatmul.mubr.f32.gmra.mrb[0].mxu0 %v255
    %v398 = vpop.f32.mrb[0].mxu0
    %v399 = vadd.f32 0.0, %v398
    %v400 = vpop.f32.mrb[0].mxu0
    %v401 = vadd.f32 0.0, %v400
    %402 = vdwg.mxu0
    %v403 = vadd.f32 %v257, %v328
    %v404 = vadd.f32 %v258, %v330
    %v405 = vadd.f32 %v259, %v399
    %v406 = vadd.f32 %v260, %v401
    %v407 = vxor.u32 %v403, 2147483648
    %v408 = vmul.f32 %v407, 1.442695
    %v409 = vpow.pop %v408
    %v410 = vadd.f32 %v409, 1.0
    %v411 = vrcp.pop %v410
    %v412 = vmul.f32 1.0, %v411
    %v413 = vxor.u32 %v404, 2147483648
    %v414 = vmul.f32 %v413, 1.442695
    %v415 = vpow.pop %v414
    %v416 = vadd.f32 %v415, 1.0
    %v417 = vrcp.pop %v416
    %v418 = vmul.f32 1.0, %v417
    %v419 = vtanh.pop %v405
    %v420 = vxor.u32 %v406, 2147483648
    %v421 = vmul.f32 %v420, 1.442695
    %v422 = vpow.pop %v421
    %v423 = vadd.f32 %v422, 1.0
    %v424 = vrcp.pop %v423
    %v425 = vmul.f32 1.0, %v424
    %v426 = vmul.f32 %v418, %v256
    %v427 = vmul.f32 %v412, %v419
    %v428 = vadd.f32 %v426, %v427
    %v429 = vtanh.pop %v428
    %v430 = vmul.f32 %v425, %v429
    %431 = vst [vmem:[#allocation2] sm:$0xff] %v430
    %432 = vst [vmem:[#allocation3] sm:$0xff] %v428
    %433 = vst [vmem:[#allocation6] sm:$0xff] %v430
    %v434 = vld [vmem:[#allocation2] sm:$0xff]
    %v435 = vld [vmem:[#allocation3] sm:$0xff]
    %s436 = scalar_lea.vmem %s0, 32
    %v437 = vld [vmem:[%s436] sm:$0xff]
    %v438 = vld [vmem:[%s436 + $0x8] sm:$0xff]
    %v439 = vld [vmem:[%s436 + $0x10] sm:$0xff]
    %v440 = vld [vmem:[%s436 + $0x18] sm:$0xff]
    %441 = vmatprep.subr.mxu0 %v192
    %442 = vmatpush1.msra.mxu0 %v191
    %443 = vmatprep.subr.mxu0 %v196
    %444 = vmatpush1.msra.mxu0 %v195
    %445 = vmatprep.subr.mxu0 %v200
    %446 = vmatpush1.msra.mxu0 %v199
    %447 = vmatprep.subr.mxu0 %v204
    %448 = vmatpush1.msra.mxu0 %v203
    %449 = vmatprep.subr.mxu0 %v208
    %450 = vmatpush1.msra.mxu0 %v207
    %451 = vmatprep.subr.mxu0 %v212
    %452 = vmatpush1.msra.mxu0 %v211
    %453 = vmatprep.subr.mxu0 %v216
    %454 = vmatpush1.msra.mxu0 %v215
    %455 = vmatprep.subr.mxu0 %v220
    %456 = vmatpush1.msra.mxu0 %v219
    %457 = vmatprep.subr.mxu0 %v224
    %458 = vmatpush1.msra.mxu0 %v223
    %459 = vmatprep.subr.mxu0 %v228
    %460 = vmatpush1.msra.mxu0 %v227
    %461 = vmatprep.subr.mxu0 %v232
    %462 = vmatpush1.msra.mxu0 %v231
    %463 = vmatprep.subr.mxu0 %v236
    %464 = vmatpush1.msra.mxu0 %v235
    %465 = vmatprep.subr.mxu0 %v240
    %466 = vmatpush1.msra.mxu0 %v239
    %467 = vmatprep.subr.mxu0 %v244
    %468 = vmatpush1.msra.mxu0 %v243
    %469 = vmatprep.subr.mxu0 %v248
    %470 = vmatpush1.msra.mxu0 %v247
    %471 = vmatprep.subr.mxu0 %v252
    %472 = vmatpush1.msra.mxu0 %v251
    %473 = vmatprep.subr.mxu0 0.0
    %474 = vmatpush1.msra.mxu0 0.0
    %475 = vmatprep.subr.mxu0 0.0
    %476 = vmatpush1.msra.mxu0 0.0
    %477 = vmatprep.subr.mxu0 0.0
    %478 = vmatpush1.msra.mxu0 0.0
    %479 = vmatprep.subr.mxu0 0.0
    %480 = vmatpush1.msra.mxu0 0.0
    %481 = vmatprep.subr.mxu0 0.0
    %482 = vmatpush1.msra.mxu0 0.0
    %483 = vmatprep.subr.mxu0 0.0
    %484 = vmatpush1.msra.mxu0 0.0
    %485 = vmatprep.subr.mxu0 0.0
    %486 = vmatpush1.msra.mxu0 0.0
    %487 = vmatprep.subr.mxu0 0.0
    %488 = vmatpush1.msra.mxu0 0.0
    %489 = vmatprep.subr.mxu0 0.0
    %490 = vmatpush1.msra.mxu0 0.0
    %491 = vmatprep.subr.mxu0 0.0
    %492 = vmatpush1.msra.mxu0 0.0
    %493 = vmatprep.subr.mxu0 0.0
    %494 = vmatpush1.msra.mxu0 0.0
    %495 = vmatprep.subr.mxu0 0.0
    %496 = vmatpush1.msra.mxu0 0.0
    %497 = vmatprep.subr.mxu0 0.0
    %498 = vmatpush1.msra.mxu0 0.0
    %499 = vmatprep.subr.mxu0 0.0
    %500 = vmatpush1.msra.mxu0 0.0
    %501 = vmatprep.subr.mxu0 0.0
    %502 = vmatpush1.msra.mxu0 0.0
    %503 = vmatprep.subr.mxu0 0.0
    %504 = vmatpush1.msra.mxu0 0.0
    %505 = vmatprep.mubr.f32.mxu0 0.0
    %506 = vmatmul.mubr.f32.gmra.mrb[0].mxu0 %v434
    %v507 = vpop.f32.mrb[0].mxu0
    %v508 = vadd.f32 0.0, %v507
    %v509 = vpop.f32.mrb[0].mxu0
    %v510 = vadd.f32 0.0, %v509
    %511 = vdwg.mxu0
    %512 = vmatprep.subr.mxu0 %v194
    %513 = vmatpush1.msra.mxu0 %v193
    %514 = vmatprep.subr.mxu0 %v198
    %515 = vmatpush1.msra.mxu0 %v197
    %516 = vmatprep.subr.mxu0 %v202
    %517 = vmatpush1.msra.mxu0 %v201
    %518 = vmatprep.subr.mxu0 %v206
    %519 = vmatpush1.msra.mxu0 %v205
    %520 = vmatprep.subr.mxu0 %v210
    %521 = vmatpush1.msra.mxu0 %v209
    %522 = vmatprep.subr.mxu0 %v214
    %523 = vmatpush1.msra.mxu0 %v213
    %524 = vmatprep.subr.mxu0 %v218
    %525 = vmatpush1.msra.mxu0 %v217
    %526 = vmatprep.subr.mxu0 %v222
    %527 = vmatpush1.msra.mxu0 %v221
    %528 = vmatprep.subr.mxu0 %v226
    %529 = vmatpush1.msra.mxu0 %v225
    %530 = vmatprep.subr.mxu0 %v230
    %531 = vmatpush1.msra.mxu0 %v229
    %532 = vmatprep.subr.mxu0 %v234
    %533 = vmatpush1.msra.mxu0 %v233
    %534 = vmatprep.subr.mxu0 %v238
    %535 = vmatpush1.msra.mxu0 %v237
    %536 = vmatprep.subr.mxu0 %v242
    %537 = vmatpush1.msra.mxu0 %v241
    %538 = vmatprep.subr.mxu0 %v246
    %539 = vmatpush1.msra.mxu0 %v245
    %540 = vmatprep.subr.mxu0 %v250
    %541 = vmatpush1.msra.mxu0 %v249
    %542 = vmatprep.subr.mxu0 %v254
    %543 = vmatpush1.msra.mxu0 %v253
    %544 = vmatprep.subr.mxu0 0.0
    %545 = vmatpush1.msra.mxu0 0.0
    %546 = vmatprep.subr.mxu0 0.0
    %547 = vmatpush1.msra.mxu0 0.0
    %548 = vmatprep.subr.mxu0 0.0
    %549 = vmatpush1.msra.mxu0 0.0
    %550 = vmatprep.subr.mxu0 0.0
    %551 = vmatpush1.msra.mxu0 0.0
    %552 = vmatprep.subr.mxu0 0.0
    %553 = vmatpush1.msra.mxu0 0.0
    %554 = vmatprep.subr.mxu0 0.0
    %555 = vmatpush1.msra.mxu0 0.0
    %556 = vmatprep.subr.mxu0 0.0
    %557 = vmatpush1.msra.mxu0 0.0
    %558 = vmatprep.subr.mxu0 0.0
    %559 = vmatpush1.msra.mxu0 0.0
    %560 = vmatprep.subr.mxu0 0.0
    %561 = vmatpush1.msra.mxu0 0.0
    %562 = vmatprep.subr.mxu0 0.0
    %563 = vmatpush1.msra.mxu0 0.0
    %564 = vmatprep.subr.mxu0 0.0
    %565 = vmatpush1.msra.mxu0 0.0
    %566 = vmatprep.subr.mxu0 0.0
    %567 = vmatpush1.msra.mxu0 0.0
    %568 = vmatprep.subr.mxu0 0.0
    %569 = vmatpush1.msra.mxu0 0.0
    %570 = vmatprep.subr.mxu0 0.0
    %571 = vmatpush1.msra.mxu0 0.0
    %572 = vmatprep.subr.mxu0 0.0
    %573 = vmatpush1.msra.mxu0 0.0
    %574 = vmatprep.subr.mxu0 0.0
    %575 = vmatpush1.msra.mxu0 0.0
    %576 = vmatprep.mubr.f32.mxu0 0.0
    %577 = vmatmul.mubr.f32.gmra.mrb[0].mxu0 %v434
    %v578 = vpop.f32.mrb[0].mxu0
    %v579 = vadd.f32 0.0, %v578
    %v580 = vpop.f32.mrb[0].mxu0
    %v581 = vadd.f32 0.0, %v580
    %582 = vdwg.mxu0
    %v583 = vadd.f32 %v437, %v508
    %v584 = vadd.f32 %v438, %v510
    %v585 = vadd.f32 %v439, %v579
    %v586 = vadd.f32 %v440, %v581
    %v587 = vxor.u32 %v583, 2147483648
    %v588 = vmul.f32 %v587, 1.442695
    %v589 = vpow.pop %v588
    %v590 = vadd.f32 %v589, 1.0
    %v591 = vrcp.pop %v590
    %v592 = vmul.f32 1.0, %v591
    %v593 = vxor.u32 %v584, 2147483648
    %v594 = vmul.f32 %v593, 1.442695
    %v595 = vpow.pop %v594
    %v596 = vadd.f32 %v595, 1.0
    %v597 = vrcp.pop %v596
    %v598 = vmul.f32 1.0, %v597
    %v599 = vtanh.pop %v585
    %v600 = vxor.u32 %v586, 2147483648
    %v601 = vmul.f32 %v600, 1.442695
    %v602 = vpow.pop %v601
    %v603 = vadd.f32 %v602, 1.0
    %v604 = vrcp.pop %v603
    %v605 = vmul.f32 1.0, %v604
    %v606 = vmul.f32 %v598, %v435
    %v607 = vmul.f32 %v592, %v599
    %v608 = vadd.f32 %v606, %v607
    %v609 = vtanh.pop %v608
    %v610 = vmul.f32 %v605, %v609
    %611 = vst [vmem:[#allocation2] sm:$0xff] %v610
    %612 = vst [vmem:[#allocation3] sm:$0xff] %v608
    %s613 = scalar_lea.vmem [#allocation6], 8
    %614 = vst [vmem:[%s613] sm:$0xff] %v610
    %v615 = vld [vmem:[#allocation2] sm:$0xff]
    %v616 = vld [vmem:[#allocation3] sm:$0xff]
    %s617 = scalar_lea.vmem %s0, 64
    %v618 = vld [vmem:[%s617] sm:$0xff]
    %v619 = vld [vmem:[%s617 + $0x8] sm:$0xff]
    %v620 = vld [vmem:[%s617 + $0x10] sm:$0xff]
    %v621 = vld [vmem:[%s617 + $0x18] sm:$0xff]
    %622 = vmatprep.subr.mxu0 %v192
    %623 = vmatpush1.msra.mxu0 %v191
    %624 = vmatprep.subr.mxu0 %v196
    %625 = vmatpush1.msra.mxu0 %v195
    %626 = vmatprep.subr.mxu0 %v200
    %627 = vmatpush1.msra.mxu0 %v199
    %628 = vmatprep.subr.mxu0 %v204
    %629 = vmatpush1.msra.mxu0 %v203
    %630 = vmatprep.subr.mxu0 %v208
    %631 = vmatpush1.msra.mxu0 %v207
    %632 = vmatprep.subr.mxu0 %v212
    %633 = vmatpush1.msra.mxu0 %v211
    %634 = vmatprep.subr.mxu0 %v216
    %635 = vmatpush1.msra.mxu0 %v215
    %636 = vmatprep.subr.mxu0 %v220
    %637 = vmatpush1.msra.mxu0 %v219
    %638 = vmatprep.subr.mxu0 %v224
    %639 = vmatpush1.msra.mxu0 %v223
    %640 = vmatprep.subr.mxu0 %v228
    %641 = vmatpush1.msra.mxu0 %v227
    %642 = vmatprep.subr.mxu0 %v232
    %643 = vmatpush1.msra.mxu0 %v231
    %644 = vmatprep.subr.mxu0 %v236
    %645 = vmatpush1.msra.mxu0 %v235
    %646 = vmatprep.subr.mxu0 %v240
    %647 = vmatpush1.msra.mxu0 %v239
    %648 = vmatprep.subr.mxu0 %v244
    %649 = vmatpush1.msra.mxu0 %v243
    %650 = vmatprep.subr.mxu0 %v248
    %651 = vmatpush1.msra.mxu0 %v247
    %652 = vmatprep.subr.mxu0 %v252
    %653 = vmatpush1.msra.mxu0 %v251
    %654 = vmatprep.subr.mxu0 0.0
    %655 = vmatpush1.msra.mxu0 0.0
    %656 = vmatprep.subr.mxu0 0.0
    %657 = vmatpush1.msra.mxu0 0.0
    %658 = vmatprep.subr.mxu0 0.0
    %659 = vmatpush1.msra.mxu0 0.0
    %660 = vmatprep.subr.mxu0 0.0
    %661 = vmatpush1.msra.mxu0 0.0
    %662 = vmatprep.subr.mxu0 0.0
    %663 = vmatpush1.msra.mxu0 0.0
    %664 = vmatprep.subr.mxu0 0.0
    %665 = vmatpush1.msra.mxu0 0.0
    %666 = vmatprep.subr.mxu0 0.0
    %667 = vmatpush1.msra.mxu0 0.0
    %668 = vmatprep.subr.mxu0 0.0
    %669 = vmatpush1.msra.mxu0 0.0
    %670 = vmatprep.subr.mxu0 0.0
    %671 = vmatpush1.msra.mxu0 0.0
    %672 = vmatprep.subr.mxu0 0.0
    %673 = vmatpush1.msra.mxu0 0.0
    %674 = vmatprep.subr.mxu0 0.0
    %675 = vmatpush1.msra.mxu0 0.0
    %676 = vmatprep.subr.mxu0 0.0
    %677 = vmatpush1.msra.mxu0 0.0
    %678 = vmatprep.subr.mxu0 0.0
    %679 = vmatpush1.msra.mxu0 0.0
    %680 = vmatprep.subr.mxu0 0.0
    %681 = vmatpush1.msra.mxu0 0.0
    %682 = vmatprep.subr.mxu0 0.0
    %683 = vmatpush1.msra.mxu0 0.0
    %684 = vmatprep.subr.mxu0 0.0
    %685 = vmatpush1.msra.mxu0 0.0
    %686 = vmatprep.mubr.f32.mxu0 0.0
    %687 = vmatmul.mubr.f32.gmra.mrb[0].mxu0 %v615
    %v688 = vpop.f32.mrb[0].mxu0
    %v689 = vadd.f32 0.0, %v688
    %v690 = vpop.f32.mrb[0].mxu0
    %v691 = vadd.f32 0.0, %v690
    %692 = vdwg.mxu0
    %693 = vmatprep.subr.mxu0 %v194
    %694 = vmatpush1.msra.mxu0 %v193
    %695 = vmatprep.subr.mxu0 %v198
    %696 = vmatpush1.msra.mxu0 %v197
    %697 = vmatprep.subr.mxu0 %v202
    %698 = vmatpush1.msra.mxu0 %v201
    %699 = vmatprep.subr.mxu0 %v206
    %700 = vmatpush1.msra.mxu0 %v205
    %701 = vmatprep.subr.mxu0 %v210
    %702 = vmatpush1.msra.mxu0 %v209
    %703 = vmatprep.subr.mxu0 %v214
    %704 = vmatpush1.msra.mxu0 %v213
    %705 = vmatprep.subr.mxu0 %v218
    %706 = vmatpush1.msra.mxu0 %v217
    %707 = vmatprep.subr.mxu0 %v222
    %708 = vmatpush1.msra.mxu0 %v221
    %709 = vmatprep.subr.mxu0 %v226
    %710 = vmatpush1.msra.mxu0 %v225
    %711 = vmatprep.subr.mxu0 %v230
    %712 = vmatpush1.msra.mxu0 %v229
    %713 = vmatprep.subr.mxu0 %v234
    %714 = vmatpush1.msra.mxu0 %v233
    %715 = vmatprep.subr.mxu0 %v238
    %716 = vmatpush1.msra.mxu0 %v237
    %717 = vmatprep.subr.mxu0 %v242
    %718 = vmatpush1.msra.mxu0 %v241
    %719 = vmatprep.subr.mxu0 %v246
    %720 = vmatpush1.msra.mxu0 %v245
    %721 = vmatprep.subr.mxu0 %v250
    %722 = vmatpush1.msra.mxu0 %v249
    %723 = vmatprep.subr.mxu0 %v254
    %724 = vmatpush1.msra.mxu0 %v253
    %725 = vmatprep.subr.mxu0 0.0
    %726 = vmatpush1.msra.mxu0 0.0
    %727 = vmatprep.subr.mxu0 0.0
    %728 = vmatpush1.msra.mxu0 0.0
    %729 = vmatprep.subr.mxu0 0.0
    %730 = vmatpush1.msra.mxu0 0.0
    %731 = vmatprep.subr.mxu0 0.0
    %732 = vmatpush1.msra.mxu0 0.0
    %733 = vmatprep.subr.mxu0 0.0
    %734 = vmatpush1.msra.mxu0 0.0
    %735 = vmatprep.subr.mxu0 0.0
    %736 = vmatpush1.msra.mxu0 0.0
    %737 = vmatprep.subr.mxu0 0.0
    %738 = vmatpush1.msra.mxu0 0.0
    %739 = vmatprep.subr.mxu0 0.0
    %740 = vmatpush1.msra.mxu0 0.0
    %741 = vmatprep.subr.mxu0 0.0
    %742 = vmatpush1.msra.mxu0 0.0
    %743 = vmatprep.subr.mxu0 0.0
    %744 = vmatpush1.msra.mxu0 0.0
    %745 = vmatprep.subr.mxu0 0.0
    %746 = vmatpush1.msra.mxu0 0.0
    %747 = vmatprep.subr.mxu0 0.0
    %748 = vmatpush1.msra.mxu0 0.0
    %749 = vmatprep.subr.mxu0 0.0
    %750 = vmatpush1.msra.mxu0 0.0
    %751 = vmatprep.subr.mxu0 0.0
    %752 = vmatpush1.msra.mxu0 0.0
    %753 = vmatprep.subr.mxu0 0.0
    %754 = vmatpush1.msra.mxu0 0.0
    %755 = vmatprep.subr.mxu0 0.0
    %756 = vmatpush1.msra.mxu0 0.0
    %757 = vmatprep.mubr.f32.mxu0 0.0
    %758 = vmatmul.mubr.f32.gmra.mrb[0].mxu0 %v615
    %v759 = vpop.f32.mrb[0].mxu0
    %v760 = vadd.f32 0.0, %v759
    %v761 = vpop.f32.mrb[0].mxu0
    %v762 = vadd.f32 0.0, %v761
    %763 = vdwg.mxu0
    %v764 = vadd.f32 %v618, %v689
    %v765 = vadd.f32 %v619, %v691
    %v766 = vadd.f32 %v620, %v760
    %v767 = vadd.f32 %v621, %v762
    %v768 = vxor.u32 %v764, 2147483648
    %v769 = vmul.f32 %v768, 1.442695
    %v770 = vpow.pop %v769
    %v771 = vadd.f32 %v770, 1.0
    %v772 = vrcp.pop %v771
    %v773 = vmul.f32 1.0, %v772
    %v774 = vxor.u32 %v765, 2147483648
    %v775 = vmul.f32 %v774, 1.442695
    %v776 = vpow.pop %v775
    %v777 = vadd.f32 %v776, 1.0
    %v778 = vrcp.pop %v777
    %v779 = vmul.f32 1.0, %v778
    %v780 = vtanh.pop %v766
    %v781 = vxor.u32 %v767, 2147483648
    %v782 = vmul.f32 %v781, 1.442695
    %v783 = vpow.pop %v782
    %v784 = vadd.f32 %v783, 1.0
    %v785 = vrcp.pop %v784
    %v786 = vmul.f32 1.0, %v785
    %v787 = vmul.f32 %v779, %v616
    %v788 = vmul.f32 %v773, %v780
    %v789 = vadd.f32 %v787, %v788
    %v790 = vtanh.pop %v789
    %v791 = vmul.f32 %v786, %v790
    %792 = vst [vmem:[#allocation2] sm:$0xff] %v791
    %793 = vst [vmem:[#allocation3] sm:$0xff] %v789
    %s794 = scalar_lea.vmem [#allocation6], 16
    %795 = vst [vmem:[%s794] sm:$0xff] %v791
    %v796 = vld [vmem:[#allocation2] sm:$0xff]
    %v797 = vld [vmem:[#allocation3] sm:$0xff]
    %s798 = scalar_lea.vmem %s0, 96
    %v799 = vld [vmem:[%s798] sm:$0xff]
    %v800 = vld [vmem:[%s798 + $0x8] sm:$0xff]
    %v801 = vld [vmem:[%s798 + $0x10] sm:$0xff]
    %v802 = vld [vmem:[%s798 + $0x18] sm:$0xff]
    %803 = vmatprep.subr.mxu0 %v192
    %804 = vmatpush1.msra.mxu0 %v191
    %805 = vmatprep.subr.mxu0 %v196
    %806 = vmatpush1.msra.mxu0 %v195
    %807 = vmatprep.subr.mxu0 %v200
    %808 = vmatpush1.msra.mxu0 %v199
    %809 = vmatprep.subr.mxu0 %v204
    %810 = vmatpush1.msra.mxu0 %v203
    %811 = vmatprep.subr.mxu0 %v208
    %812 = vmatpush1.msra.mxu0 %v207
    %813 = vmatprep.subr.mxu0 %v212
    %814 = vmatpush1.msra.mxu0 %v211
    %815 = vmatprep.subr.mxu0 %v216
    %816 = vmatpush1.msra.mxu0 %v215
    %817 = vmatprep.subr.mxu0 %v220
    %818 = vmatpush1.msra.mxu0 %v219
    %819 = vmatprep.subr.mxu0 %v224
    %820 = vmatpush1.msra.mxu0 %v223
    %821 = vmatprep.subr.mxu0 %v228
    %822 = vmatpush1.msra.mxu0 %v227
    %823 = vmatprep.subr.mxu0 %v232
    %824 = vmatpush1.msra.mxu0 %v231
    %825 = vmatprep.subr.mxu0 %v236
    %826 = vmatpush1.msra.mxu0 %v235
    %827 = vmatprep.subr.mxu0 %v240
    %828 = vmatpush1.msra.mxu0 %v239
    %829 = vmatprep.subr.mxu0 %v244
    %830 = vmatpush1.msra.mxu0 %v243
    %831 = vmatprep.subr.mxu0 %v248
    %832 = vmatpush1.msra.mxu0 %v247
    %833 = vmatprep.subr.mxu0 %v252
    %834 = vmatpush1.msra.mxu0 %v251
    %835 = vmatprep.subr.mxu0 0.0
    %836 = vmatpush1.msra.mxu0 0.0
    %837 = vmatprep.subr.mxu0 0.0
    %838 = vmatpush1.msra.mxu0 0.0
    %839 = vmatprep.subr.mxu0 0.0
    %840 = vmatpush1.msra.mxu0 0.0
    %841 = vmatprep.subr.mxu0 0.0
    %842 = vmatpush1.msra.mxu0 0.0
    %843 = vmatprep.subr.mxu0 0.0
    %844 = vmatpush1.msra.mxu0 0.0
    %845 = vmatprep.subr.mxu0 0.0
    %846 = vmatpush1.msra.mxu0 0.0
    %847 = vmatprep.subr.mxu0 0.0
    %848 = vmatpush1.msra.mxu0 0.0
    %849 = vmatprep.subr.mxu0 0.0
    %850 = vmatpush1.msra.mxu0 0.0
    %851 = vmatprep.subr.mxu0 0.0
    %852 = vmatpush1.msra.mxu0 0.0
    %853 = vmatprep.subr.mxu0 0.0
    %854 = vmatpush1.msra.mxu0 0.0
    %855 = vmatprep.subr.mxu0 0.0
    %856 = vmatpush1.msra.mxu0 0.0
    %857 = vmatprep.subr.mxu0 0.0
    %858 = vmatpush1.msra.mxu0 0.0
    %859 = vmatprep.subr.mxu0 0.0
    %860 = vmatpush1.msra.mxu0 0.0
    %861 = vmatprep.subr.mxu0 0.0
    %862 = vmatpush1.msra.mxu0 0.0
    %863 = vmatprep.subr.mxu0 0.0
    %864 = vmatpush1.msra.mxu0 0.0
    %865 = vmatprep.subr.mxu0 0.0
    %866 = vmatpush1.msra.mxu0 0.0
    %867 = vmatprep.mubr.f32.mxu0 0.0
    %868 = vmatmul.mubr.f32.gmra.mrb[0].mxu0 %v796
    %v869 = vpop.f32.mrb[0].mxu0
    %v870 = vadd.f32 0.0, %v869
    %v871 = vpop.f32.mrb[0].mxu0
    %v872 = vadd.f32 0.0, %v871
    %873 = vdwg.mxu0
    %874 = vmatprep.subr.mxu0 %v194
    %875 = vmatpush1.msra.mxu0 %v193
    %876 = vmatprep.subr.mxu0 %v198
    %877 = vmatpush1.msra.mxu0 %v197
    %878 = vmatprep.subr.mxu0 %v202
    %879 = vmatpush1.msra.mxu0 %v201
    %880 = vmatprep.subr.mxu0 %v206
    %881 = vmatpush1.msra.mxu0 %v205
    %882 = vmatprep.subr.mxu0 %v210
    %883 = vmatpush1.msra.mxu0 %v209
    %884 = vmatprep.subr.mxu0 %v214
    %885 = vmatpush1.msra.mxu0 %v213
    %886 = vmatprep.subr.mxu0 %v218
    %887 = vmatpush1.msra.mxu0 %v217
    %888 = vmatprep.subr.mxu0 %v222
    %889 = vmatpush1.msra.mxu0 %v221
    %890 = vmatprep.subr.mxu0 %v226
    %891 = vmatpush1.msra.mxu0 %v225
    %892 = vmatprep.subr.mxu0 %v230
    %893 = vmatpush1.msra.mxu0 %v229
    %894 = vmatprep.subr.mxu0 %v234
    %895 = vmatpush1.msra.mxu0 %v233
    %896 = vmatprep.subr.mxu0 %v238
    %897 = vmatpush1.msra.mxu0 %v237
    %898 = vmatprep.subr.mxu0 %v242
    %899 = vmatpush1.msra.mxu0 %v241
    %900 = vmatprep.subr.mxu0 %v246
    %901 = vmatpush1.msra.mxu0 %v245
    %902 = vmatprep.subr.mxu0 %v250
    %903 = vmatpush1.msra.mxu0 %v249
    %904 = vmatprep.subr.mxu0 %v254
    %905 = vmatpush1.msra.mxu0 %v253
    %906 = vmatprep.subr.mxu0 0.0
    %907 = vmatpush1.msra.mxu0 0.0
    %908 = vmatprep.subr.mxu0 0.0
    %909 = vmatpush1.msra.mxu0 0.0
    %910 = vmatprep.subr.mxu0 0.0
    %911 = vmatpush1.msra.mxu0 0.0
    %912 = vmatprep.subr.mxu0 0.0
    %913 = vmatpush1.msra.mxu0 0.0
    %914 = vmatprep.subr.mxu0 0.0
    %915 = vmatpush1.msra.mxu0 0.0
    %916 = vmatprep.subr.mxu0 0.0
    %917 = vmatpush1.msra.mxu0 0.0
    %918 = vmatprep.subr.mxu0 0.0
    %919 = vmatpush1.msra.mxu0 0.0
    %920 = vmatprep.subr.mxu0 0.0
    %921 = vmatpush1.msra.mxu0 0.0
    %922 = vmatprep.subr.mxu0 0.0
    %923 = vmatpush1.msra.mxu0 0.0
    %924 = vmatprep.subr.mxu0 0.0
    %925 = vmatpush1.msra.mxu0 0.0
    %926 = vmatprep.subr.mxu0 0.0
    %927 = vmatpush1.msra.mxu0 0.0
    %928 = vmatprep.subr.mxu0 0.0
    %929 = vmatpush1.msra.mxu0 0.0
    %930 = vmatprep.subr.mxu0 0.0
    %931 = vmatpush1.msra.mxu0 0.0
    %932 = vmatprep.subr.mxu0 0.0
    %933 = vmatpush1.msra.mxu0 0.0
    %934 = vmatprep.subr.mxu0 0.0
    %935 = vmatpush1.msra.mxu0 0.0
    %936 = vmatprep.subr.mxu0 0.0
    %937 = vmatpush1.msra.mxu0 0.0
    %938 = vmatprep.mubr.f32.mxu0 0.0
    %939 = vmatmul.mubr.f32.gmra.mrb[0].mxu0 %v796
    %v940 = vpop.f32.mrb[0].mxu0
    %v941 = vadd.f32 0.0, %v940
    %v942 = vpop.f32.mrb[0].mxu0
    %v943 = vadd.f32 0.0, %v942
    %944 = vdwg.mxu0
    %v945 = vadd.f32 %v799, %v870
    %v946 = vadd.f32 %v800, %v872
    %v947 = vadd.f32 %v801, %v941
    %v948 = vadd.f32 %v802, %v943
    %v949 = vxor.u32 %v945, 2147483648
    %v950 = vmul.f32 %v949, 1.442695
    %v951 = vpow.pop %v950
    %v952 = vadd.f32 %v951, 1.0
    %v953 = vrcp.pop %v952
    %v954 = vmul.f32 1.0, %v953
    %v955 = vxor.u32 %v946, 2147483648
    %v956 = vmul.f32 %v955, 1.442695
    %v957 = vpow.pop %v956
    %v958 = vadd.f32 %v957, 1.0
    %v959 = vrcp.pop %v958
    %v960 = vmul.f32 1.0, %v959
    %v961 = vtanh.pop %v947
    %v962 = vxor.u32 %v948, 2147483648
    %v963 = vmul.f32 %v962, 1.442695
    %v964 = vpow.pop %v963
    %v965 = vadd.f32 %v964, 1.0
    %v966 = vrcp.pop %v965
    %v967 = vmul.f32 1.0, %v966
    %v968 = vmul.f32 %v960, %v797
    %v969 = vmul.f32 %v954, %v961
    %v970 = vadd.f32 %v968, %v969
    %v971 = vtanh.pop %v970
    %v972 = vmul.f32 %v967, %v971
    %973 = vst [vmem:[#allocation2] sm:$0xff] %v972
    %974 = vst [vmem:[#allocation3] sm:$0xff] %v970
    %s975 = scalar_lea.vmem [#allocation6], 24
    %976 = vst [vmem:[%s975] sm:$0xff] %v972
    %v977 = vld [vmem:[#allocation2] sm:$0xff]
    %v978 = vld [vmem:[#allocation3] sm:$0xff]
    %s979 = scalar_lea.vmem %s0, 128
    %v980 = vld [vmem:[%s979] sm:$0xff]
    %v981 = vld [vmem:[%s979 + $0x8] sm:$0xff]
    %v982 = vld [vmem:[%s979 + $0x10] sm:$0xff]
    %v983 = vld [vmem:[%s979 + $0x18] sm:$0xff]
    %984 = vmatprep.subr.mxu0 %v192
    %985 = vmatpush1.msra.mxu0 %v191
    %986 = vmatprep.subr.mxu0 %v196
    %987 = vmatpush1.msra.mxu0 %v195
    %988 = vmatprep.subr.mxu0 %v200
    %989 = vmatpush1.msra.mxu0 %v199
    %990 = vmatprep.subr.mxu0 %v204
    %991 = vmatpush1.msra.mxu0 %v203
    %992 = vmatprep.subr.mxu0 %v208
    %993 = vmatpush1.msra.mxu0 %v207
    %994 = vmatprep.subr.mxu0 %v212
    %995 = vmatpush1.msra.mxu0 %v211
    %996 = vmatprep.subr.mxu0 %v216
    %997 = vmatpush1.msra.mxu0 %v215
    %998 = vmatprep.subr.mxu0 %v220
    %999 = vmatpush1.msra.mxu0 %v219
    %1000 = vmatprep.subr.mxu0 %v224
    %1001 = vmatpush1.msra.mxu0 %v223
    %1002 = vmatprep.subr.mxu0 %v228
    %1003 = vmatpush1.msra.mxu0 %v227
    %1004 = vmatprep.subr.mxu0 %v232
    %1005 = vmatpush1.msra.mxu0 %v231
    %1006 = vmatprep.subr.mxu0 %v236
    %1007 = vmatpush1.msra.mxu0 %v235
    %1008 = vmatprep.subr.mxu0 %v240
    %1009 = vmatpush1.msra.mxu0 %v239
    %1010 = vmatprep.subr.mxu0 %v244
    %1011 = vmatpush1.msra.mxu0 %v243
    %1012 = vmatprep.subr.mxu0 %v248
    %1013 = vmatpush1.msra.mxu0 %v247
    %1014 = vmatprep.subr.mxu0 %v252
    %1015 = vmatpush1.msra.mxu0 %v251
    %1016 = vmatprep.subr.mxu0 0.0
    %1017 = vmatpush1.msra.mxu0 0.0
    %1018 = vmatprep.subr.mxu0 0.0
    %1019 = vmatpush1.msra.mxu0 0.0
    %1020 = vmatprep.subr.mxu0 0.0
    %1021 = vmatpush1.msra.mxu0 0.0
    %1022 = vmatprep.subr.mxu0 0.0
    %1023 = vmatpush1.msra.mxu0 0.0
    %1024 = vmatprep.subr.mxu0 0.0
    %1025 = vmatpush1.msra.mxu0 0.0
    %1026 = vmatprep.subr.mxu0 0.0
    %1027 = vmatpush1.msra.mxu0 0.0
    %1028 = vmatprep.subr.mxu0 0.0
    %1029 = vmatpush1.msra.mxu0 0.0
    %1030 = vmatprep.subr.mxu0 0.0
    %1031 = vmatpush1.msra.mxu0 0.0
    %1032 = vmatprep.subr.mxu0 0.0
    %1033 = vmatpush1.msra.mxu0 0.0
    %1034 = vmatprep.subr.mxu0 0.0
    %1035 = vmatpush1.msra.mxu0 0.0
    %1036 = vmatprep.subr.mxu0 0.0
    %1037 = vmatpush1.msra.mxu0 0.0
    %1038 = vmatprep.subr.mxu0 0.0
    %1039 = vmatpush1.msra.mxu0 0.0
    %1040 = vmatprep.subr.mxu0 0.0
    %1041 = vmatpush1.msra.mxu0 0.0
    %1042 = vmatprep.subr.mxu0 0.0
    %1043 = vmatpush1.msra.mxu0 0.0
    %1044 = vmatprep.subr.mxu0 0.0
    %1045 = vmatpush1.msra.mxu0 0.0
    %1046 = vmatprep.subr.mxu0 0.0
    %1047 = vmatpush1.msra.mxu0 0.0
    %1048 = vmatprep.mubr.f32.mxu0 0.0
    %1049 = vmatmul.mubr.f32.gmra.mrb[0].mxu0 %v977
    %v1050 = vpop.f32.mrb[0].mxu0
    %v1051 = vadd.f32 0.0, %v1050
    %v1052 = vpop.f32.mrb[0].mxu0
    %v1053 = vadd.f32 0.0, %v1052
    %1054 = vdwg.mxu0
    %1055 = vmatprep.subr.mxu0 %v194
    %1056 = vmatpush1.msra.mxu0 %v193
    %1057 = vmatprep.subr.mxu0 %v198
    %1058 = vmatpush1.msra.mxu0 %v197
    %1059 = vmatprep.subr.mxu0 %v202
    %1060 = vmatpush1.msra.mxu0 %v201
    %1061 = vmatprep.subr.mxu0 %v206
    %1062 = vmatpush1.msra.mxu0 %v205
    %1063 = vmatprep.subr.mxu0 %v210
    %1064 = vmatpush1.msra.mxu0 %v209
    %1065 = vmatprep.subr.mxu0 %v214
    %1066 = vmatpush1.msra.mxu0 %v213
    %1067 = vmatprep.subr.mxu0 %v218
    %1068 = vmatpush1.msra.mxu0 %v217
    %1069 = vmatprep.subr.mxu0 %v222
    %1070 = vmatpush1.msra.mxu0 %v221
    %1071 = vmatprep.subr.mxu0 %v226
    %1072 = vmatpush1.msra.mxu0 %v225
    %1073 = vmatprep.subr.mxu0 %v230
    %1074 = vmatpush1.msra.mxu0 %v229
    %1075 = vmatprep.subr.mxu0 %v234
    %1076 = vmatpush1.msra.mxu0 %v233
    %1077 = vmatprep.subr.mxu0 %v238
    %1078 = vmatpush1.msra.mxu0 %v237
    %1079 = vmatprep.subr.mxu0 %v242
    %1080 = vmatpush1.msra.mxu0 %v241
    %1081 = vmatprep.subr.mxu0 %v246
    %1082 = vmatpush1.msra.mxu0 %v245
    %1083 = vmatprep.subr.mxu0 %v250
    %1084 = vmatpush1.msra.mxu0 %v249
    %1085 = vmatprep.subr.mxu0 %v254
    %1086 = vmatpush1.msra.mxu0 %v253
    %1087 = vmatprep.subr.mxu0 0.0
    %1088 = vmatpush1.msra.mxu0 0.0
    %1089 = vmatprep.subr.mxu0 0.0
    %1090 = vmatpush1.msra.mxu0 0.0
    %1091 = vmatprep.subr.mxu0 0.0
    %1092 = vmatpush1.msra.mxu0 0.0
    %1093 = vmatprep.subr.mxu0 0.0
    %1094 = vmatpush1.msra.mxu0 0.0
    %1095 = vmatprep.subr.mxu0 0.0
    %1096 = vmatpush1.msra.mxu0 0.0
    %1097 = vmatprep.subr.mxu0 0.0
    %1098 = vmatpush1.msra.mxu0 0.0
    %1099 = vmatprep.subr.mxu0 0.0
    %1100 = vmatpush1.msra.mxu0 0.0
    %1101 = vmatprep.subr.mxu0 0.0
    %1102 = vmatpush1.msra.mxu0 0.0
    %1103 = vmatprep.subr.mxu0 0.0
    %1104 = vmatpush1.msra.mxu0 0.0
    %1105 = vmatprep.subr.mxu0 0.0
    %1106 = vmatpush1.msra.mxu0 0.0
    %1107 = vmatprep.subr.mxu0 0.0
    %1108 = vmatpush1.msra.mxu0 0.0
    %1109 = vmatprep.subr.mxu0 0.0
    %1110 = vmatpush1.msra.mxu0 0.0
    %1111 = vmatprep.subr.mxu0 0.0
    %1112 = vmatpush1.msra.mxu0 0.0
    %1113 = vmatprep.subr.mxu0 0.0
    %1114 = vmatpush1.msra.mxu0 0.0
    %1115 = vmatprep.subr.mxu0 0.0
    %1116 = vmatpush1.msra.mxu0 0.0
    %1117 = vmatprep.subr.mxu0 0.0
    %1118 = vmatpush1.msra.mxu0 0.0
    %1119 = vmatprep.mubr.f32.mxu0 0.0
    %1120 = vmatmul.mubr.f32.gmra.mrb[0].mxu0 %v977
    %v1121 = vpop.f32.mrb[0].mxu0
    %v1122 = vadd.f32 0.0, %v1121
    %v1123 = vpop.f32.mrb[0].mxu0
    %v1124 = vadd.f32 0.0, %v1123
    %1125 = vdwg.mxu0
    %v1126 = vadd.f32 %v980, %v1051
    %v1127 = vadd.f32 %v981, %v1053
    %v1128 = vadd.f32 %v982, %v1122
    %v1129 = vadd.f32 %v983, %v1124
    %v1130 = vxor.u32 %v1126, 2147483648
    %v1131 = vmul.f32 %v1130, 1.442695
    %v1132 = vpow.pop %v1131
    %v1133 = vadd.f32 %v1132, 1.0
    %v1134 = vrcp.pop %v1133
    %v1135 = vmul.f32 1.0, %v1134
    %v1136 = vxor.u32 %v1127, 2147483648
    %v1137 = vmul.f32 %v1136, 1.442695
    %v1138 = vpow.pop %v1137
    %v1139 = vadd.f32 %v1138, 1.0
    %v1140 = vrcp.pop %v1139
    %v1141 = vmul.f32 1.0, %v1140
    %v1142 = vtanh.pop %v1128
    %v1143 = vxor.u32 %v1129, 2147483648
    %v1144 = vmul.f32 %v1143, 1.442695
    %v1145 = vpow.pop %v1144
    %v1146 = vadd.f32 %v1145, 1.0
    %v1147 = vrcp.pop %v1146
    %v1148 = vmul.f32 1.0, %v1147
    %v1149 = vmul.f32 %v1141, %v978
    %v1150 = vmul.f32 %v1135, %v1142
    %v1151 = vadd.f32 %v1149, %v1150
    %v1152 = vtanh.pop %v1151
    %v1153 = vmul.f32 %v1148, %v1152
    %1154 = vst [vmem:[#allocation2] sm:$0xff] %v1153
    %1155 = vst [vmem:[#allocation3] sm:$0xff] %v1151
    %s1156 = scalar_lea.vmem [#allocation6], 32
    %1157 = vst [vmem:[%s1156] sm:$0xff] %v1153
    %v1158 = vld [vmem:[#allocation2] sm:$0xff]
    %v1159 = vld [vmem:[#allocation3] sm:$0xff]
    %s1160 = scalar_lea.vmem %s0, 160
    %v1161 = vld [vmem:[%s1160] sm:$0xff]
    %v1162 = vld [vmem:[%s1160 + $0x8] sm:$0xff]
    %v1163 = vld [vmem:[%s1160 + $0x10] sm:$0xff]
    %v1164 = vld [vmem:[%s1160 + $0x18] sm:$0xff]
    %1165 = vmatprep.subr.mxu0 %v192
    %1166 = vmatpush1.msra.mxu0 %v191
    %1167 = vmatprep.subr.mxu0 %v196
    %1168 = vmatpush1.msra.mxu0 %v195
    %1169 = vmatprep.subr.mxu0 %v200
    %1170 = vmatpush1.msra.mxu0 %v199
    %1171 = vmatprep.subr.mxu0 %v204
    %1172 = vmatpush1.msra.mxu0 %v203
    %1173 = vmatprep.subr.mxu0 %v208
    %1174 = vmatpush1.msra.mxu0 %v207
    %1175 = vmatprep.subr.mxu0 %v212
    %1176 = vmatpush1.msra.mxu0 %v211
    %1177 = vmatprep.subr.mxu0 %v216
    %1178 = vmatpush1.msra.mxu0 %v215
    %1179 = vmatprep.subr.mxu0 %v220
    %1180 = vmatpush1.msra.mxu0 %v219
    %1181 = vmatprep.subr.mxu0 %v224
    %1182 = vmatpush1.msra.mxu0 %v223
    %1183 = vmatprep.subr.mxu0 %v228
    %1184 = vmatpush1.msra.mxu0 %v227
    %1185 = vmatprep.subr.mxu0 %v232
    %1186 = vmatpush1.msra.mxu0 %v231
    %1187 = vmatprep.subr.mxu0 %v236
    %1188 = vmatpush1.msra.mxu0 %v235
    %1189 = vmatprep.subr.mxu0 %v240
    %1190 = vmatpush1.msra.mxu0 %v239
    %1191 = vmatprep.subr.mxu0 %v244
    %1192 = vmatpush1.msra.mxu0 %v243
    %1193 = vmatprep.subr.mxu0 %v248
    %1194 = vmatpush1.msra.mxu0 %v247
    %1195 = vmatprep.subr.mxu0 %v252
    %1196 = vmatpush1.msra.mxu0 %v251
    %1197 = vmatprep.subr.mxu0 0.0
    %1198 = vmatpush1.msra.mxu0 0.0
    %1199 = vmatprep.subr.mxu0 0.0
    %1200 = vmatpush1.msra.mxu0 0.0
    %1201 = vmatprep.subr.mxu0 0.0
    %1202 = vmatpush1.msra.mxu0 0.0
    %1203 = vmatprep.subr.mxu0 0.0
    %1204 = vmatpush1.msra.mxu0 0.0
    %1205 = vmatprep.subr.mxu0 0.0
    %1206 = vmatpush1.msra.mxu0 0.0
    %1207 = vmatprep.subr.mxu0 0.0
    %1208 = vmatpush1.msra.mxu0 0.0
    %1209 = vmatprep.subr.mxu0 0.0
    %1210 = vmatpush1.msra.mxu0 0.0
    %1211 = vmatprep.subr.mxu0 0.0
    %1212 = vmatpush1.msra.mxu0 0.0
    %1213 = vmatprep.subr.mxu0 0.0
    %1214 = vmatpush1.msra.mxu0 0.0
    %1215 = vmatprep.subr.mxu0 0.0
    %1216 = vmatpush1.msra.mxu0 0.0
    %1217 = vmatprep.subr.mxu0 0.0
    %1218 = vmatpush1.msra.mxu0 0.0
    %1219 = vmatprep.subr.mxu0 0.0
    %1220 = vmatpush1.msra.mxu0 0.0
    %1221 = vmatprep.subr.mxu0 0.0
    %1222 = vmatpush1.msra.mxu0 0.0
    %1223 = vmatprep.subr.mxu0 0.0
    %1224 = vmatpush1.msra.mxu0 0.0
    %1225 = vmatprep.subr.mxu0 0.0
    %1226 = vmatpush1.msra.mxu0 0.0
    %1227 = vmatprep.subr.mxu0 0.0
    %1228 = vmatpush1.msra.mxu0 0.0
    %1229 = vmatprep.mubr.f32.mxu0 0.0
    %1230 = vmatmul.mubr.f32.gmra.mrb[0].mxu0 %v1158
    %v1231 = vpop.f32.mrb[0].mxu0
    %v1232 = vadd.f32 0.0, %v1231
    %v1233 = vpop.f32.mrb[0].mxu0
    %v1234 = vadd.f32 0.0, %v1233
    %1235 = vdwg.mxu0
    %1236 = vmatprep.subr.mxu0 %v194
    %1237 = vmatpush1.msra.mxu0 %v193
    %1238 = vmatprep.subr.mxu0 %v198
    %1239 = vmatpush1.msra.mxu0 %v197
    %1240 = vmatprep.subr.mxu0 %v202
    %1241 = vmatpush1.msra.mxu0 %v201
    %1242 = vmatprep.subr.mxu0 %v206
    %1243 = vmatpush1.msra.mxu0 %v205
    %1244 = vmatprep.subr.mxu0 %v210
    %1245 = vmatpush1.msra.mxu0 %v209
    %1246 = vmatprep.subr.mxu0 %v214
    %1247 = vmatpush1.msra.mxu0 %v213
    %1248 = vmatprep.subr.mxu0 %v218
    %1249 = vmatpush1.msra.mxu0 %v217
    %1250 = vmatprep.subr.mxu0 %v222
    %1251 = vmatpush1.msra.mxu0 %v221
    %1252 = vmatprep.subr.mxu0 %v226
    %1253 = vmatpush1.msra.mxu0 %v225
    %1254 = vmatprep.subr.mxu0 %v230
    %1255 = vmatpush1.msra.mxu0 %v229
    %1256 = vmatprep.subr.mxu0 %v234
    %1257 = vmatpush1.msra.mxu0 %v233
    %1258 = vmatprep.subr.mxu0 %v238
    %1259 = vmatpush1.msra.mxu0 %v237
    %1260 = vmatprep.subr.mxu0 %v242
    %1261 = vmatpush1.msra.mxu0 %v241
    %1262 = vmatprep.subr.mxu0 %v246
    %1263 = vmatpush1.msra.mxu0 %v245
    %1264 = vmatprep.subr.mxu0 %v250
    %1265 = vmatpush1.msra.mxu0 %v249
    %1266 = vmatprep.subr.mxu0 %v254
    %1267 = vmatpush1.msra.mxu0 %v253
    %1268 = vmatprep.subr.mxu0 0.0
    %1269 = vmatpush1.msra.mxu0 0.0
    %1270 = vmatprep.subr.mxu0 0.0
    %1271 = vmatpush1.msra.mxu0 0.0
    %1272 = vmatprep.subr.mxu0 0.0
    %1273 = vmatpush1.msra.mxu0 0.0
    %1274 = vmatprep.subr.mxu0 0.0
    %1275 = vmatpush1.msra.mxu0 0.0
    %1276 = vmatprep.subr.mxu0 0.0
    %1277 = vmatpush1.msra.mxu0 0.0
    %1278 = vmatprep.subr.mxu0 0.0
    %1279 = vmatpush1.msra.mxu0 0.0
    %1280 = vmatprep.subr.mxu0 0.0
    %1281 = vmatpush1.msra.mxu0 0.0
    %1282 = vmatprep.subr.mxu0 0.0
    %1283 = vmatpush1.msra.mxu0 0.0
    %1284 = vmatprep.subr.mxu0 0.0
    %1285 = vmatpush1.msra.mxu0 0.0
    %1286 = vmatprep.subr.mxu0 0.0
    %1287 = vmatpush1.msra.mxu0 0.0
    %1288 = vmatprep.subr.mxu0 0.0
    %1289 = vmatpush1.msra.mxu0 0.0
    %1290 = vmatprep.subr.mxu0 0.0
    %1291 = vmatpush1.msra.mxu0 0.0
    %1292 = vmatprep.subr.mxu0 0.0
    %1293 = vmatpush1.msra.mxu0 0.0
    %1294 = vmatprep.subr.mxu0 0.0
    %1295 = vmatpush1.msra.mxu0 0.0
    %1296 = vmatprep.subr.mxu0 0.0
    %1297 = vmatpush1.msra.mxu0 0.0
    %1298 = vmatprep.subr.mxu0 0.0
    %1299 = vmatpush1.msra.mxu0 0.0
    %1300 = vmatprep.mubr.f32.mxu0 0.0
    %1301 = vmatmul.mubr.f32.gmra.mrb[0].mxu0 %v1158
    %v1302 = vpop.f32.mrb[0].mxu0
    %v1303 = vadd.f32 0.0, %v1302
    %v1304 = vpop.f32.mrb[0].mxu0
    %v1305 = vadd.f32 0.0, %v1304
    %1306 = vdwg.mxu0
    %v1307 = vadd.f32 %v1161, %v1232
    %v1308 = vadd.f32 %v1162, %v1234
    %v1309 = vadd.f32 %v1163, %v1303
    %v1310 = vadd.f32 %v1164, %v1305
    %v1311 = vxor.u32 %v1307, 2147483648
    %v1312 = vmul.f32 %v1311, 1.442695
    %v1313 = vpow.pop %v1312
    %v1314 = vadd.f32 %v1313, 1.0
    %v1315 = vrcp.pop %v1314
    %v1316 = vmul.f32 1.0, %v1315
    %v1317 = vxor.u32 %v1308, 2147483648
    %v1318 = vmul.f32 %v1317, 1.442695
    %v1319 = vpow.pop %v1318
    %v1320 = vadd.f32 %v1319, 1.0
    %v1321 = vrcp.pop %v1320
    %v1322 = vmul.f32 1.0, %v1321
    %v1323 = vtanh.pop %v1309
    %v1324 = vxor.u32 %v1310, 2147483648
    %v1325 = vmul.f32 %v1324, 1.442695
    %v1326 = vpow.pop %v1325
    %v1327 = vadd.f32 %v1326, 1.0
    %v1328 = vrcp.pop %v1327
    %v1329 = vmul.f32 1.0, %v1328
    %v1330 = vmul.f32 %v1322, %v1159
    %v1331 = vmul.f32 %v1316, %v1323
    %v1332 = vadd.f32 %v1330, %v1331
    %v1333 = vtanh.pop %v1332
    %v1334 = vmul.f32 %v1329, %v1333
    %1335 = vst [vmem:[#allocation2] sm:$0xff] %v1334
    %1336 = vst [vmem:[#allocation3] sm:$0xff] %v1332
    %s1337 = scalar_lea.vmem [#allocation6], 40
    %1338 = vst [vmem:[%s1337] sm:$0xff] %v1334
    %v1339 = vld [vmem:[#allocation2] sm:$0xff]
    %v1340 = vld [vmem:[#allocation3] sm:$0xff]
    %s1341 = scalar_lea.vmem %s0, 192
    %v1342 = vld [vmem:[%s1341] sm:$0xff]
    %v1343 = vld [vmem:[%s1341 + $0x8] sm:$0xff]
    %v1344 = vld [vmem:[%s1341 + $0x10] sm:$0xff]
    %v1345 = vld [vmem:[%s1341 + $0x18] sm:$0xff]
    %1346 = vmatprep.subr.mxu0 %v192
    %1347 = vmatpush1.msra.mxu0 %v191
    %1348 = vmatprep.subr.mxu0 %v196
    %1349 = vmatpush1.msra.mxu0 %v195
    %1350 = vmatprep.subr.mxu0 %v200
    %1351 = vmatpush1.msra.mxu0 %v199
    %1352 = vmatprep.subr.mxu0 %v204
    %1353 = vmatpush1.msra.mxu0 %v203
    %1354 = vmatprep.subr.mxu0 %v208
    %1355 = vmatpush1.msra.mxu0 %v207
    %1356 = vmatprep.subr.mxu0 %v212
    %1357 = vmatpush1.msra.mxu0 %v211
    %1358 = vmatprep.subr.mxu0 %v216
    %1359 = vmatpush1.msra.mxu0 %v215
    %1360 = vmatprep.subr.mxu0 %v220
    %1361 = vmatpush1.msra.mxu0 %v219
    %1362 = vmatprep.subr.mxu0 %v224
    %1363 = vmatpush1.msra.mxu0 %v223
    %1364 = vmatprep.subr.mxu0 %v228
    %1365 = vmatpush1.msra.mxu0 %v227
    %1366 = vmatprep.subr.mxu0 %v232
    %1367 = vmatpush1.msra.mxu0 %v231
    %1368 = vmatprep.subr.mxu0 %v236
    %1369 = vmatpush1.msra.mxu0 %v235
    %1370 = vmatprep.subr.mxu0 %v240
    %1371 = vmatpush1.msra.mxu0 %v239
    %1372 = vmatprep.subr.mxu0 %v244
    %1373 = vmatpush1.msra.mxu0 %v243
    %1374 = vmatprep.subr.mxu0 %v248
    %1375 = vmatpush1.msra.mxu0 %v247
    %1376 = vmatprep.subr.mxu0 %v252
    %1377 = vmatpush1.msra.mxu0 %v251
    %1378 = vmatprep.subr.mxu0 0.0
    %1379 = vmatpush1.msra.mxu0 0.0
    %1380 = vmatprep.subr.mxu0 0.0
    %1381 = vmatpush1.msra.mxu0 0.0
    %1382 = vmatprep.subr.mxu0 0.0
    %1383 = vmatpush1.msra.mxu0 0.0
    %1384 = vmatprep.subr.mxu0 0.0
    %1385 = vmatpush1.msra.mxu0 0.0
    %1386 = vmatprep.subr.mxu0 0.0
    %1387 = vmatpush1.msra.mxu0 0.0
    %1388 = vmatprep.subr.mxu0 0.0
    %1389 = vmatpush1.msra.mxu0 0.0
    %1390 = vmatprep.subr.mxu0 0.0
    %1391 = vmatpush1.msra.mxu0 0.0
    %1392 = vmatprep.subr.mxu0 0.0
    %1393 = vmatpush1.msra.mxu0 0.0
    %1394 = vmatprep.subr.mxu0 0.0
    %1395 = vmatpush1.msra.mxu0 0.0
    %1396 = vmatprep.subr.mxu0 0.0
    %1397 = vmatpush1.msra.mxu0 0.0
    %1398 = vmatprep.subr.mxu0 0.0
    %1399 = vmatpush1.msra.mxu0 0.0
    %1400 = vmatprep.subr.mxu0 0.0
    %1401 = vmatpush1.msra.mxu0 0.0
    %1402 = vmatprep.subr.mxu0 0.0
    %1403 = vmatpush1.msra.mxu0 0.0
    %1404 = vmatprep.subr.mxu0 0.0
    %1405 = vmatpush1.msra.mxu0 0.0
    %1406 = vmatprep.subr.mxu0 0.0
    %1407 = vmatpush1.msra.mxu0 0.0
    %1408 = vmatprep.subr.mxu0 0.0
    %1409 = vmatpush1.msra.mxu0 0.0
    %1410 = vmatprep.mubr.f32.mxu0 0.0
    %1411 = vmatmul.mubr.f32.gmra.mrb[0].mxu0 %v1339
    %v1412 = vpop.f32.mrb[0].mxu0
    %v1413 = vadd.f32 0.0, %v1412
    %v1414 = vpop.f32.mrb[0].mxu0
    %v1415 = vadd.f32 0.0, %v1414
    %1416 = vdwg.mxu0
    %1417 = vmatprep.subr.mxu0 %v194
    %1418 = vmatpush1.msra.mxu0 %v193
    %1419 = vmatprep.subr.mxu0 %v198
    %1420 = vmatpush1.msra.mxu0 %v197
    %1421 = vmatprep.subr.mxu0 %v202
    %1422 = vmatpush1.msra.mxu0 %v201
    %1423 = vmatprep.subr.mxu0 %v206
    %1424 = vmatpush1.msra.mxu0 %v205
    %1425 = vmatprep.subr.mxu0 %v210
    %1426 = vmatpush1.msra.mxu0 %v209
    %1427 = vmatprep.subr.mxu0 %v214
    %1428 = vmatpush1.msra.mxu0 %v213
    %1429 = vmatprep.subr.mxu0 %v218
    %1430 = vmatpush1.msra.mxu0 %v217
    %1431 = vmatprep.subr.mxu0 %v222
    %1432 = vmatpush1.msra.mxu0 %v221
    %1433 = vmatprep.subr.mxu0 %v226
    %1434 = vmatpush1.msra.mxu0 %v225
    %1435 = vmatprep.subr.mxu0 %v230
    %1436 = vmatpush1.msra.mxu0 %v229
    %1437 = vmatprep.subr.mxu0 %v234
    %1438 = vmatpush1.msra.mxu0 %v233
    %1439 = vmatprep.subr.mxu0 %v238
    %1440 = vmatpush1.msra.mxu0 %v237
    %1441 = vmatprep.subr.mxu0 %v242
    %1442 = vmatpush1.msra.mxu0 %v241
    %1443 = vmatprep.subr.mxu0 %v246
    %1444 = vmatpush1.msra.mxu0 %v245
    %1445 = vmatprep.subr.mxu0 %v250
    %1446 = vmatpush1.msra.mxu0 %v249
    %1447 = vmatprep.subr.mxu0 %v254
    %1448 = vmatpush1.msra.mxu0 %v253
    %1449 = vmatprep.subr.mxu0 0.0
    %1450 = vmatpush1.msra.mxu0 0.0
    %1451 = vmatprep.subr.mxu0 0.0
    %1452 = vmatpush1.msra.mxu0 0.0
    %1453 = vmatprep.subr.mxu0 0.0
    %1454 = vmatpush1.msra.mxu0 0.0
    %1455 = vmatprep.subr.mxu0 0.0
    %1456 = vmatpush1.msra.mxu0 0.0
    %1457 = vmatprep.subr.mxu0 0.0
    %1458 = vmatpush1.msra.mxu0 0.0
    %1459 = vmatprep.subr.mxu0 0.0
    %1460 = vmatpush1.msra.mxu0 0.0
    %1461 = vmatprep.subr.mxu0 0.0
    %1462 = vmatpush1.msra.mxu0 0.0
    %1463 = vmatprep.subr.mxu0 0.0
    %1464 = vmatpush1.msra.mxu0 0.0
    %1465 = vmatprep.subr.mxu0 0.0
    %1466 = vmatpush1.msra.mxu0 0.0
    %1467 = vmatprep.subr.mxu0 0.0
    %1468 = vmatpush1.msra.mxu0 0.0
    %1469 = vmatprep.subr.mxu0 0.0
    %1470 = vmatpush1.msra.mxu0 0.0
    %1471 = vmatprep.subr.mxu0 0.0
    %1472 = vmatpush1.msra.mxu0 0.0
    %1473 = vmatprep.subr.mxu0 0.0
    %1474 = vmatpush1.msra.mxu0 0.0
    %1475 = vmatprep.subr.mxu0 0.0
    %1476 = vmatpush1.msra.mxu0 0.0
    %1477 = vmatprep.subr.mxu0 0.0
    %1478 = vmatpush1.msra.mxu0 0.0
    %1479 = vmatprep.subr.mxu0 0.0
    %1480 = vmatpush1.msra.mxu0 0.0
    %1481 = vmatprep.mubr.f32.mxu0 0.0
    %1482 = vmatmul.mubr.f32.gmra.mrb[0].mxu0 %v1339
    %v1483 = vpop.f32.mrb[0].mxu0
    %v1484 = vadd.f32 0.0, %v1483
    %v1485 = vpop.f32.mrb[0].mxu0
    %v1486 = vadd.f32 0.0, %v1485
    %1487 = vdwg.mxu0
    %v1488 = vadd.f32 %v1342, %v1413
    %v1489 = vadd.f32 %v1343, %v1415
    %v1490 = vadd.f32 %v1344, %v1484
    %v1491 = vadd.f32 %v1345, %v1486
    %v1492 = vxor.u32 %v1488, 2147483648
    %v1493 = vmul.f32 %v1492, 1.442695
    %v1494 = vpow.pop %v1493
    %v1495 = vadd.f32 %v1494, 1.0
    %v1496 = vrcp.pop %v1495
    %v1497 = vmul.f32 1.0, %v1496
    %v1498 = vxor.u32 %v1489, 2147483648
    %v1499 = vmul.f32 %v1498, 1.442695
    %v1500 = vpow.pop %v1499
    %v1501 = vadd.f32 %v1500, 1.0
    %v1502 = vrcp.pop %v1501
    %v1503 = vmul.f32 1.0, %v1502
    %v1504 = vtanh.pop %v1490
    %v1505 = vxor.u32 %v1491, 2147483648
    %v1506 = vmul.f32 %v1505, 1.442695
    %v1507 = vpow.pop %v1506
    %v1508 = vadd.f32 %v1507, 1.0
    %v1509 = vrcp.pop %v1508
    %v1510 = vmul.f32 1.0, %v1509
    %v1511 = vmul.f32 %v1503, %v1340
    %v1512 = vmul.f32 %v1497, %v1504
    %v1513 = vadd.f32 %v1511, %v1512
    %v1514 = vtanh.pop %v1513
    %v1515 = vmul.f32 %v1510, %v1514
    %1516 = vst [vmem:[#allocation2] sm:$0xff] %v1515
    %1517 = vst [vmem:[#allocation3] sm:$0xff] %v1513
    %s1518 = scalar_lea.vmem [#allocation6], 48
    %1519 = vst [vmem:[%s1518] sm:$0xff] %v1515
    %v1520 = vld [vmem:[#allocation2] sm:$0xff]
    %v1521 = vld [vmem:[#allocation3] sm:$0xff]
    %s1522 = scalar_lea.vmem %s0, 224
    %v1523 = vld [vmem:[%s1522] sm:$0xff]
    %v1524 = vld [vmem:[%s1522 + $0x8] sm:$0xff]
    %v1525 = vld [vmem:[%s1522 + $0x10] sm:$0xff]
    %v1526 = vld [vmem:[%s1522 + $0x18] sm:$0xff]
    %1527 = vmatprep.subr.mxu0 %v192
    %1528 = vmatpush1.msra.mxu0 %v191
    %1529 = vmatprep.subr.mxu0 %v196
    %1530 = vmatpush1.msra.mxu0 %v195
    %1531 = vmatprep.subr.mxu0 %v200
    %1532 = vmatpush1.msra.mxu0 %v199
    %1533 = vmatprep.subr.mxu0 %v204
    %1534 = vmatpush1.msra.mxu0 %v203
    %1535 = vmatprep.subr.mxu0 %v208
    %1536 = vmatpush1.msra.mxu0 %v207
    %1537 = vmatprep.subr.mxu0 %v212
    %1538 = vmatpush1.msra.mxu0 %v211
    %1539 = vmatprep.subr.mxu0 %v216
    %1540 = vmatpush1.msra.mxu0 %v215
    %1541 = vmatprep.subr.mxu0 %v220
    %1542 = vmatpush1.msra.mxu0 %v219
    %1543 = vmatprep.subr.mxu0 %v224
    %1544 = vmatpush1.msra.mxu0 %v223
    %1545 = vmatprep.subr.mxu0 %v228
    %1546 = vmatpush1.msra.mxu0 %v227
    %1547 = vmatprep.subr.mxu0 %v232
    %1548 = vmatpush1.msra.mxu0 %v231
    %1549 = vmatprep.subr.mxu0 %v236
    %1550 = vmatpush1.msra.mxu0 %v235
    %1551 = vmatprep.subr.mxu0 %v240
    %1552 = vmatpush1.msra.mxu0 %v239
    %1553 = vmatprep.subr.mxu0 %v244
    %1554 = vmatpush1.msra.mxu0 %v243
    %1555 = vmatprep.subr.mxu0 %v248
    %1556 = vmatpush1.msra.mxu0 %v247
    %1557 = vmatprep.subr.mxu0 %v252
    %1558 = vmatpush1.msra.mxu0 %v251
    %1559 = vmatprep.subr.mxu0 0.0
    %1560 = vmatpush1.msra.mxu0 0.0
    %1561 = vmatprep.subr.mxu0 0.0
    %1562 = vmatpush1.msra.mxu0 0.0
    %1563 = vmatprep.subr.mxu0 0.0
    %1564 = vmatpush1.msra.mxu0 0.0
    %1565 = vmatprep.subr.mxu0 0.0
    %1566 = vmatpush1.msra.mxu0 0.0
    %1567 = vmatprep.subr.mxu0 0.0
    %1568 = vmatpush1.msra.mxu0 0.0
    %1569 = vmatprep.subr.mxu0 0.0
    %1570 = vmatpush1.msra.mxu0 0.0
    %1571 = vmatprep.subr.mxu0 0.0
    %1572 = vmatpush1.msra.mxu0 0.0
    %1573 = vmatprep.subr.mxu0 0.0
    %1574 = vmatpush1.msra.mxu0 0.0
    %1575 = vmatprep.subr.mxu0 0.0
    %1576 = vmatpush1.msra.mxu0 0.0
    %1577 = vmatprep.subr.mxu0 0.0
    %1578 = vmatpush1.msra.mxu0 0.0
    %1579 = vmatprep.subr.mxu0 0.0
    %1580 = vmatpush1.msra.mxu0 0.0
    %1581 = vmatprep.subr.mxu0 0.0
    %1582 = vmatpush1.msra.mxu0 0.0
    %1583 = vmatprep.subr.mxu0 0.0
    %1584 = vmatpush1.msra.mxu0 0.0
    %1585 = vmatprep.subr.mxu0 0.0
    %1586 = vmatpush1.msra.mxu0 0.0
    %1587 = vmatprep.subr.mxu0 0.0
    %1588 = vmatpush1.msra.mxu0 0.0
    %1589 = vmatprep.subr.mxu0 0.0
    %1590 = vmatpush1.msra.mxu0 0.0
    %1591 = vmatprep.mubr.f32.mxu0 0.0
    %1592 = vmatmul.mubr.f32.gmra.mrb[0].mxu0 %v1520
    %v1593 = vpop.f32.mrb[0].mxu0
    %v1594 = vadd.f32 0.0, %v1593
    %v1595 = vpop.f32.mrb[0].mxu0
    %v1596 = vadd.f32 0.0, %v1595
    %1597 = vdwg.mxu0
    %1598 = vmatprep.subr.mxu0 %v194
    %1599 = vmatpush1.msra.mxu0 %v193
    %1600 = vmatprep.subr.mxu0 %v198
    %1601 = vmatpush1.msra.mxu0 %v197
    %1602 = vmatprep.subr.mxu0 %v202
    %1603 = vmatpush1.msra.mxu0 %v201
    %1604 = vmatprep.subr.mxu0 %v206
    %1605 = vmatpush1.msra.mxu0 %v205
    %1606 = vmatprep.subr.mxu0 %v210
    %1607 = vmatpush1.msra.mxu0 %v209
    %1608 = vmatprep.subr.mxu0 %v214
    %1609 = vmatpush1.msra.mxu0 %v213
    %1610 = vmatprep.subr.mxu0 %v218
    %1611 = vmatpush1.msra.mxu0 %v217
    %1612 = vmatprep.subr.mxu0 %v222
    %1613 = vmatpush1.msra.mxu0 %v221
    %1614 = vmatprep.subr.mxu0 %v226
    %1615 = vmatpush1.msra.mxu0 %v225
    %1616 = vmatprep.subr.mxu0 %v230
    %1617 = vmatpush1.msra.mxu0 %v229
    %1618 = vmatprep.subr.mxu0 %v234
    %1619 = vmatpush1.msra.mxu0 %v233
    %1620 = vmatprep.subr.mxu0 %v238
    %1621 = vmatpush1.msra.mxu0 %v237
    %1622 = vmatprep.subr.mxu0 %v242
    %1623 = vmatpush1.msra.mxu0 %v241
    %1624 = vmatprep.subr.mxu0 %v246
    %1625 = vmatpush1.msra.mxu0 %v245
    %1626 = vmatprep.subr.mxu0 %v250
    %1627 = vmatpush1.msra.mxu0 %v249
    %1628 = vmatprep.subr.mxu0 %v254
    %1629 = vmatpush1.msra.mxu0 %v253
    %1630 = vmatprep.subr.mxu0 0.0
    %1631 = vmatpush1.msra.mxu0 0.0
    %1632 = vmatprep.subr.mxu0 0.0
    %1633 = vmatpush1.msra.mxu0 0.0
    %1634 = vmatprep.subr.mxu0 0.0
    %1635 = vmatpush1.msra.mxu0 0.0
    %1636 = vmatprep.subr.mxu0 0.0
    %1637 = vmatpush1.msra.mxu0 0.0
    %1638 = vmatprep.subr.mxu0 0.0
    %1639 = vmatpush1.msra.mxu0 0.0
    %1640 = vmatprep.subr.mxu0 0.0
    %1641 = vmatpush1.msra.mxu0 0.0
    %1642 = vmatprep.subr.mxu0 0.0
    %1643 = vmatpush1.msra.mxu0 0.0
    %1644 = vmatprep.subr.mxu0 0.0
    %1645 = vmatpush1.msra.mxu0 0.0
    %1646 = vmatprep.subr.mxu0 0.0
    %1647 = vmatpush1.msra.mxu0 0.0
    %1648 = vmatprep.subr.mxu0 0.0
    %1649 = vmatpush1.msra.mxu0 0.0
    %1650 = vmatprep.subr.mxu0 0.0
    %1651 = vmatpush1.msra.mxu0 0.0
    %1652 = vmatprep.subr.mxu0 0.0
    %1653 = vmatpush1.msra.mxu0 0.0
    %1654 = vmatprep.subr.mxu0 0.0
    %1655 = vmatpush1.msra.mxu0 0.0
    %1656 = vmatprep.subr.mxu0 0.0
    %1657 = vmatpush1.msra.mxu0 0.0
    %1658 = vmatprep.subr.mxu0 0.0
    %1659 = vmatpush1.msra.mxu0 0.0
    %1660 = vmatprep.subr.mxu0 0.0
    %1661 = vmatpush1.msra.mxu0 0.0
    %1662 = vmatprep.mubr.f32.mxu0 0.0
    %1663 = vmatmul.mubr.f32.gmra.mrb[0].mxu0 %v1520
    %v1664 = vpop.f32.mrb[0].mxu0
    %v1665 = vadd.f32 0.0, %v1664
    %v1666 = vpop.f32.mrb[0].mxu0
    %v1667 = vadd.f32 0.0, %v1666
    %1668 = vdwg.mxu0
    %v1669 = vadd.f32 %v1523, %v1594
    %v1670 = vadd.f32 %v1524, %v1596
    %v1671 = vadd.f32 %v1525, %v1665
    %v1672 = vadd.f32 %v1526, %v1667
    %v1673 = vxor.u32 %v1669, 2147483648
    %v1674 = vmul.f32 %v1673, 1.442695
    %v1675 = vpow.pop %v1674
    %v1676 = vadd.f32 %v1675, 1.0
    %v1677 = vrcp.pop %v1676
    %v1678 = vmul.f32 1.0, %v1677
    %v1679 = vxor.u32 %v1670, 2147483648
    %v1680 = vmul.f32 %v1679, 1.442695
    %v1681 = vpow.pop %v1680
    %v1682 = vadd.f32 %v1681, 1.0
    %v1683 = vrcp.pop %v1682
    %v1684 = vmul.f32 1.0, %v1683
    %v1685 = vtanh.pop %v1671
    %v1686 = vxor.u32 %v1672, 2147483648
    %v1687 = vmul.f32 %v1686, 1.442695
    %v1688 = vpow.pop %v1687
    %v1689 = vadd.f32 %v1688, 1.0
    %v1690 = vrcp.pop %v1689
    %v1691 = vmul.f32 1.0, %v1690
    %v1692 = vmul.f32 %v1684, %v1521
    %v1693 = vmul.f32 %v1678, %v1685
    %v1694 = vadd.f32 %v1692, %v1693
    %v1695 = vtanh.pop %v1694
    %v1696 = vmul.f32 %v1691, %v1695
    %1697 = vst [vmem:[#allocation2] sm:$0xff] %v1696
    %1698 = vst [vmem:[#allocation3] sm:$0xff] %v1694
    %s1699 = scalar_lea.vmem [#allocation6], 56
    %1700 = vst [vmem:[%s1699] sm:$0xff] %v1696
    // Predicated region
    $region44: #{encoder_forward.3} parent=1 // pred_check
      %p1701 = pneg %p13
    $region45: #{encoder_forward.3} parent=1 // pred_check_branch
      %1703 = sbr.rel (%p1701) target = $region47
    $region46: #{encoder_forward.3} parent=1 // pred_region
      %v1704 = vld [vmem:[#allocation2] sm:$0xff]
      %1705 = vst [vmem:[%s3] sm:$0xff] %v1704
      %v1706 = vld [vmem:[#allocation3] sm:$0xff]
      %1707 = vst [vmem:[%s4] sm:$0xff] %v1706
    $region47: #{encoder_forward.3} parent=1 // pred_fallthru
      _
    // Predicated region
    $region48: #{encoder_forward.3} parent=1 // pred_check
      _
    $region49: #{encoder_forward.3} parent=1 // pred_check_branch
      %1709 = sbr.rel (0) target = $region51
    $region50: #{encoder_forward.3} parent=1 // pred_region
      %s1711 = ssub.s32 1024, 1024
      %1712 = vsyncadd [#allocation7], %s1711
      %s1713 = sshll.u32 [#allocation6], 4
      %s1714 = int_to_ptr.vmem [resolvable:$true] %s1713
      %1719 = dma.vmem_to_hbm [thread:$0]  %s1714, 1024, %s2, [#allocation7], 128, 128, 8
    $region51: #{encoder_forward.3} parent=1 // pred_fallthru
      _
    // Predicated region
    $region52: #{encoder_forward.3} parent=1 // pred_check
      _
    $region53: #{encoder_forward.3} parent=1 // pred_check_branch
      %1721 = sbr.rel (0) target = $region55
    $region54: #{encoder_forward.3} parent=1 // pred_region
      _
    $region55: #{encoder_forward.3} parent=1 // pred_fallthru
      _
    // Predicated region
    $region56: #{encoder_forward.3} parent=1 // pred_check
      _
    $region57: #{encoder_forward.3} parent=1 // pred_check_branch
      %1723 = sbr.rel (0) target = $region59
    $region58: #{encoder_forward.3} parent=1 // pred_region
      _
    $region59: #{encoder_forward.3} parent=1 // pred_fallthru
      _
    // Predicated region
    $region60: #{encoder_forward.3} parent=1 // pred_check
      _
    $region61: #{encoder_forward.3} parent=1 // pred_check_branch
      %1725 = sbr.rel (0) target = $region63
    $region62: #{encoder_forward.3} parent=1 // pred_region
      %1726 = dma.done [#allocation7], 1024
    $region63: #{encoder_forward.3} parent=1 // pred_fallthru
      _
    // Predicated region
    $region64: #{encoder_forward.3} parent=1 // pred_check
      _
    $region65: #{encoder_forward.3} parent=1 // pred_check_branch
      %1728 = sbr.rel (0) target = $region67
    $region66: #{encoder_forward.3} parent=1 // pred_region
      _
    $region67: #{encoder_forward.3} parent=1 // pred_fallthru
      _
    // Predicated region
    $region68: #{encoder_forward.3} parent=1 // pred_check
      _
    $region69: #{encoder_forward.3} parent=1 // pred_check_branch
      %1730 = sbr.rel (0) target = $region71
    $region70: #{encoder_forward.3} parent=1 // pred_region
      _
    $region71: #{encoder_forward.3} parent=1 // pred_fallthru
      _
    %1731 = vsyncpa [#allocation7], 1
  %1732 = vsyncmov [#allocation5]
  %s1733 = vpop.sfrf %1732
  %p1734 = scmp.eq.s32.totalorder %s1733, 0
  %p1735 = pneg %p1734
  %1737 = shalt.err (%p1735)

// kernel: encoder_forward.2
$region0: #{encoder_forward.2}
  #allocation0 [shape = 'u32[]', space=smem, size = 0x4, offset = 0x4, fixed_abs, tag = 'smem constant byte address 0x4 - core index']
  #allocation1 [shape = 'u32[144,128]{1,0:T(1,128)}', space=vmem, size = 0x12000, scoped, tag = 'internal scratch']
  #allocation2 [shape = 'f32[8,128]{1,0:T(8,128)}', space=vmem, size = 0x1000, scoped, tag = 'scratch operand']
  #allocation3 [shape = 'f32[8,128]{1,0:T(8,128)}', space=vmem, size = 0x1000, scoped, tag = 'scratch operand']
  #allocation4 [shape = 'f32[128,512]{1,0:T(8,128)}', space=vmem, size = 0x40000, scoped, tag = 'scratch operand']
  #allocation5 [shape = 's32[1]{0}', space=sflag, size = 0x4, scoped, tag = 'scratch operand']
  #allocation6 [shape = 's32[]', space=sflag, size = 0x4, offset = 0, fixed_abs, tag = 'sflag constant byte address 0x0 - dummy sync flag']
  %s0 = inlined_call_operand.vmem [shape: f32[8,8,512], index: 0, kind: input, shape index: {}]
  %s1 = inlined_call_operand.vmem [shape: f32[128,512], index: 1, kind: input, shape index: {}]
  %s2 = inlined_call_operand.vmem [shape: f32[8,8,128], index: 2, kind: output, shape index: {0}]
  %s3 = inlined_call_operand.vmem [shape: f32[8,128], index: 3, kind: output, shape index: {1}]
  %s4 = inlined_call_operand.vmem [shape: f32[8,128], index: 4, kind: output, shape index: {2}]
  %5 = xla_tuple %s2, %s3, %s4
  %s6 = sld [smem:[#allocation0]]
  $region72: #{encoder_forward.2} parent=0
    _
  %s8 = ssub.s32 1, %s6
  %s9 = scalar_select 0, %s8, %s6
  // Predicated region
  $region2: #{encoder_forward.2} parent=0 // pred_check
    _
  $region3: #{encoder_forward.2} parent=0 // pred_check_branch
    %11 = sbr.rel (0) target = $region5
  $region4: #{encoder_forward.2} parent=0 // pred_region
    _
  $region5: #{encoder_forward.2} parent=0 // pred_fallthru
    _
  %p12 = scmp.eq.s32.totalorder 0, 0
  // Predicated region
  $region6: #{encoder_forward.2} parent=0 // pred_check
    %p13 = pneg %p12
  $region7: #{encoder_forward.2} parent=0 // pred_check_branch
    %15 = sbr.rel (%p13) target = $region9
  $region8: #{encoder_forward.2} parent=0 // pred_region
    %p17 = scmp.lt.u32.totalorder 512, 8
    %p18 = pneg %p17
    // Predicated region
    $region10: #{encoder_forward.2} parent=8 // pred_check
      _
    $region11: #{encoder_forward.2} parent=8 // pred_check_branch
      %20 = sbr.rel (%p17) target = $region13
    $region12: #{encoder_forward.2} parent=8 // pred_region
      %s35 = sand.u32 512, 7
      %p36 = scmp.eq.s32.totalorder %s35, 0
      // Predicated region
      $region25: #{encoder_forward.2} parent=12 // pred_check
        %p37 = pneg %p36
      $region26: #{encoder_forward.2} parent=12 // pred_check_branch
        %39 = sbr.rel (%p37) target = $region28
      $region27: #{encoder_forward.2} parent=12 // pred_region
        loop: start=0, step=1, limit=1
        $region29: #{encoder_forward.2} parent=27 // loop_pre_header
          _
        $region30: #{encoder_forward.2} parent=27 // loop_header
          %s41 = sphi 0, %s45
          %p42 = scmp.ge.s32.totalorder %s41, 1
          %s46 = sphi %s1, %s1
          %s47 = sphi [#allocation4], [#allocation4]
        $region31: #{encoder_forward.2} parent=27 // loop_header_branch
          %44 = sbr.rel (%p42) target = $region35
        $region32: #{encoder_forward.2} parent=27 // loop_body
          %v48 = vld [vmem:[%s46] sm:$0xff]
          %49 = vst [vmem:[%s47] sm:$0xff] %v48
          %v50 = vld [vmem:[%s46 + $0x8] sm:$0xff]
          %51 = vst [vmem:[%s47 + $0x8] sm:$0xff] %v50
          %v52 = vld [vmem:[%s46 + $0x10] sm:$0xff]
          %53 = vst [vmem:[%s47 + $0x10] sm:$0xff] %v52
          %v54 = vld [vmem:[%s46 + $0x18] sm:$0xff]
          %55 = vst [vmem:[%s47 + $0x18] sm:$0xff] %v54
          %v56 = vld [vmem:[%s46 + $0x20] sm:$0xff]
          %57 = vst [vmem:[%s47 + $0x20] sm:$0xff] %v56
          %v58 = vld [vmem:[%s46 + $0x28] sm:$0xff]
          %59 = vst [vmem:[%s47 + $0x28] sm:$0xff] %v58
          %v60 = vld [vmem:[%s46 + $0x30] sm:$0xff]
          %61 = vst [vmem:[%s47 + $0x30] sm:$0xff] %v60
          %v62 = vld [vmem:[%s46 + $0x38] sm:$0xff]
          %63 = vst [vmem:[%s47 + $0x38] sm:$0xff] %v62
          %v64 = vld [vmem:[%s46 + $0x40] sm:$0xff]
          %65 = vst [vmem:[%s47 + $0x40] sm:$0xff] %v64
          %v66 = vld [vmem:[%s46 + $0x48] sm:$0xff]
          %67 = vst [vmem:[%s47 + $0x48] sm:$0xff] %v66
          %v68 = vld [vmem:[%s46 + $0x50] sm:$0xff]
          %69 = vst [vmem:[%s47 + $0x50] sm:$0xff] %v68
          %v70 = vld [vmem:[%s46 + $0x58] sm:$0xff]
          %71 = vst [vmem:[%s47 + $0x58] sm:$0xff] %v70
          %v72 = vld [vmem:[%s46 + $0x60] sm:$0xff]
          %73 = vst [vmem:[%s47 + $0x60] sm:$0xff] %v72
          %v74 = vld [vmem:[%s46 + $0x68] sm:$0xff]
          %75 = vst [vmem:[%s47 + $0x68] sm:$0xff] %v74
          %v76 = vld [vmem:[%s46 + $0x70] sm:$0xff]
          %77 = vst [vmem:[%s47 + $0x70] sm:$0xff] %v76
          %v78 = vld [vmem:[%s46 + $0x78] sm:$0xff]
          %79 = vst [vmem:[%s47 + $0x78] sm:$0xff] %v78
          %v80 = vld [vmem:[%s46 + $0x80] sm:$0xff]
          %81 = vst [vmem:[%s47 + $0x80] sm:$0xff] %v80
          %v82 = vld [vmem:[%s46 + $0x88] sm:$0xff]
          %83 = vst [vmem:[%s47 + $0x88] sm:$0xff] %v82
          %v84 = vld [vmem:[%s46 + $0x90] sm:$0xff]
          %85 = vst [vmem:[%s47 + $0x90] sm:$0xff] %v84
          %v86 = vld [vmem:[%s46 + $0x98] sm:$0xff]
          %87 = vst [vmem:[%s47 + $0x98] sm:$0xff] %v86
          %v88 = vld [vmem:[%s46 + $0xa0] sm:$0xff]
          %89 = vst [vmem:[%s47 + $0xa0] sm:$0xff] %v88
          %v90 = vld [vmem:[%s46 + $0xa8] sm:$0xff]
          %91 = vst [vmem:[%s47 + $0xa8] sm:$0xff] %v90
          %v92 = vld [vmem:[%s46 + $0xb0] sm:$0xff]
          %93 = vst [vmem:[%s47 + $0xb0] sm:$0xff] %v92
          %v94 = vld [vmem:[%s46 + $0xb8] sm:$0xff]
          %95 = vst [vmem:[%s47 + $0xb8] sm:$0xff] %v94
          %v96 = vld [vmem:[%s46 + $0xc0] sm:$0xff]
          %97 = vst [vmem:[%s47 + $0xc0] sm:$0xff] %v96
          %v98 = vld [vmem:[%s46 + $0xc8] sm:$0xff]
          %99 = vst [vmem:[%s47 + $0xc8] sm:$0xff] %v98
          %v100 = vld [vmem:[%s46 + $0xd0] sm:$0xff]
          %101 = vst [vmem:[%s47 + $0xd0] sm:$0xff] %v100
          %v102 = vld [vmem:[%s46 + $0xd8] sm:$0xff]
          %103 = vst [vmem:[%s47 + $0xd8] sm:$0xff] %v102
          %v104 = vld [vmem:[%s46 + $0xe0] sm:$0xff]
          %105 = vst [vmem:[%s47 + $0xe0] sm:$0xff] %v104
          %v106 = vld [vmem:[%s46 + $0xe8] sm:$0xff]
          %107 = vst [vmem:[%s47 + $0xe8] sm:$0xff] %v106
          %v108 = vld [vmem:[%s46 + $0xf0] sm:$0xff]
          %109 = vst [vmem:[%s47 + $0xf0] sm:$0xff] %v108
          %v110 = vld [vmem:[%s46 + $0xf8] sm:$0xff]
          %111 = vst [vmem:[%s47 + $0xf8] sm:$0xff] %v110
          %v112 = vld [vmem:[%s46 + $0x100] sm:$0xff]
          %113 = vst [vmem:[%s47 + $0x100] sm:$0xff] %v112
          %v114 = vld [vmem:[%s46 + $0x108] sm:$0xff]
          %115 = vst [vmem:[%s47 + $0x108] sm:$0xff] %v114
          %v116 = vld [vmem:[%s46 + $0x110] sm:$0xff]
          %117 = vst [vmem:[%s47 + $0x110] sm:$0xff] %v116
          %v118 = vld [vmem:[%s46 + $0x118] sm:$0xff]
          %119 = vst [vmem:[%s47 + $0x118] sm:$0xff] %v118
          %v120 = vld [vmem:[%s46 + $0x120] sm:$0xff]
          %121 = vst [vmem:[%s47 + $0x120] sm:$0xff] %v120
          %v122 = vld [vmem:[%s46 + $0x128] sm:$0xff]
          %123 = vst [vmem:[%s47 + $0x128] sm:$0xff] %v122
          %v124 = vld [vmem:[%s46 + $0x130] sm:$0xff]
          %125 = vst [vmem:[%s47 + $0x130] sm:$0xff] %v124
          %v126 = vld [vmem:[%s46 + $0x138] sm:$0xff]
          %127 = vst [vmem:[%s47 + $0x138] sm:$0xff] %v126
          %v128 = vld [vmem:[%s46 + $0x140] sm:$0xff]
          %129 = vst [vmem:[%s47 + $0x140] sm:$0xff] %v128
          %v130 = vld [vmem:[%s46 + $0x148] sm:$0xff]
          %131 = vst [vmem:[%s47 + $0x148] sm:$0xff] %v130
          %v132 = vld [vmem:[%s46 + $0x150] sm:$0xff]
          %133 = vst [vmem:[%s47 + $0x150] sm:$0xff] %v132
          %v134 = vld [vmem:[%s46 + $0x158] sm:$0xff]
          %135 = vst [vmem:[%s47 + $0x158] sm:$0xff] %v134
          %v136 = vld [vmem:[%s46 + $0x160] sm:$0xff]
          %137 = vst [vmem:[%s47 + $0x160] sm:$0xff] %v136
          %v138 = vld [vmem:[%s46 + $0x168] sm:$0xff]
          %139 = vst [vmem:[%s47 + $0x168] sm:$0xff] %v138
          %v140 = vld [vmem:[%s46 + $0x170] sm:$0xff]
          %141 = vst [vmem:[%s47 + $0x170] sm:$0xff] %v140
          %v142 = vld [vmem:[%s46 + $0x178] sm:$0xff]
          %143 = vst [vmem:[%s47 + $0x178] sm:$0xff] %v142
          %v144 = vld [vmem:[%s46 + $0x180] sm:$0xff]
          %145 = vst [vmem:[%s47 + $0x180] sm:$0xff] %v144
          %v146 = vld [vmem:[%s46 + $0x188] sm:$0xff]
          %147 = vst [vmem:[%s47 + $0x188] sm:$0xff] %v146
          %v148 = vld [vmem:[%s46 + $0x190] sm:$0xff]
          %149 = vst [vmem:[%s47 + $0x190] sm:$0xff] %v148
          %v150 = vld [vmem:[%s46 + $0x198] sm:$0xff]
          %151 = vst [vmem:[%s47 + $0x198] sm:$0xff] %v150
          %v152 = vld [vmem:[%s46 + $0x1a0] sm:$0xff]
          %153 = vst [vmem:[%s47 + $0x1a0] sm:$0xff] %v152
          %v154 = vld [vmem:[%s46 + $0x1a8] sm:$0xff]
          %155 = vst [vmem:[%s47 + $0x1a8] sm:$0xff] %v154
          %v156 = vld [vmem:[%s46 + $0x1b0] sm:$0xff]
          %157 = vst [vmem:[%s47 + $0x1b0] sm:$0xff] %v156
          %v158 = vld [vmem:[%s46 + $0x1b8] sm:$0xff]
          %159 = vst [vmem:[%s47 + $0x1b8] sm:$0xff] %v158
          %v160 = vld [vmem:[%s46 + $0x1c0] sm:$0xff]
          %161 = vst [vmem:[%s47 + $0x1c0] sm:$0xff] %v160
          %v162 = vld [vmem:[%s46 + $0x1c8] sm:$0xff]
          %163 = vst [vmem:[%s47 + $0x1c8] sm:$0xff] %v162
          %v164 = vld [vmem:[%s46 + $0x1d0] sm:$0xff]
          %165 = vst [vmem:[%s47 + $0x1d0] sm:$0xff] %v164
          %v166 = vld [vmem:[%s46 + $0x1d8] sm:$0xff]
          %167 = vst [vmem:[%s47 + $0x1d8] sm:$0xff] %v166
          %v168 = vld [vmem:[%s46 + $0x1e0] sm:$0xff]
          %169 = vst [vmem:[%s47 + $0x1e0] sm:$0xff] %v168
          %v170 = vld [vmem:[%s46 + $0x1e8] sm:$0xff]
          %171 = vst [vmem:[%s47 + $0x1e8] sm:$0xff] %v170
          %v172 = vld [vmem:[%s46 + $0x1f0] sm:$0xff]
          %173 = vst [vmem:[%s47 + $0x1f0] sm:$0xff] %v172
          %v174 = vld [vmem:[%s46 + $0x1f8] sm:$0xff]
          %175 = vst [vmem:[%s47 + $0x1f8] sm:$0xff] %v174
        $region33: #{encoder_forward.2} parent=27 // loop_footer
          %s45 = sadd.s32 1, %s41
        $region34: #{encoder_forward.2} parent=27 // loop_footer_branch
          %40 = sbr.rel target = $region30
        $region35: #{encoder_forward.2} parent=27 // loop_exit
          _
      $region28: #{encoder_forward.2} parent=12 // pred_fallthru
        _
      %p176 = pneg %p36
      // Predicated region
      $region36: #{encoder_forward.2} parent=12 // pred_check
        _
      $region37: #{encoder_forward.2} parent=12 // pred_check_branch
        %178 = sbr.rel (%p36) target = $region39
      $region38: #{encoder_forward.2} parent=12 // pred_region
        %s179 = sand.u32 512, 7
      $region39: #{encoder_forward.2} parent=12 // pred_fallthru
        _
    $region13: #{encoder_forward.2} parent=8 // pred_fallthru
      _
    // Predicated region
    $region14: #{encoder_forward.2} parent=8 // pred_check
      %p21 = pneg %p17
    $region15: #{encoder_forward.2} parent=8 // pred_check_branch
      %23 = sbr.rel (%p21) target = $region17
    $region16: #{encoder_forward.2} parent=8 // pred_region
      %s24 = sshllo.u32 0, 512
      loop: start=0, step=1, limit=1
      $region18: #{encoder_forward.2} parent=16 // loop_pre_header
        _
      $region19: #{encoder_forward.2} parent=16 // loop_header
        %s26 = sphi 0, %s30
        %p27 = scmp.ge.s32.totalorder %s26, 1
        %s31 = sphi %s1, %s1
        %s32 = sphi [#allocation4], [#allocation4]
      $region20: #{encoder_forward.2} parent=16 // loop_header_branch
        %29 = sbr.rel (%p27) target = $region24
      $region21: #{encoder_forward.2} parent=16 // loop_body
        %v33 = vld [vmem:[%s31] sm:%s24]
        %34 = vst [vmem:[%s32] sm:%s24] %v33
      $region22: #{encoder_forward.2} parent=16 // loop_footer
        %s30 = sadd.s32 1, %s26
      $region23: #{encoder_forward.2} parent=16 // loop_footer_branch
        %25 = sbr.rel target = $region19
      $region24: #{encoder_forward.2} parent=16 // loop_exit
        _
    $region17: #{encoder_forward.2} parent=8 // pred_fallthru
      _
    // Predicated region
    $region40: #{encoder_forward.2} parent=8 // pred_check
      _
    $region41: #{encoder_forward.2} parent=8 // pred_check_branch
      %182 = sbr.rel (0) target = $region43
    $region42: #{encoder_forward.2} parent=8 // pred_region
      %183 = vsyncadd [#allocation5], 8192
    $region43: #{encoder_forward.2} parent=8 // pred_fallthru
      _
    %s184 = smul.u32 8, 16
    %s185 = smul.u32 %s184, 4
    %s186 = sshll.u32 %s185, 4
    %187 = dma.done [#allocation5], %s186
    %188 = vst [vmem:[#allocation2] sm:$0xff] 0.0
    %189 = vst [vmem:[#allocation3] sm:$0xff] 0.0
  $region9: #{encoder_forward.2} parent=0 // pred_fallthru
    _
  %v190 = vld [vmem:[#allocation4] sm:$0xff]
  %v191 = vld [vmem:[#allocation4 + $0x8] sm:$0xff]
  %v192 = vld [vmem:[#allocation4 + $0x10] sm:$0xff]
  %v193 = vld [vmem:[#allocation4 + $0x18] sm:$0xff]
  %v194 = vld [vmem:[#allocation4 + $0x20] sm:$0xff]
  %v195 = vld [vmem:[#allocation4 + $0x28] sm:$0xff]
  %v196 = vld [vmem:[#allocation4 + $0x30] sm:$0xff]
  %v197 = vld [vmem:[#allocation4 + $0x38] sm:$0xff]
  %v198 = vld [vmem:[#allocation4 + $0x40] sm:$0xff]
  %v199 = vld [vmem:[#allocation4 + $0x48] sm:$0xff]
  %v200 = vld [vmem:[#allocation4 + $0x50] sm:$0xff]
  %v201 = vld [vmem:[#allocation4 + $0x58] sm:$0xff]
  %v202 = vld [vmem:[#allocation4 + $0x60] sm:$0xff]
  %v203 = vld [vmem:[#allocation4 + $0x68] sm:$0xff]
  %v204 = vld [vmem:[#allocation4 + $0x70] sm:$0xff]
  %v205 = vld [vmem:[#allocation4 + $0x78] sm:$0xff]
  %v206 = vld [vmem:[#allocation4 + $0x80] sm:$0xff]
  %v207 = vld [vmem:[#allocation4 + $0x88] sm:$0xff]
  %v208 = vld [vmem:[#allocation4 + $0x90] sm:$0xff]
  %v209 = vld [vmem:[#allocation4 + $0x98] sm:$0xff]
  %v210 = vld [vmem:[#allocation4 + $0xa0] sm:$0xff]
  %v211 = vld [vmem:[#allocation4 + $0xa8] sm:$0xff]
  %v212 = vld [vmem:[#allocation4 + $0xb0] sm:$0xff]
  %v213 = vld [vmem:[#allocation4 + $0xb8] sm:$0xff]
  %v214 = vld [vmem:[#allocation4 + $0xc0] sm:$0xff]
  %v215 = vld [vmem:[#allocation4 + $0xc8] sm:$0xff]
  %v216 = vld [vmem:[#allocation4 + $0xd0] sm:$0xff]
  %v217 = vld [vmem:[#allocation4 + $0xd8] sm:$0xff]
  %v218 = vld [vmem:[#allocation4 + $0xe0] sm:$0xff]
  %v219 = vld [vmem:[#allocation4 + $0xe8] sm:$0xff]
  %v220 = vld [vmem:[#allocation4 + $0xf0] sm:$0xff]
  %v221 = vld [vmem:[#allocation4 + $0xf8] sm:$0xff]
  %v222 = vld [vmem:[#allocation4 + $0x100] sm:$0xff]
  %v223 = vld [vmem:[#allocation4 + $0x108] sm:$0xff]
  %v224 = vld [vmem:[#allocation4 + $0x110] sm:$0xff]
  %v225 = vld [vmem:[#allocation4 + $0x118] sm:$0xff]
  %v226 = vld [vmem:[#allocation4 + $0x120] sm:$0xff]
  %v227 = vld [vmem:[#allocation4 + $0x128] sm:$0xff]
  %v228 = vld [vmem:[#allocation4 + $0x130] sm:$0xff]
  %v229 = vld [vmem:[#allocation4 + $0x138] sm:$0xff]
  %v230 = vld [vmem:[#allocation4 + $0x140] sm:$0xff]
  %v231 = vld [vmem:[#allocation4 + $0x148] sm:$0xff]
  %v232 = vld [vmem:[#allocation4 + $0x150] sm:$0xff]
  %v233 = vld [vmem:[#allocation4 + $0x158] sm:$0xff]
  %v234 = vld [vmem:[#allocation4 + $0x160] sm:$0xff]
  %v235 = vld [vmem:[#allocation4 + $0x168] sm:$0xff]
  %v236 = vld [vmem:[#allocation4 + $0x170] sm:$0xff]
  %v237 = vld [vmem:[#allocation4 + $0x178] sm:$0xff]
  %v238 = vld [vmem:[#allocation4 + $0x180] sm:$0xff]
  %v239 = vld [vmem:[#allocation4 + $0x188] sm:$0xff]
  %v240 = vld [vmem:[#allocation4 + $0x190] sm:$0xff]
  %v241 = vld [vmem:[#allocation4 + $0x198] sm:$0xff]
  %v242 = vld [vmem:[#allocation4 + $0x1a0] sm:$0xff]
  %v243 = vld [vmem:[#allocation4 + $0x1a8] sm:$0xff]
  %v244 = vld [vmem:[#allocation4 + $0x1b0] sm:$0xff]
  %v245 = vld [vmem:[#allocation4 + $0x1b8] sm:$0xff]
  %v246 = vld [vmem:[#allocation4 + $0x1c0] sm:$0xff]
  %v247 = vld [vmem:[#allocation4 + $0x1c8] sm:$0xff]
  %v248 = vld [vmem:[#allocation4 + $0x1d0] sm:$0xff]
  %v249 = vld [vmem:[#allocation4 + $0x1d8] sm:$0xff]
  %v250 = vld [vmem:[#allocation4 + $0x1e0] sm:$0xff]
  %v251 = vld [vmem:[#allocation4 + $0x1e8] sm:$0xff]
  %v252 = vld [vmem:[#allocation4 + $0x1f0] sm:$0xff]
  %v253 = vld [vmem:[#allocation4 + $0x1f8] sm:$0xff]
  %v254 = vld [vmem:[#allocation2] sm:$0xff]
  %v255 = vld [vmem:[#allocation3] sm:$0xff]
  %v256 = vld [vmem:[%s0] sm:$0xff]
  %v257 = vld [vmem:[%s0 + $0x8] sm:$0xff]
  %v258 = vld [vmem:[%s0 + $0x10] sm:$0xff]
  %v259 = vld [vmem:[%s0 + $0x18] sm:$0xff]
  %260 = vmatprep.subr.mxu0 %v191
  %261 = vmatpush1.msra.mxu0 %v190
  %262 = vmatprep.subr.mxu0 %v195
  %263 = vmatpush1.msra.mxu0 %v194
  %264 = vmatprep.subr.mxu0 %v199
  %265 = vmatpush1.msra.mxu0 %v198
  %266 = vmatprep.subr.mxu0 %v203
  %267 = vmatpush1.msra.mxu0 %v202
  %268 = vmatprep.subr.mxu0 %v207
  %269 = vmatpush1.msra.mxu0 %v206
  %270 = vmatprep.subr.mxu0 %v211
  %271 = vmatpush1.msra.mxu0 %v210
  %272 = vmatprep.subr.mxu0 %v215
  %273 = vmatpush1.msra.mxu0 %v214
  %274 = vmatprep.subr.mxu0 %v219
  %275 = vmatpush1.msra.mxu0 %v218
  %276 = vmatprep.subr.mxu0 %v223
  %277 = vmatpush1.msra.mxu0 %v222
  %278 = vmatprep.subr.mxu0 %v227
  %279 = vmatpush1.msra.mxu0 %v226
  %280 = vmatprep.subr.mxu0 %v231
  %281 = vmatpush1.msra.mxu0 %v230
  %282 = vmatprep.subr.mxu0 %v235
  %283 = vmatpush1.msra.mxu0 %v234
  %284 = vmatprep.subr.mxu0 %v239
  %285 = vmatpush1.msra.mxu0 %v238
  %286 = vmatprep.subr.mxu0 %v243
  %287 = vmatpush1.msra.mxu0 %v242
  %288 = vmatprep.subr.mxu0 %v247
  %289 = vmatpush1.msra.mxu0 %v246
  %290 = vmatprep.subr.mxu0 %v251
  %291 = vmatpush1.msra.mxu0 %v250
  %292 = vmatprep.subr.mxu0 0.0
  %293 = vmatpush1.msra.mxu0 0.0
  %294 = vmatprep.subr.mxu0 0.0
  %295 = vmatpush1.msra.mxu0 0.0
  %296 = vmatprep.subr.mxu0 0.0
  %297 = vmatpush1.msra.mxu0 0.0
  %298 = vmatprep.subr.mxu0 0.0
  %299 = vmatpush1.msra.mxu0 0.0
  %300 = vmatprep.subr.mxu0 0.0
  %301 = vmatpush1.msra.mxu0 0.0
  %302 = vmatprep.subr.mxu0 0.0
  %303 = vmatpush1.msra.mxu0 0.0
  %304 = vmatprep.subr.mxu0 0.0
  %305 = vmatpush1.msra.mxu0 0.0
  %306 = vmatprep.subr.mxu0 0.0
  %307 = vmatpush1.msra.mxu0 0.0
  %308 = vmatprep.subr.mxu0 0.0
  %309 = vmatpush1.msra.mxu0 0.0
  %310 = vmatprep.subr.mxu0 0.0
  %311 = vmatpush1.msra.mxu0 0.0
  %312 = vmatprep.subr.mxu0 0.0
  %313 = vmatpush1.msra.mxu0 0.0
  %314 = vmatprep.subr.mxu0 0.0
  %315 = vmatpush1.msra.mxu0 0.0
  %316 = vmatprep.subr.mxu0 0.0
  %317 = vmatpush1.msra.mxu0 0.0
  %318 = vmatprep.subr.mxu0 0.0
  %319 = vmatpush1.msra.mxu0 0.0
  %320 = vmatprep.subr.mxu0 0.0
  %321 = vmatpush1.msra.mxu0 0.0
  %322 = vmatprep.subr.mxu0 0.0
  %323 = vmatpush1.msra.mxu0 0.0
  %324 = vmatprep.mubr.f32.mxu0 0.0
  %325 = vmatmul.mubr.f32.gmra.mrb[0].mxu0 %v254
  %v326 = vpop.f32.mrb[0].mxu0
  %v327 = vadd.f32 0.0, %v326
  %v328 = vpop.f32.mrb[0].mxu0
  %v329 = vadd.f32 0.0, %v328
  %330 = vdwg.mxu0
  %331 = vmatprep.subr.mxu0 %v193
  %332 = vmatpush1.msra.mxu0 %v192
  %333 = vmatprep.subr.mxu0 %v197
  %334 = vmatpush1.msra.mxu0 %v196
  %335 = vmatprep.subr.mxu0 %v201
  %336 = vmatpush1.msra.mxu0 %v200
  %337 = vmatprep.subr.mxu0 %v205
  %338 = vmatpush1.msra.mxu0 %v204
  %339 = vmatprep.subr.mxu0 %v209
  %340 = vmatpush1.msra.mxu0 %v208
  %341 = vmatprep.subr.mxu0 %v213
  %342 = vmatpush1.msra.mxu0 %v212
  %343 = vmatprep.subr.mxu0 %v217
  %344 = vmatpush1.msra.mxu0 %v216
  %345 = vmatprep.subr.mxu0 %v221
  %346 = vmatpush1.msra.mxu0 %v220
  %347 = vmatprep.subr.mxu0 %v225
  %348 = vmatpush1.msra.mxu0 %v224
  %349 = vmatprep.subr.mxu0 %v229
  %350 = vmatpush1.msra.mxu0 %v228
  %351 = vmatprep.subr.mxu0 %v233
  %352 = vmatpush1.msra.mxu0 %v232
  %353 = vmatprep.subr.mxu0 %v237
  %354 = vmatpush1.msra.mxu0 %v236
  %355 = vmatprep.subr.mxu0 %v241
  %356 = vmatpush1.msra.mxu0 %v240
  %357 = vmatprep.subr.mxu0 %v245
  %358 = vmatpush1.msra.mxu0 %v244
  %359 = vmatprep.subr.mxu0 %v249
  %360 = vmatpush1.msra.mxu0 %v248
  %361 = vmatprep.subr.mxu0 %v253
  %362 = vmatpush1.msra.mxu0 %v252
  %363 = vmatprep.subr.mxu0 0.0
  %364 = vmatpush1.msra.mxu0 0.0
  %365 = vmatprep.subr.mxu0 0.0
  %366 = vmatpush1.msra.mxu0 0.0
  %367 = vmatprep.subr.mxu0 0.0
  %368 = vmatpush1.msra.mxu0 0.0
  %369 = vmatprep.subr.mxu0 0.0
  %370 = vmatpush1.msra.mxu0 0.0
  %371 = vmatprep.subr.mxu0 0.0
  %372 = vmatpush1.msra.mxu0 0.0
  %373 = vmatprep.subr.mxu0 0.0
  %374 = vmatpush1.msra.mxu0 0.0
  %375 = vmatprep.subr.mxu0 0.0
  %376 = vmatpush1.msra.mxu0 0.0
  %377 = vmatprep.subr.mxu0 0.0
  %378 = vmatpush1.msra.mxu0 0.0
  %379 = vmatprep.subr.mxu0 0.0
  %380 = vmatpush1.msra.mxu0 0.0
  %381 = vmatprep.subr.mxu0 0.0
  %382 = vmatpush1.msra.mxu0 0.0
  %383 = vmatprep.subr.mxu0 0.0
  %384 = vmatpush1.msra.mxu0 0.0
  %385 = vmatprep.subr.mxu0 0.0
  %386 = vmatpush1.msra.mxu0 0.0
  %387 = vmatprep.subr.mxu0 0.0
  %388 = vmatpush1.msra.mxu0 0.0
  %389 = vmatprep.subr.mxu0 0.0
  %390 = vmatpush1.msra.mxu0 0.0
  %391 = vmatprep.subr.mxu0 0.0
  %392 = vmatpush1.msra.mxu0 0.0
  %393 = vmatprep.subr.mxu0 0.0
  %394 = vmatpush1.msra.mxu0 0.0
  %395 = vmatprep.mubr.f32.mxu0 0.0
  %396 = vmatmul.mubr.f32.gmra.mrb[0].mxu0 %v254
  %v397 = vpop.f32.mrb[0].mxu0
  %v398 = vadd.f32 0.0, %v397
  %v399 = vpop.f32.mrb[0].mxu0
  %v400 = vadd.f32 0.0, %v399
  %401 = vdwg.mxu0
  %v402 = vadd.f32 %v256, %v327
  %v403 = vadd.f32 %v257, %v329
  %v404 = vadd.f32 %v258, %v398
  %v405 = vadd.f32 %v259, %v400
  %v406 = vxor.u32 %v402, 2147483648
  %v407 = vmul.f32 %v406, 1.442695
  %v408 = vpow.pop %v407
  %v409 = vadd.f32 %v408, 1.0
  %v410 = vrcp.pop %v409
  %v411 = vmul.f32 1.0, %v410
  %v412 = vxor.u32 %v403, 2147483648
  %v413 = vmul.f32 %v412, 1.442695
  %v414 = vpow.pop %v413
  %v415 = vadd.f32 %v414, 1.0
  %v416 = vrcp.pop %v415
  %v417 = vmul.f32 1.0, %v416
  %v418 = vtanh.pop %v404
  %v419 = vxor.u32 %v405, 2147483648
  %v420 = vmul.f32 %v419, 1.442695
  %v421 = vpow.pop %v420
  %v422 = vadd.f32 %v421, 1.0
  %v423 = vrcp.pop %v422
  %v424 = vmul.f32 1.0, %v423
  %v425 = vmul.f32 %v417, %v255
  %v426 = vmul.f32 %v411, %v418
  %v427 = vadd.f32 %v425, %v426
  %v428 = vtanh.pop %v427
  %v429 = vmul.f32 %v424, %v428
  %430 = vst [vmem:[#allocation2] sm:$0xff] %v429
  %431 = vst [vmem:[#allocation3] sm:$0xff] %v427
  %432 = vst [vmem:[%s2] sm:$0xff] %v429
  %v433 = vld [vmem:[#allocation2] sm:$0xff]
  %v434 = vld [vmem:[#allocation3] sm:$0xff]
  %s435 = scalar_lea.vmem %s0, 32
  %v436 = vld [vmem:[%s435] sm:$0xff]
  %v437 = vld [vmem:[%s435 + $0x8] sm:$0xff]
  %v438 = vld [vmem:[%s435 + $0x10] sm:$0xff]
  %v439 = vld [vmem:[%s435 + $0x18] sm:$0xff]
  %440 = vmatprep.subr.mxu0 %v191
  %441 = vmatpush1.msra.mxu0 %v190
  %442 = vmatprep.subr.mxu0 %v195
  %443 = vmatpush1.msra.mxu0 %v194
  %444 = vmatprep.subr.mxu0 %v199
  %445 = vmatpush1.msra.mxu0 %v198
  %446 = vmatprep.subr.mxu0 %v203
  %447 = vmatpush1.msra.mxu0 %v202
  %448 = vmatprep.subr.mxu0 %v207
  %449 = vmatpush1.msra.mxu0 %v206
  %450 = vmatprep.subr.mxu0 %v211
  %451 = vmatpush1.msra.mxu0 %v210
  %452 = vmatprep.subr.mxu0 %v215
  %453 = vmatpush1.msra.mxu0 %v214
  %454 = vmatprep.subr.mxu0 %v219
  %455 = vmatpush1.msra.mxu0 %v218
  %456 = vmatprep.subr.mxu0 %v223
  %457 = vmatpush1.msra.mxu0 %v222
  %458 = vmatprep.subr.mxu0 %v227
  %459 = vmatpush1.msra.mxu0 %v226
  %460 = vmatprep.subr.mxu0 %v231
  %461 = vmatpush1.msra.mxu0 %v230
  %462 = vmatprep.subr.mxu0 %v235
  %463 = vmatpush1.msra.mxu0 %v234
  %464 = vmatprep.subr.mxu0 %v239
  %465 = vmatpush1.msra.mxu0 %v238
  %466 = vmatprep.subr.mxu0 %v243
  %467 = vmatpush1.msra.mxu0 %v242
  %468 = vmatprep.subr.mxu0 %v247
  %469 = vmatpush1.msra.mxu0 %v246
  %470 = vmatprep.subr.mxu0 %v251
  %471 = vmatpush1.msra.mxu0 %v250
  %472 = vmatprep.subr.mxu0 0.0
  %473 = vmatpush1.msra.mxu0 0.0
  %474 = vmatprep.subr.mxu0 0.0
  %475 = vmatpush1.msra.mxu0 0.0
  %476 = vmatprep.subr.mxu0 0.0
  %477 = vmatpush1.msra.mxu0 0.0
  %478 = vmatprep.subr.mxu0 0.0
  %479 = vmatpush1.msra.mxu0 0.0
  %480 = vmatprep.subr.mxu0 0.0
  %481 = vmatpush1.msra.mxu0 0.0
  %482 = vmatprep.subr.mxu0 0.0
  %483 = vmatpush1.msra.mxu0 0.0
  %484 = vmatprep.subr.mxu0 0.0
  %485 = vmatpush1.msra.mxu0 0.0
  %486 = vmatprep.subr.mxu0 0.0
  %487 = vmatpush1.msra.mxu0 0.0
  %488 = vmatprep.subr.mxu0 0.0
  %489 = vmatpush1.msra.mxu0 0.0
  %490 = vmatprep.subr.mxu0 0.0
  %491 = vmatpush1.msra.mxu0 0.0
  %492 = vmatprep.subr.mxu0 0.0
  %493 = vmatpush1.msra.mxu0 0.0
  %494 = vmatprep.subr.mxu0 0.0
  %495 = vmatpush1.msra.mxu0 0.0
  %496 = vmatprep.subr.mxu0 0.0
  %497 = vmatpush1.msra.mxu0 0.0
  %498 = vmatprep.subr.mxu0 0.0
  %499 = vmatpush1.msra.mxu0 0.0
  %500 = vmatprep.subr.mxu0 0.0
  %501 = vmatpush1.msra.mxu0 0.0
  %502 = vmatprep.subr.mxu0 0.0
  %503 = vmatpush1.msra.mxu0 0.0
  %504 = vmatprep.mubr.f32.mxu0 0.0
  %505 = vmatmul.mubr.f32.gmra.mrb[0].mxu0 %v433
  %v506 = vpop.f32.mrb[0].mxu0
  %v507 = vadd.f32 0.0, %v506
  %v508 = vpop.f32.mrb[0].mxu0
  %v509 = vadd.f32 0.0, %v508
  %510 = vdwg.mxu0
  %511 = vmatprep.subr.mxu0 %v193
  %512 = vmatpush1.msra.mxu0 %v192
  %513 = vmatprep.subr.mxu0 %v197
  %514 = vmatpush1.msra.mxu0 %v196
  %515 = vmatprep.subr.mxu0 %v201
  %516 = vmatpush1.msra.mxu0 %v200
  %517 = vmatprep.subr.mxu0 %v205
  %518 = vmatpush1.msra.mxu0 %v204
  %519 = vmatprep.subr.mxu0 %v209
  %520 = vmatpush1.msra.mxu0 %v208
  %521 = vmatprep.subr.mxu0 %v213
  %522 = vmatpush1.msra.mxu0 %v212
  %523 = vmatprep.subr.mxu0 %v217
  %524 = vmatpush1.msra.mxu0 %v216
  %525 = vmatprep.subr.mxu0 %v221
  %526 = vmatpush1.msra.mxu0 %v220
  %527 = vmatprep.subr.mxu0 %v225
  %528 = vmatpush1.msra.mxu0 %v224
  %529 = vmatprep.subr.mxu0 %v229
  %530 = vmatpush1.msra.mxu0 %v228
  %531 = vmatprep.subr.mxu0 %v233
  %532 = vmatpush1.msra.mxu0 %v232
  %533 = vmatprep.subr.mxu0 %v237
  %534 = vmatpush1.msra.mxu0 %v236
  %535 = vmatprep.subr.mxu0 %v241
  %536 = vmatpush1.msra.mxu0 %v240
  %537 = vmatprep.subr.mxu0 %v245
  %538 = vmatpush1.msra.mxu0 %v244
  %539 = vmatprep.subr.mxu0 %v249
  %540 = vmatpush1.msra.mxu0 %v248
  %541 = vmatprep.subr.mxu0 %v253
  %542 = vmatpush1.msra.mxu0 %v252
  %543 = vmatprep.subr.mxu0 0.0
  %544 = vmatpush1.msra.mxu0 0.0
  %545 = vmatprep.subr.mxu0 0.0
  %546 = vmatpush1.msra.mxu0 0.0
  %547 = vmatprep.subr.mxu0 0.0
  %548 = vmatpush1.msra.mxu0 0.0
  %549 = vmatprep.subr.mxu0 0.0
  %550 = vmatpush1.msra.mxu0 0.0
  %551 = vmatprep.subr.mxu0 0.0
  %552 = vmatpush1.msra.mxu0 0.0
  %553 = vmatprep.subr.mxu0 0.0
  %554 = vmatpush1.msra.mxu0 0.0
  %555 = vmatprep.subr.mxu0 0.0
  %556 = vmatpush1.msra.mxu0 0.0
  %557 = vmatprep.subr.mxu0 0.0
  %558 = vmatpush1.msra.mxu0 0.0
  %559 = vmatprep.subr.mxu0 0.0
  %560 = vmatpush1.msra.mxu0 0.0
  %561 = vmatprep.subr.mxu0 0.0
  %562 = vmatpush1.msra.mxu0 0.0
  %563 = vmatprep.subr.mxu0 0.0
  %564 = vmatpush1.msra.mxu0 0.0
  %565 = vmatprep.subr.mxu0 0.0
  %566 = vmatpush1.msra.mxu0 0.0
  %567 = vmatprep.subr.mxu0 0.0
  %568 = vmatpush1.msra.mxu0 0.0
  %569 = vmatprep.subr.mxu0 0.0
  %570 = vmatpush1.msra.mxu0 0.0
  %571 = vmatprep.subr.mxu0 0.0
  %572 = vmatpush1.msra.mxu0 0.0
  %573 = vmatprep.subr.mxu0 0.0
  %574 = vmatpush1.msra.mxu0 0.0
  %575 = vmatprep.mubr.f32.mxu0 0.0
  %576 = vmatmul.mubr.f32.gmra.mrb[0].mxu0 %v433
  %v577 = vpop.f32.mrb[0].mxu0
  %v578 = vadd.f32 0.0, %v577
  %v579 = vpop.f32.mrb[0].mxu0
  %v580 = vadd.f32 0.0, %v579
  %581 = vdwg.mxu0
  %v582 = vadd.f32 %v436, %v507
  %v583 = vadd.f32 %v437, %v509
  %v584 = vadd.f32 %v438, %v578
  %v585 = vadd.f32 %v439, %v580
  %v586 = vxor.u32 %v582, 2147483648
  %v587 = vmul.f32 %v586, 1.442695
  %v588 = vpow.pop %v587
  %v589 = vadd.f32 %v588, 1.0
  %v590 = vrcp.pop %v589
  %v591 = vmul.f32 1.0, %v590
  %v592 = vxor.u32 %v583, 2147483648
  %v593 = vmul.f32 %v592, 1.442695
  %v594 = vpow.pop %v593
  %v595 = vadd.f32 %v594, 1.0
  %v596 = vrcp.pop %v595
  %v597 = vmul.f32 1.0, %v596
  %v598 = vtanh.pop %v584
  %v599 = vxor.u32 %v585, 2147483648
  %v600 = vmul.f32 %v599, 1.442695
  %v601 = vpow.pop %v600
  %v602 = vadd.f32 %v601, 1.0
  %v603 = vrcp.pop %v602
  %v604 = vmul.f32 1.0, %v603
  %v605 = vmul.f32 %v597, %v434
  %v606 = vmul.f32 %v591, %v598
  %v607 = vadd.f32 %v605, %v606
  %v608 = vtanh.pop %v607
  %v609 = vmul.f32 %v604, %v608
  %610 = vst [vmem:[#allocation2] sm:$0xff] %v609
  %611 = vst [vmem:[#allocation3] sm:$0xff] %v607
  %s612 = scalar_lea.vmem %s2, 8
  %613 = vst [vmem:[%s612] sm:$0xff] %v609
  %v614 = vld [vmem:[#allocation2] sm:$0xff]
  %v615 = vld [vmem:[#allocation3] sm:$0xff]
  %s616 = scalar_lea.vmem %s0, 64
  %v617 = vld [vmem:[%s616] sm:$0xff]
  %v618 = vld [vmem:[%s616 + $0x8] sm:$0xff]
  %v619 = vld [vmem:[%s616 + $0x10] sm:$0xff]
  %v620 = vld [vmem:[%s616 + $0x18] sm:$0xff]
  %621 = vmatprep.subr.mxu0 %v191
  %622 = vmatpush1.msra.mxu0 %v190
  %623 = vmatprep.subr.mxu0 %v195
  %624 = vmatpush1.msra.mxu0 %v194
  %625 = vmatprep.subr.mxu0 %v199
  %626 = vmatpush1.msra.mxu0 %v198
  %627 = vmatprep.subr.mxu0 %v203
  %628 = vmatpush1.msra.mxu0 %v202
  %629 = vmatprep.subr.mxu0 %v207
  %630 = vmatpush1.msra.mxu0 %v206
  %631 = vmatprep.subr.mxu0 %v211
  %632 = vmatpush1.msra.mxu0 %v210
  %633 = vmatprep.subr.mxu0 %v215
  %634 = vmatpush1.msra.mxu0 %v214
  %635 = vmatprep.subr.mxu0 %v219
  %636 = vmatpush1.msra.mxu0 %v218
  %637 = vmatprep.subr.mxu0 %v223
  %638 = vmatpush1.msra.mxu0 %v222
  %639 = vmatprep.subr.mxu0 %v227
  %640 = vmatpush1.msra.mxu0 %v226
  %641 = vmatprep.subr.mxu0 %v231
  %642 = vmatpush1.msra.mxu0 %v230
  %643 = vmatprep.subr.mxu0 %v235
  %644 = vmatpush1.msra.mxu0 %v234
  %645 = vmatprep.subr.mxu0 %v239
  %646 = vmatpush1.msra.mxu0 %v238
  %647 = vmatprep.subr.mxu0 %v243
  %648 = vmatpush1.msra.mxu0 %v242
  %649 = vmatprep.subr.mxu0 %v247
  %650 = vmatpush1.msra.mxu0 %v246
  %651 = vmatprep.subr.mxu0 %v251
  %652 = vmatpush1.msra.mxu0 %v250
  %653 = vmatprep.subr.mxu0 0.0
  %654 = vmatpush1.msra.mxu0 0.0
  %655 = vmatprep.subr.mxu0 0.0
  %656 = vmatpush1.msra.mxu0 0.0
  %657 = vmatprep.subr.mxu0 0.0
  %658 = vmatpush1.msra.mxu0 0.0
  %659 = vmatprep.subr.mxu0 0.0
  %660 = vmatpush1.msra.mxu0 0.0
  %661 = vmatprep.subr.mxu0 0.0
  %662 = vmatpush1.msra.mxu0 0.0
  %663 = vmatprep.subr.mxu0 0.0
  %664 = vmatpush1.msra.mxu0 0.0
  %665 = vmatprep.subr.mxu0 0.0
  %666 = vmatpush1.msra.mxu0 0.0
  %667 = vmatprep.subr.mxu0 0.0
  %668 = vmatpush1.msra.mxu0 0.0
  %669 = vmatprep.subr.mxu0 0.0
  %670 = vmatpush1.msra.mxu0 0.0
  %671 = vmatprep.subr.mxu0 0.0
  %672 = vmatpush1.msra.mxu0 0.0
  %673 = vmatprep.subr.mxu0 0.0
  %674 = vmatpush1.msra.mxu0 0.0
  %675 = vmatprep.subr.mxu0 0.0
  %676 = vmatpush1.msra.mxu0 0.0
  %677 = vmatprep.subr.mxu0 0.0
  %678 = vmatpush1.msra.mxu0 0.0
  %679 = vmatprep.subr.mxu0 0.0
  %680 = vmatpush1.msra.mxu0 0.0
  %681 = vmatprep.subr.mxu0 0.0
  %682 = vmatpush1.msra.mxu0 0.0
  %683 = vmatprep.subr.mxu0 0.0
  %684 = vmatpush1.msra.mxu0 0.0
  %685 = vmatprep.mubr.f32.mxu0 0.0
  %686 = vmatmul.mubr.f32.gmra.mrb[0].mxu0 %v614
  %v687 = vpop.f32.mrb[0].mxu0
  %v688 = vadd.f32 0.0, %v687
  %v689 = vpop.f32.mrb[0].mxu0
  %v690 = vadd.f32 0.0, %v689
  %691 = vdwg.mxu0
  %692 = vmatprep.subr.mxu0 %v193
  %693 = vmatpush1.msra.mxu0 %v192
  %694 = vmatprep.subr.mxu0 %v197
  %695 = vmatpush1.msra.mxu0 %v196
  %696 = vmatprep.subr.mxu0 %v201
  %697 = vmatpush1.msra.mxu0 %v200
  %698 = vmatprep.subr.mxu0 %v205
  %699 = vmatpush1.msra.mxu0 %v204
  %700 = vmatprep.subr.mxu0 %v209
  %701 = vmatpush1.msra.mxu0 %v208
  %702 = vmatprep.subr.mxu0 %v213
  %703 = vmatpush1.msra.mxu0 %v212
  %704 = vmatprep.subr.mxu0 %v217
  %705 = vmatpush1.msra.mxu0 %v216
  %706 = vmatprep.subr.mxu0 %v221
  %707 = vmatpush1.msra.mxu0 %v220
  %708 = vmatprep.subr.mxu0 %v225
  %709 = vmatpush1.msra.mxu0 %v224
  %710 = vmatprep.subr.mxu0 %v229
  %711 = vmatpush1.msra.mxu0 %v228
  %712 = vmatprep.subr.mxu0 %v233
  %713 = vmatpush1.msra.mxu0 %v232
  %714 = vmatprep.subr.mxu0 %v237
  %715 = vmatpush1.msra.mxu0 %v236
  %716 = vmatprep.subr.mxu0 %v241
  %717 = vmatpush1.msra.mxu0 %v240
  %718 = vmatprep.subr.mxu0 %v245
  %719 = vmatpush1.msra.mxu0 %v244
  %720 = vmatprep.subr.mxu0 %v249
  %721 = vmatpush1.msra.mxu0 %v248
  %722 = vmatprep.subr.mxu0 %v253
  %723 = vmatpush1.msra.mxu0 %v252
  %724 = vmatprep.subr.mxu0 0.0
  %725 = vmatpush1.msra.mxu0 0.0
  %726 = vmatprep.subr.mxu0 0.0
  %727 = vmatpush1.msra.mxu0 0.0
  %728 = vmatprep.subr.mxu0 0.0
  %729 = vmatpush1.msra.mxu0 0.0
  %730 = vmatprep.subr.mxu0 0.0
  %731 = vmatpush1.msra.mxu0 0.0
  %732 = vmatprep.subr.mxu0 0.0
  %733 = vmatpush1.msra.mxu0 0.0
  %734 = vmatprep.subr.mxu0 0.0
  %735 = vmatpush1.msra.mxu0 0.0
  %736 = vmatprep.subr.mxu0 0.0
  %737 = vmatpush1.msra.mxu0 0.0
  %738 = vmatprep.subr.mxu0 0.0
  %739 = vmatpush1.msra.mxu0 0.0
  %740 = vmatprep.subr.mxu0 0.0
  %741 = vmatpush1.msra.mxu0 0.0
  %742 = vmatprep.subr.mxu0 0.0
  %743 = vmatpush1.msra.mxu0 0.0
  %744 = vmatprep.subr.mxu0 0.0
  %745 = vmatpush1.msra.mxu0 0.0
  %746 = vmatprep.subr.mxu0 0.0
  %747 = vmatpush1.msra.mxu0 0.0
  %748 = vmatprep.subr.mxu0 0.0
  %749 = vmatpush1.msra.mxu0 0.0
  %750 = vmatprep.subr.mxu0 0.0
  %751 = vmatpush1.msra.mxu0 0.0
  %752 = vmatprep.subr.mxu0 0.0
  %753 = vmatpush1.msra.mxu0 0.0
  %754 = vmatprep.subr.mxu0 0.0
  %755 = vmatpush1.msra.mxu0 0.0
  %756 = vmatprep.mubr.f32.mxu0 0.0
  %757 = vmatmul.mubr.f32.gmra.mrb[0].mxu0 %v614
  %v758 = vpop.f32.mrb[0].mxu0
  %v759 = vadd.f32 0.0, %v758
  %v760 = vpop.f32.mrb[0].mxu0
  %v761 = vadd.f32 0.0, %v760
  %762 = vdwg.mxu0
  %v763 = vadd.f32 %v617, %v688
  %v764 = vadd.f32 %v618, %v690
  %v765 = vadd.f32 %v619, %v759
  %v766 = vadd.f32 %v620, %v761
  %v767 = vxor.u32 %v763, 2147483648
  %v768 = vmul.f32 %v767, 1.442695
  %v769 = vpow.pop %v768
  %v770 = vadd.f32 %v769, 1.0
  %v771 = vrcp.pop %v770
  %v772 = vmul.f32 1.0, %v771
  %v773 = vxor.u32 %v764, 2147483648
  %v774 = vmul.f32 %v773, 1.442695
  %v775 = vpow.pop %v774
  %v776 = vadd.f32 %v775, 1.0
  %v777 = vrcp.pop %v776
  %v778 = vmul.f32 1.0, %v777
  %v779 = vtanh.pop %v765
  %v780 = vxor.u32 %v766, 2147483648
  %v781 = vmul.f32 %v780, 1.442695
  %v782 = vpow.pop %v781
  %v783 = vadd.f32 %v782, 1.0
  %v784 = vrcp.pop %v783
  %v785 = vmul.f32 1.0, %v784
  %v786 = vmul.f32 %v778, %v615
  %v787 = vmul.f32 %v772, %v779
  %v788 = vadd.f32 %v786, %v787
  %v789 = vtanh.pop %v788
  %v790 = vmul.f32 %v785, %v789
  %791 = vst [vmem:[#allocation2] sm:$0xff] %v790
  %792 = vst [vmem:[#allocation3] sm:$0xff] %v788
  %s793 = scalar_lea.vmem %s2, 16
  %794 = vst [vmem:[%s793] sm:$0xff] %v790
  %v795 = vld [vmem:[#allocation2] sm:$0xff]
  %v796 = vld [vmem:[#allocation3] sm:$0xff]
  %s797 = scalar_lea.vmem %s0, 96
  %v798 = vld [vmem:[%s797] sm:$0xff]
  %v799 = vld [vmem:[%s797 + $0x8] sm:$0xff]
  %v800 = vld [vmem:[%s797 + $0x10] sm:$0xff]
  %v801 = vld [vmem:[%s797 + $0x18] sm:$0xff]
  %802 = vmatprep.subr.mxu0 %v191
  %803 = vmatpush1.msra.mxu0 %v190
  %804 = vmatprep.subr.mxu0 %v195
  %805 = vmatpush1.msra.mxu0 %v194
  %806 = vmatprep.subr.mxu0 %v199
  %807 = vmatpush1.msra.mxu0 %v198
  %808 = vmatprep.subr.mxu0 %v203
  %809 = vmatpush1.msra.mxu0 %v202
  %810 = vmatprep.subr.mxu0 %v207
  %811 = vmatpush1.msra.mxu0 %v206
  %812 = vmatprep.subr.mxu0 %v211
  %813 = vmatpush1.msra.mxu0 %v210
  %814 = vmatprep.subr.mxu0 %v215
  %815 = vmatpush1.msra.mxu0 %v214
  %816 = vmatprep.subr.mxu0 %v219
  %817 = vmatpush1.msra.mxu0 %v218
  %818 = vmatprep.subr.mxu0 %v223
  %819 = vmatpush1.msra.mxu0 %v222
  %820 = vmatprep.subr.mxu0 %v227
  %821 = vmatpush1.msra.mxu0 %v226
  %822 = vmatprep.subr.mxu0 %v231
  %823 = vmatpush1.msra.mxu0 %v230
  %824 = vmatprep.subr.mxu0 %v235
  %825 = vmatpush1.msra.mxu0 %v234
  %826 = vmatprep.subr.mxu0 %v239
  %827 = vmatpush1.msra.mxu0 %v238
  %828 = vmatprep.subr.mxu0 %v243
  %829 = vmatpush1.msra.mxu0 %v242
  %830 = vmatprep.subr.mxu0 %v247
  %831 = vmatpush1.msra.mxu0 %v246
  %832 = vmatprep.subr.mxu0 %v251
  %833 = vmatpush1.msra.mxu0 %v250
  %834 = vmatprep.subr.mxu0 0.0
  %835 = vmatpush1.msra.mxu0 0.0
  %836 = vmatprep.subr.mxu0 0.0
  %837 = vmatpush1.msra.mxu0 0.0
  %838 = vmatprep.subr.mxu0 0.0
  %839 = vmatpush1.msra.mxu0 0.0
  %840 = vmatprep.subr.mxu0 0.0
  %841 = vmatpush1.msra.mxu0 0.0
  %842 = vmatprep.subr.mxu0 0.0
  %843 = vmatpush1.msra.mxu0 0.0
  %844 = vmatprep.subr.mxu0 0.0
  %845 = vmatpush1.msra.mxu0 0.0
  %846 = vmatprep.subr.mxu0 0.0
  %847 = vmatpush1.msra.mxu0 0.0
  %848 = vmatprep.subr.mxu0 0.0
  %849 = vmatpush1.msra.mxu0 0.0
  %850 = vmatprep.subr.mxu0 0.0
  %851 = vmatpush1.msra.mxu0 0.0
  %852 = vmatprep.subr.mxu0 0.0
  %853 = vmatpush1.msra.mxu0 0.0
  %854 = vmatprep.subr.mxu0 0.0
  %855 = vmatpush1.msra.mxu0 0.0
  %856 = vmatprep.subr.mxu0 0.0
  %857 = vmatpush1.msra.mxu0 0.0
  %858 = vmatprep.subr.mxu0 0.0
  %859 = vmatpush1.msra.mxu0 0.0
  %860 = vmatprep.subr.mxu0 0.0
  %861 = vmatpush1.msra.mxu0 0.0
  %862 = vmatprep.subr.mxu0 0.0
  %863 = vmatpush1.msra.mxu0 0.0
  %864 = vmatprep.subr.mxu0 0.0
  %865 = vmatpush1.msra.mxu0 0.0
  %866 = vmatprep.mubr.f32.mxu0 0.0
  %867 = vmatmul.mubr.f32.gmra.mrb[0].mxu0 %v795
  %v868 = vpop.f32.mrb[0].mxu0
  %v869 = vadd.f32 0.0, %v868
  %v870 = vpop.f32.mrb[0].mxu0
  %v871 = vadd.f32 0.0, %v870
  %872 = vdwg.mxu0
  %873 = vmatprep.subr.mxu0 %v193
  %874 = vmatpush1.msra.mxu0 %v192
  %875 = vmatprep.subr.mxu0 %v197
  %876 = vmatpush1.msra.mxu0 %v196
  %877 = vmatprep.subr.mxu0 %v201
  %878 = vmatpush1.msra.mxu0 %v200
  %879 = vmatprep.subr.mxu0 %v205
  %880 = vmatpush1.msra.mxu0 %v204
  %881 = vmatprep.subr.mxu0 %v209
  %882 = vmatpush1.msra.mxu0 %v208
  %883 = vmatprep.subr.mxu0 %v213
  %884 = vmatpush1.msra.mxu0 %v212
  %885 = vmatprep.subr.mxu0 %v217
  %886 = vmatpush1.msra.mxu0 %v216
  %887 = vmatprep.subr.mxu0 %v221
  %888 = vmatpush1.msra.mxu0 %v220
  %889 = vmatprep.subr.mxu0 %v225
  %890 = vmatpush1.msra.mxu0 %v224
  %891 = vmatprep.subr.mxu0 %v229
  %892 = vmatpush1.msra.mxu0 %v228
  %893 = vmatprep.subr.mxu0 %v233
  %894 = vmatpush1.msra.mxu0 %v232
  %895 = vmatprep.subr.mxu0 %v237
  %896 = vmatpush1.msra.mxu0 %v236
  %897 = vmatprep.subr.mxu0 %v241
  %898 = vmatpush1.msra.mxu0 %v240
  %899 = vmatprep.subr.mxu0 %v245
  %900 = vmatpush1.msra.mxu0 %v244
  %901 = vmatprep.subr.mxu0 %v249
  %902 = vmatpush1.msra.mxu0 %v248
  %903 = vmatprep.subr.mxu0 %v253
  %904 = vmatpush1.msra.mxu0 %v252
  %905 = vmatprep.subr.mxu0 0.0
  %906 = vmatpush1.msra.mxu0 0.0
  %907 = vmatprep.subr.mxu0 0.0
  %908 = vmatpush1.msra.mxu0 0.0
  %909 = vmatprep.subr.mxu0 0.0
  %910 = vmatpush1.msra.mxu0 0.0
  %911 = vmatprep.subr.mxu0 0.0
  %912 = vmatpush1.msra.mxu0 0.0
  %913 = vmatprep.subr.mxu0 0.0
  %914 = vmatpush1.msra.mxu0 0.0
  %915 = vmatprep.subr.mxu0 0.0
  %916 = vmatpush1.msra.mxu0 0.0
  %917 = vmatprep.subr.mxu0 0.0
  %918 = vmatpush1.msra.mxu0 0.0
  %919 = vmatprep.subr.mxu0 0.0
  %920 = vmatpush1.msra.mxu0 0.0
  %921 = vmatprep.subr.mxu0 0.0
  %922 = vmatpush1.msra.mxu0 0.0
  %923 = vmatprep.subr.mxu0 0.0
  %924 = vmatpush1.msra.mxu0 0.0
  %925 = vmatprep.subr.mxu0 0.0
  %926 = vmatpush1.msra.mxu0 0.0
  %927 = vmatprep.subr.mxu0 0.0
  %928 = vmatpush1.msra.mxu0 0.0
  %929 = vmatprep.subr.mxu0 0.0
  %930 = vmatpush1.msra.mxu0 0.0
  %931 = vmatprep.subr.mxu0 0.0
  %932 = vmatpush1.msra.mxu0 0.0
  %933 = vmatprep.subr.mxu0 0.0
  %934 = vmatpush1.msra.mxu0 0.0
  %935 = vmatprep.subr.mxu0 0.0
  %936 = vmatpush1.msra.mxu0 0.0
  %937 = vmatprep.mubr.f32.mxu0 0.0
  %938 = vmatmul.mubr.f32.gmra.mrb[0].mxu0 %v795
  %v939 = vpop.f32.mrb[0].mxu0
  %v940 = vadd.f32 0.0, %v939
  %v941 = vpop.f32.mrb[0].mxu0
  %v942 = vadd.f32 0.0, %v941
  %943 = vdwg.mxu0
  %v944 = vadd.f32 %v798, %v869
  %v945 = vadd.f32 %v799, %v871
  %v946 = vadd.f32 %v800, %v940
  %v947 = vadd.f32 %v801, %v942
  %v948 = vxor.u32 %v944, 2147483648
  %v949 = vmul.f32 %v948, 1.442695
  %v950 = vpow.pop %v949
  %v951 = vadd.f32 %v950, 1.0
  %v952 = vrcp.pop %v951
  %v953 = vmul.f32 1.0, %v952
  %v954 = vxor.u32 %v945, 2147483648
  %v955 = vmul.f32 %v954, 1.442695
  %v956 = vpow.pop %v955
  %v957 = vadd.f32 %v956, 1.0
  %v958 = vrcp.pop %v957
  %v959 = vmul.f32 1.0, %v958
  %v960 = vtanh.pop %v946
  %v961 = vxor.u32 %v947, 2147483648
  %v962 = vmul.f32 %v961, 1.442695
  %v963 = vpow.pop %v962
  %v964 = vadd.f32 %v963, 1.0
  %v965 = vrcp.pop %v964
  %v966 = vmul.f32 1.0, %v965
  %v967 = vmul.f32 %v959, %v796
  %v968 = vmul.f32 %v953, %v960
  %v969 = vadd.f32 %v967, %v968
  %v970 = vtanh.pop %v969
  %v971 = vmul.f32 %v966, %v970
  %972 = vst [vmem:[#allocation2] sm:$0xff] %v971
  %973 = vst [vmem:[#allocation3] sm:$0xff] %v969
  %s974 = scalar_lea.vmem %s2, 24
  %975 = vst [vmem:[%s974] sm:$0xff] %v971
  %v976 = vld [vmem:[#allocation2] sm:$0xff]
  %v977 = vld [vmem:[#allocation3] sm:$0xff]
  %s978 = scalar_lea.vmem %s0, 128
  %v979 = vld [vmem:[%s978] sm:$0xff]
  %v980 = vld [vmem:[%s978 + $0x8] sm:$0xff]
  %v981 = vld [vmem:[%s978 + $0x10] sm:$0xff]
  %v982 = vld [vmem:[%s978 + $0x18] sm:$0xff]
  %983 = vmatprep.subr.mxu0 %v191
  %984 = vmatpush1.msra.mxu0 %v190
  %985 = vmatprep.subr.mxu0 %v195
  %986 = vmatpush1.msra.mxu0 %v194
  %987 = vmatprep.subr.mxu0 %v199
  %988 = vmatpush1.msra.mxu0 %v198
  %989 = vmatprep.subr.mxu0 %v203
  %990 = vmatpush1.msra.mxu0 %v202
  %991 = vmatprep.subr.mxu0 %v207
  %992 = vmatpush1.msra.mxu0 %v206
  %993 = vmatprep.subr.mxu0 %v211
  %994 = vmatpush1.msra.mxu0 %v210
  %995 = vmatprep.subr.mxu0 %v215
  %996 = vmatpush1.msra.mxu0 %v214
  %997 = vmatprep.subr.mxu0 %v219
  %998 = vmatpush1.msra.mxu0 %v218
  %999 = vmatprep.subr.mxu0 %v223
  %1000 = vmatpush1.msra.mxu0 %v222
  %1001 = vmatprep.subr.mxu0 %v227
  %1002 = vmatpush1.msra.mxu0 %v226
  %1003 = vmatprep.subr.mxu0 %v231
  %1004 = vmatpush1.msra.mxu0 %v230
  %1005 = vmatprep.subr.mxu0 %v235
  %1006 = vmatpush1.msra.mxu0 %v234
  %1007 = vmatprep.subr.mxu0 %v239
  %1008 = vmatpush1.msra.mxu0 %v238
  %1009 = vmatprep.subr.mxu0 %v243
  %1010 = vmatpush1.msra.mxu0 %v242
  %1011 = vmatprep.subr.mxu0 %v247
  %1012 = vmatpush1.msra.mxu0 %v246
  %1013 = vmatprep.subr.mxu0 %v251
  %1014 = vmatpush1.msra.mxu0 %v250
  %1015 = vmatprep.subr.mxu0 0.0
  %1016 = vmatpush1.msra.mxu0 0.0
  %1017 = vmatprep.subr.mxu0 0.0
  %1018 = vmatpush1.msra.mxu0 0.0
  %1019 = vmatprep.subr.mxu0 0.0
  %1020 = vmatpush1.msra.mxu0 0.0
  %1021 = vmatprep.subr.mxu0 0.0
  %1022 = vmatpush1.msra.mxu0 0.0
  %1023 = vmatprep.subr.mxu0 0.0
  %1024 = vmatpush1.msra.mxu0 0.0
  %1025 = vmatprep.subr.mxu0 0.0
  %1026 = vmatpush1.msra.mxu0 0.0
  %1027 = vmatprep.subr.mxu0 0.0
  %1028 = vmatpush1.msra.mxu0 0.0
  %1029 = vmatprep.subr.mxu0 0.0
  %1030 = vmatpush1.msra.mxu0 0.0
  %1031 = vmatprep.subr.mxu0 0.0
  %1032 = vmatpush1.msra.mxu0 0.0
  %1033 = vmatprep.subr.mxu0 0.0
  %1034 = vmatpush1.msra.mxu0 0.0
  %1035 = vmatprep.subr.mxu0 0.0
  %1036 = vmatpush1.msra.mxu0 0.0
  %1037 = vmatprep.subr.mxu0 0.0
  %1038 = vmatpush1.msra.mxu0 0.0
  %1039 = vmatprep.subr.mxu0 0.0
  %1040 = vmatpush1.msra.mxu0 0.0
  %1041 = vmatprep.subr.mxu0 0.0
  %1042 = vmatpush1.msra.mxu0 0.0
  %1043 = vmatprep.subr.mxu0 0.0
  %1044 = vmatpush1.msra.mxu0 0.0
  %1045 = vmatprep.subr.mxu0 0.0
  %1046 = vmatpush1.msra.mxu0 0.0
  %1047 = vmatprep.mubr.f32.mxu0 0.0
  %1048 = vmatmul.mubr.f32.gmra.mrb[0].mxu0 %v976
  %v1049 = vpop.f32.mrb[0].mxu0
  %v1050 = vadd.f32 0.0, %v1049
  %v1051 = vpop.f32.mrb[0].mxu0
  %v1052 = vadd.f32 0.0, %v1051
  %1053 = vdwg.mxu0
  %1054 = vmatprep.subr.mxu0 %v193
  %1055 = vmatpush1.msra.mxu0 %v192
  %1056 = vmatprep.subr.mxu0 %v197
  %1057 = vmatpush1.msra.mxu0 %v196
  %1058 = vmatprep.subr.mxu0 %v201
  %1059 = vmatpush1.msra.mxu0 %v200
  %1060 = vmatprep.subr.mxu0 %v205
  %1061 = vmatpush1.msra.mxu0 %v204
  %1062 = vmatprep.subr.mxu0 %v209
  %1063 = vmatpush1.msra.mxu0 %v208
  %1064 = vmatprep.subr.mxu0 %v213
  %1065 = vmatpush1.msra.mxu0 %v212
  %1066 = vmatprep.subr.mxu0 %v217
  %1067 = vmatpush1.msra.mxu0 %v216
  %1068 = vmatprep.subr.mxu0 %v221
  %1069 = vmatpush1.msra.mxu0 %v220
  %1070 = vmatprep.subr.mxu0 %v225
  %1071 = vmatpush1.msra.mxu0 %v224
  %1072 = vmatprep.subr.mxu0 %v229
  %1073 = vmatpush1.msra.mxu0 %v228
  %1074 = vmatprep.subr.mxu0 %v233
  %1075 = vmatpush1.msra.mxu0 %v232
  %1076 = vmatprep.subr.mxu0 %v237
  %1077 = vmatpush1.msra.mxu0 %v236
  %1078 = vmatprep.subr.mxu0 %v241
  %1079 = vmatpush1.msra.mxu0 %v240
  %1080 = vmatprep.subr.mxu0 %v245
  %1081 = vmatpush1.msra.mxu0 %v244
  %1082 = vmatprep.subr.mxu0 %v249
  %1083 = vmatpush1.msra.mxu0 %v248
  %1084 = vmatprep.subr.mxu0 %v253
  %1085 = vmatpush1.msra.mxu0 %v252
  %1086 = vmatprep.subr.mxu0 0.0
  %1087 = vmatpush1.msra.mxu0 0.0
  %1088 = vmatprep.subr.mxu0 0.0
  %1089 = vmatpush1.msra.mxu0 0.0
  %1090 = vmatprep.subr.mxu0 0.0
  %1091 = vmatpush1.msra.mxu0 0.0
  %1092 = vmatprep.subr.mxu0 0.0
  %1093 = vmatpush1.msra.mxu0 0.0
  %1094 = vmatprep.subr.mxu0 0.0
  %1095 = vmatpush1.msra.mxu0 0.0
  %1096 = vmatprep.subr.mxu0 0.0
  %1097 = vmatpush1.msra.mxu0 0.0
  %1098 = vmatprep.subr.mxu0 0.0
  %1099 = vmatpush1.msra.mxu0 0.0
  %1100 = vmatprep.subr.mxu0 0.0
  %1101 = vmatpush1.msra.mxu0 0.0
  %1102 = vmatprep.subr.mxu0 0.0
  %1103 = vmatpush1.msra.mxu0 0.0
  %1104 = vmatprep.subr.mxu0 0.0
  %1105 = vmatpush1.msra.mxu0 0.0
  %1106 = vmatprep.subr.mxu0 0.0
  %1107 = vmatpush1.msra.mxu0 0.0
  %1108 = vmatprep.subr.mxu0 0.0
  %1109 = vmatpush1.msra.mxu0 0.0
  %1110 = vmatprep.subr.mxu0 0.0
  %1111 = vmatpush1.msra.mxu0 0.0
  %1112 = vmatprep.subr.mxu0 0.0
  %1113 = vmatpush1.msra.mxu0 0.0
  %1114 = vmatprep.subr.mxu0 0.0
  %1115 = vmatpush1.msra.mxu0 0.0
  %1116 = vmatprep.subr.mxu0 0.0
  %1117 = vmatpush1.msra.mxu0 0.0
  %1118 = vmatprep.mubr.f32.mxu0 0.0
  %1119 = vmatmul.mubr.f32.gmra.mrb[0].mxu0 %v976
  %v1120 = vpop.f32.mrb[0].mxu0
  %v1121 = vadd.f32 0.0, %v1120
  %v1122 = vpop.f32.mrb[0].mxu0
  %v1123 = vadd.f32 0.0, %v1122
  %1124 = vdwg.mxu0
  %v1125 = vadd.f32 %v979, %v1050
  %v1126 = vadd.f32 %v980, %v1052
  %v1127 = vadd.f32 %v981, %v1121
  %v1128 = vadd.f32 %v982, %v1123
  %v1129 = vxor.u32 %v1125, 2147483648
  %v1130 = vmul.f32 %v1129, 1.442695
  %v1131 = vpow.pop %v1130
  %v1132 = vadd.f32 %v1131, 1.0
  %v1133 = vrcp.pop %v1132
  %v1134 = vmul.f32 1.0, %v1133
  %v1135 = vxor.u32 %v1126, 2147483648
  %v1136 = vmul.f32 %v1135, 1.442695
  %v1137 = vpow.pop %v1136
  %v1138 = vadd.f32 %v1137, 1.0
  %v1139 = vrcp.pop %v1138
  %v1140 = vmul.f32 1.0, %v1139
  %v1141 = vtanh.pop %v1127
  %v1142 = vxor.u32 %v1128, 2147483648
  %v1143 = vmul.f32 %v1142, 1.442695
  %v1144 = vpow.pop %v1143
  %v1145 = vadd.f32 %v1144, 1.0
  %v1146 = vrcp.pop %v1145
  %v1147 = vmul.f32 1.0, %v1146
  %v1148 = vmul.f32 %v1140, %v977
  %v1149 = vmul.f32 %v1134, %v1141
  %v1150 = vadd.f32 %v1148, %v1149
  %v1151 = vtanh.pop %v1150
  %v1152 = vmul.f32 %v1147, %v1151
  %1153 = vst [vmem:[#allocation2] sm:$0xff] %v1152
  %1154 = vst [vmem:[#allocation3] sm:$0xff] %v1150
  %s1155 = scalar_lea.vmem %s2, 32
  %1156 = vst [vmem:[%s1155] sm:$0xff] %v1152
  %v1157 = vld [vmem:[#allocation2] sm:$0xff]
  %v1158 = vld [vmem:[#allocation3] sm:$0xff]
  %s1159 = scalar_lea.vmem %s0, 160
  %v1160 = vld [vmem:[%s1159] sm:$0xff]
  %v1161 = vld [vmem:[%s1159 + $0x8] sm:$0xff]
  %v1162 = vld [vmem:[%s1159 + $0x10] sm:$0xff]
  %v1163 = vld [vmem:[%s1159 + $0x18] sm:$0xff]
  %1164 = vmatprep.subr.mxu0 %v191
  %1165 = vmatpush1.msra.mxu0 %v190
  %1166 = vmatprep.subr.mxu0 %v195
  %1167 = vmatpush1.msra.mxu0 %v194
  %1168 = vmatprep.subr.mxu0 %v199
  %1169 = vmatpush1.msra.mxu0 %v198
  %1170 = vmatprep.subr.mxu0 %v203
  %1171 = vmatpush1.msra.mxu0 %v202
  %1172 = vmatprep.subr.mxu0 %v207
  %1173 = vmatpush1.msra.mxu0 %v206
  %1174 = vmatprep.subr.mxu0 %v211
  %1175 = vmatpush1.msra.mxu0 %v210
  %1176 = vmatprep.subr.mxu0 %v215
  %1177 = vmatpush1.msra.mxu0 %v214
  %1178 = vmatprep.subr.mxu0 %v219
  %1179 = vmatpush1.msra.mxu0 %v218
  %1180 = vmatprep.subr.mxu0 %v223
  %1181 = vmatpush1.msra.mxu0 %v222
  %1182 = vmatprep.subr.mxu0 %v227
  %1183 = vmatpush1.msra.mxu0 %v226
  %1184 = vmatprep.subr.mxu0 %v231
  %1185 = vmatpush1.msra.mxu0 %v230
  %1186 = vmatprep.subr.mxu0 %v235
  %1187 = vmatpush1.msra.mxu0 %v234
  %1188 = vmatprep.subr.mxu0 %v239
  %1189 = vmatpush1.msra.mxu0 %v238
  %1190 = vmatprep.subr.mxu0 %v243
  %1191 = vmatpush1.msra.mxu0 %v242
  %1192 = vmatprep.subr.mxu0 %v247
  %1193 = vmatpush1.msra.mxu0 %v246
  %1194 = vmatprep.subr.mxu0 %v251
  %1195 = vmatpush1.msra.mxu0 %v250
  %1196 = vmatprep.subr.mxu0 0.0
  %1197 = vmatpush1.msra.mxu0 0.0
  %1198 = vmatprep.subr.mxu0 0.0
  %1199 = vmatpush1.msra.mxu0 0.0
  %1200 = vmatprep.subr.mxu0 0.0
  %1201 = vmatpush1.msra.mxu0 0.0
  %1202 = vmatprep.subr.mxu0 0.0
  %1203 = vmatpush1.msra.mxu0 0.0
  %1204 = vmatprep.subr.mxu0 0.0
  %1205 = vmatpush1.msra.mxu0 0.0
  %1206 = vmatprep.subr.mxu0 0.0
  %1207 = vmatpush1.msra.mxu0 0.0
  %1208 = vmatprep.subr.mxu0 0.0
  %1209 = vmatpush1.msra.mxu0 0.0
  %1210 = vmatprep.subr.mxu0 0.0
  %1211 = vmatpush1.msra.mxu0 0.0
  %1212 = vmatprep.subr.mxu0 0.0
  %1213 = vmatpush1.msra.mxu0 0.0
  %1214 = vmatprep.subr.mxu0 0.0
  %1215 = vmatpush1.msra.mxu0 0.0
  %1216 = vmatprep.subr.mxu0 0.0
  %1217 = vmatpush1.msra.mxu0 0.0
  %1218 = vmatprep.subr.mxu0 0.0
  %1219 = vmatpush1.msra.mxu0 0.0
  %1220 = vmatprep.subr.mxu0 0.0
  %1221 = vmatpush1.msra.mxu0 0.0
  %1222 = vmatprep.subr.mxu0 0.0
  %1223 = vmatpush1.msra.mxu0 0.0
  %1224 = vmatprep.subr.mxu0 0.0
  %1225 = vmatpush1.msra.mxu0 0.0
  %1226 = vmatprep.subr.mxu0 0.0
  %1227 = vmatpush1.msra.mxu0 0.0
  %1228 = vmatprep.mubr.f32.mxu0 0.0
  %1229 = vmatmul.mubr.f32.gmra.mrb[0].mxu0 %v1157
  %v1230 = vpop.f32.mrb[0].mxu0
  %v1231 = vadd.f32 0.0, %v1230
  %v1232 = vpop.f32.mrb[0].mxu0
  %v1233 = vadd.f32 0.0, %v1232
  %1234 = vdwg.mxu0
  %1235 = vmatprep.subr.mxu0 %v193
  %1236 = vmatpush1.msra.mxu0 %v192
  %1237 = vmatprep.subr.mxu0 %v197
  %1238 = vmatpush1.msra.mxu0 %v196
  %1239 = vmatprep.subr.mxu0 %v201
  %1240 = vmatpush1.msra.mxu0 %v200
  %1241 = vmatprep.subr.mxu0 %v205
  %1242 = vmatpush1.msra.mxu0 %v204
  %1243 = vmatprep.subr.mxu0 %v209
  %1244 = vmatpush1.msra.mxu0 %v208
  %1245 = vmatprep.subr.mxu0 %v213
  %1246 = vmatpush1.msra.mxu0 %v212
  %1247 = vmatprep.subr.mxu0 %v217
  %1248 = vmatpush1.msra.mxu0 %v216
  %1249 = vmatprep.subr.mxu0 %v221
  %1250 = vmatpush1.msra.mxu0 %v220
  %1251 = vmatprep.subr.mxu0 %v225
  %1252 = vmatpush1.msra.mxu0 %v224
  %1253 = vmatprep.subr.mxu0 %v229
  %1254 = vmatpush1.msra.mxu0 %v228
  %1255 = vmatprep.subr.mxu0 %v233
  %1256 = vmatpush1.msra.mxu0 %v232
  %1257 = vmatprep.subr.mxu0 %v237
  %1258 = vmatpush1.msra.mxu0 %v236
  %1259 = vmatprep.subr.mxu0 %v241
  %1260 = vmatpush1.msra.mxu0 %v240
  %1261 = vmatprep.subr.mxu0 %v245
  %1262 = vmatpush1.msra.mxu0 %v244
  %1263 = vmatprep.subr.mxu0 %v249
  %1264 = vmatpush1.msra.mxu0 %v248
  %1265 = vmatprep.subr.mxu0 %v253
  %1266 = vmatpush1.msra.mxu0 %v252
  %1267 = vmatprep.subr.mxu0 0.0
  %1268 = vmatpush1.msra.mxu0 0.0
  %1269 = vmatprep.subr.mxu0 0.0
  %1270 = vmatpush1.msra.mxu0 0.0
  %1271 = vmatprep.subr.mxu0 0.0
  %1272 = vmatpush1.msra.mxu0 0.0
  %1273 = vmatprep.subr.mxu0 0.0
  %1274 = vmatpush1.msra.mxu0 0.0
  %1275 = vmatprep.subr.mxu0 0.0
  %1276 = vmatpush1.msra.mxu0 0.0
  %1277 = vmatprep.subr.mxu0 0.0
  %1278 = vmatpush1.msra.mxu0 0.0
  %1279 = vmatprep.subr.mxu0 0.0
  %1280 = vmatpush1.msra.mxu0 0.0
  %1281 = vmatprep.subr.mxu0 0.0
  %1282 = vmatpush1.msra.mxu0 0.0
  %1283 = vmatprep.subr.mxu0 0.0
  %1284 = vmatpush1.msra.mxu0 0.0
  %1285 = vmatprep.subr.mxu0 0.0
  %1286 = vmatpush1.msra.mxu0 0.0
  %1287 = vmatprep.subr.mxu0 0.0
  %1288 = vmatpush1.msra.mxu0 0.0
  %1289 = vmatprep.subr.mxu0 0.0
  %1290 = vmatpush1.msra.mxu0 0.0
  %1291 = vmatprep.subr.mxu0 0.0
  %1292 = vmatpush1.msra.mxu0 0.0
  %1293 = vmatprep.subr.mxu0 0.0
  %1294 = vmatpush1.msra.mxu0 0.0
  %1295 = vmatprep.subr.mxu0 0.0
  %1296 = vmatpush1.msra.mxu0 0.0
  %1297 = vmatprep.subr.mxu0 0.0
  %1298 = vmatpush1.msra.mxu0 0.0
  %1299 = vmatprep.mubr.f32.mxu0 0.0
  %1300 = vmatmul.mubr.f32.gmra.mrb[0].mxu0 %v1157
  %v1301 = vpop.f32.mrb[0].mxu0
  %v1302 = vadd.f32 0.0, %v1301
  %v1303 = vpop.f32.mrb[0].mxu0
  %v1304 = vadd.f32 0.0, %v1303
  %1305 = vdwg.mxu0
  %v1306 = vadd.f32 %v1160, %v1231
  %v1307 = vadd.f32 %v1161, %v1233
  %v1308 = vadd.f32 %v1162, %v1302
  %v1309 = vadd.f32 %v1163, %v1304
  %v1310 = vxor.u32 %v1306, 2147483648
  %v1311 = vmul.f32 %v1310, 1.442695
  %v1312 = vpow.pop %v1311
  %v1313 = vadd.f32 %v1312, 1.0
  %v1314 = vrcp.pop %v1313
  %v1315 = vmul.f32 1.0, %v1314
  %v1316 = vxor.u32 %v1307, 2147483648
  %v1317 = vmul.f32 %v1316, 1.442695
  %v1318 = vpow.pop %v1317
  %v1319 = vadd.f32 %v1318, 1.0
  %v1320 = vrcp.pop %v1319
  %v1321 = vmul.f32 1.0, %v1320
  %v1322 = vtanh.pop %v1308
  %v1323 = vxor.u32 %v1309, 2147483648
  %v1324 = vmul.f32 %v1323, 1.442695
  %v1325 = vpow.pop %v1324
  %v1326 = vadd.f32 %v1325, 1.0
  %v1327 = vrcp.pop %v1326
  %v1328 = vmul.f32 1.0, %v1327
  %v1329 = vmul.f32 %v1321, %v1158
  %v1330 = vmul.f32 %v1315, %v1322
  %v1331 = vadd.f32 %v1329, %v1330
  %v1332 = vtanh.pop %v1331
  %v1333 = vmul.f32 %v1328, %v1332
  %1334 = vst [vmem:[#allocation2] sm:$0xff] %v1333
  %1335 = vst [vmem:[#allocation3] sm:$0xff] %v1331
  %s1336 = scalar_lea.vmem %s2, 40
  %1337 = vst [vmem:[%s1336] sm:$0xff] %v1333
  %v1338 = vld [vmem:[#allocation2] sm:$0xff]
  %v1339 = vld [vmem:[#allocation3] sm:$0xff]
  %s1340 = scalar_lea.vmem %s0, 192
  %v1341 = vld [vmem:[%s1340] sm:$0xff]
  %v1342 = vld [vmem:[%s1340 + $0x8] sm:$0xff]
  %v1343 = vld [vmem:[%s1340 + $0x10] sm:$0xff]
  %v1344 = vld [vmem:[%s1340 + $0x18] sm:$0xff]
  %1345 = vmatprep.subr.mxu0 %v191
  %1346 = vmatpush1.msra.mxu0 %v190
  %1347 = vmatprep.subr.mxu0 %v195
  %1348 = vmatpush1.msra.mxu0 %v194
  %1349 = vmatprep.subr.mxu0 %v199
  %1350 = vmatpush1.msra.mxu0 %v198
  %1351 = vmatprep.subr.mxu0 %v203
  %1352 = vmatpush1.msra.mxu0 %v202
  %1353 = vmatprep.subr.mxu0 %v207
  %1354 = vmatpush1.msra.mxu0 %v206
  %1355 = vmatprep.subr.mxu0 %v211
  %1356 = vmatpush1.msra.mxu0 %v210
  %1357 = vmatprep.subr.mxu0 %v215
  %1358 = vmatpush1.msra.mxu0 %v214
  %1359 = vmatprep.subr.mxu0 %v219
  %1360 = vmatpush1.msra.mxu0 %v218
  %1361 = vmatprep.subr.mxu0 %v223
  %1362 = vmatpush1.msra.mxu0 %v222
  %1363 = vmatprep.subr.mxu0 %v227
  %1364 = vmatpush1.msra.mxu0 %v226
  %1365 = vmatprep.subr.mxu0 %v231
  %1366 = vmatpush1.msra.mxu0 %v230
  %1367 = vmatprep.subr.mxu0 %v235
  %1368 = vmatpush1.msra.mxu0 %v234
  %1369 = vmatprep.subr.mxu0 %v239
  %1370 = vmatpush1.msra.mxu0 %v238
  %1371 = vmatprep.subr.mxu0 %v243
  %1372 = vmatpush1.msra.mxu0 %v242
  %1373 = vmatprep.subr.mxu0 %v247
  %1374 = vmatpush1.msra.mxu0 %v246
  %1375 = vmatprep.subr.mxu0 %v251
  %1376 = vmatpush1.msra.mxu0 %v250
  %1377 = vmatprep.subr.mxu0 0.0
  %1378 = vmatpush1.msra.mxu0 0.0
  %1379 = vmatprep.subr.mxu0 0.0
  %1380 = vmatpush1.msra.mxu0 0.0
  %1381 = vmatprep.subr.mxu0 0.0
  %1382 = vmatpush1.msra.mxu0 0.0
  %1383 = vmatprep.subr.mxu0 0.0
  %1384 = vmatpush1.msra.mxu0 0.0
  %1385 = vmatprep.subr.mxu0 0.0
  %1386 = vmatpush1.msra.mxu0 0.0
  %1387 = vmatprep.subr.mxu0 0.0
  %1388 = vmatpush1.msra.mxu0 0.0
  %1389 = vmatprep.subr.mxu0 0.0
  %1390 = vmatpush1.msra.mxu0 0.0
  %1391 = vmatprep.subr.mxu0 0.0
  %1392 = vmatpush1.msra.mxu0 0.0
  %1393 = vmatprep.subr.mxu0 0.0
  %1394 = vmatpush1.msra.mxu0 0.0
  %1395 = vmatprep.subr.mxu0 0.0
  %1396 = vmatpush1.msra.mxu0 0.0
  %1397 = vmatprep.subr.mxu0 0.0
  %1398 = vmatpush1.msra.mxu0 0.0
  %1399 = vmatprep.subr.mxu0 0.0
  %1400 = vmatpush1.msra.mxu0 0.0
  %1401 = vmatprep.subr.mxu0 0.0
  %1402 = vmatpush1.msra.mxu0 0.0
  %1403 = vmatprep.subr.mxu0 0.0
  %1404 = vmatpush1.msra.mxu0 0.0
  %1405 = vmatprep.subr.mxu0 0.0
  %1406 = vmatpush1.msra.mxu0 0.0
  %1407 = vmatprep.subr.mxu0 0.0
  %1408 = vmatpush1.msra.mxu0 0.0
  %1409 = vmatprep.mubr.f32.mxu0 0.0
  %1410 = vmatmul.mubr.f32.gmra.mrb[0].mxu0 %v1338
  %v1411 = vpop.f32.mrb[0].mxu0
  %v1412 = vadd.f32 0.0, %v1411
  %v1413 = vpop.f32.mrb[0].mxu0
  %v1414 = vadd.f32 0.0, %v1413
  %1415 = vdwg.mxu0
  %1416 = vmatprep.subr.mxu0 %v193
  %1417 = vmatpush1.msra.mxu0 %v192
  %1418 = vmatprep.subr.mxu0 %v197
  %1419 = vmatpush1.msra.mxu0 %v196
  %1420 = vmatprep.subr.mxu0 %v201
  %1421 = vmatpush1.msra.mxu0 %v200
  %1422 = vmatprep.subr.mxu0 %v205
  %1423 = vmatpush1.msra.mxu0 %v204
  %1424 = vmatprep.subr.mxu0 %v209
  %1425 = vmatpush1.msra.mxu0 %v208
  %1426 = vmatprep.subr.mxu0 %v213
  %1427 = vmatpush1.msra.mxu0 %v212
  %1428 = vmatprep.subr.mxu0 %v217
  %1429 = vmatpush1.msra.mxu0 %v216
  %1430 = vmatprep.subr.mxu0 %v221
  %1431 = vmatpush1.msra.mxu0 %v220
  %1432 = vmatprep.subr.mxu0 %v225
  %1433 = vmatpush1.msra.mxu0 %v224
  %1434 = vmatprep.subr.mxu0 %v229
  %1435 = vmatpush1.msra.mxu0 %v228
  %1436 = vmatprep.subr.mxu0 %v233
  %1437 = vmatpush1.msra.mxu0 %v232
  %1438 = vmatprep.subr.mxu0 %v237
  %1439 = vmatpush1.msra.mxu0 %v236
  %1440 = vmatprep.subr.mxu0 %v241
  %1441 = vmatpush1.msra.mxu0 %v240
  %1442 = vmatprep.subr.mxu0 %v245
  %1443 = vmatpush1.msra.mxu0 %v244
  %1444 = vmatprep.subr.mxu0 %v249
  %1445 = vmatpush1.msra.mxu0 %v248
  %1446 = vmatprep.subr.mxu0 %v253
  %1447 = vmatpush1.msra.mxu0 %v252
  %1448 = vmatprep.subr.mxu0 0.0
  %1449 = vmatpush1.msra.mxu0 0.0
  %1450 = vmatprep.subr.mxu0 0.0
  %1451 = vmatpush1.msra.mxu0 0.0
  %1452 = vmatprep.subr.mxu0 0.0
  %1453 = vmatpush1.msra.mxu0 0.0
  %1454 = vmatprep.subr.mxu0 0.0
  %1455 = vmatpush1.msra.mxu0 0.0
  %1456 = vmatprep.subr.mxu0 0.0
  %1457 = vmatpush1.msra.mxu0 0.0
  %1458 = vmatprep.subr.mxu0 0.0
  %1459 = vmatpush1.msra.mxu0 0.0
  %1460 = vmatprep.subr.mxu0 0.0
  %1461 = vmatpush1.msra.mxu0 0.0
  %1462 = vmatprep.subr.mxu0 0.0
  %1463 = vmatpush1.msra.mxu0 0.0
  %1464 = vmatprep.subr.mxu0 0.0
  %1465 = vmatpush1.msra.mxu0 0.0
  %1466 = vmatprep.subr.mxu0 0.0
  %1467 = vmatpush1.msra.mxu0 0.0
  %1468 = vmatprep.subr.mxu0 0.0
  %1469 = vmatpush1.msra.mxu0 0.0
  %1470 = vmatprep.subr.mxu0 0.0
  %1471 = vmatpush1.msra.mxu0 0.0
  %1472 = vmatprep.subr.mxu0 0.0
  %1473 = vmatpush1.msra.mxu0 0.0
  %1474 = vmatprep.subr.mxu0 0.0
  %1475 = vmatpush1.msra.mxu0 0.0
  %1476 = vmatprep.subr.mxu0 0.0
  %1477 = vmatpush1.msra.mxu0 0.0
  %1478 = vmatprep.subr.mxu0 0.0
  %1479 = vmatpush1.msra.mxu0 0.0
  %1480 = vmatprep.mubr.f32.mxu0 0.0
  %1481 = vmatmul.mubr.f32.gmra.mrb[0].mxu0 %v1338
  %v1482 = vpop.f32.mrb[0].mxu0
  %v1483 = vadd.f32 0.0, %v1482
  %v1484 = vpop.f32.mrb[0].mxu0
  %v1485 = vadd.f32 0.0, %v1484
  %1486 = vdwg.mxu0
  %v1487 = vadd.f32 %v1341, %v1412
  %v1488 = vadd.f32 %v1342, %v1414
  %v1489 = vadd.f32 %v1343, %v1483
  %v1490 = vadd.f32 %v1344, %v1485
  %v1491 = vxor.u32 %v1487, 2147483648
  %v1492 = vmul.f32 %v1491, 1.442695
  %v1493 = vpow.pop %v1492
  %v1494 = vadd.f32 %v1493, 1.0
  %v1495 = vrcp.pop %v1494
  %v1496 = vmul.f32 1.0, %v1495
  %v1497 = vxor.u32 %v1488, 2147483648
  %v1498 = vmul.f32 %v1497, 1.442695
  %v1499 = vpow.pop %v1498
  %v1500 = vadd.f32 %v1499, 1.0
  %v1501 = vrcp.pop %v1500
  %v1502 = vmul.f32 1.0, %v1501
  %v1503 = vtanh.pop %v1489
  %v1504 = vxor.u32 %v1490, 2147483648
  %v1505 = vmul.f32 %v1504, 1.442695
  %v1506 = vpow.pop %v1505
  %v1507 = vadd.f32 %v1506, 1.0
  %v1508 = vrcp.pop %v1507
  %v1509 = vmul.f32 1.0, %v1508
  %v1510 = vmul.f32 %v1502, %v1339
  %v1511 = vmul.f32 %v1496, %v1503
  %v1512 = vadd.f32 %v1510, %v1511
  %v1513 = vtanh.pop %v1512
  %v1514 = vmul.f32 %v1509, %v1513
  %1515 = vst [vmem:[#allocation2] sm:$0xff] %v1514
  %1516 = vst [vmem:[#allocation3] sm:$0xff] %v1512
  %s1517 = scalar_lea.vmem %s2, 48
  %1518 = vst [vmem:[%s1517] sm:$0xff] %v1514
  %v1519 = vld [vmem:[#allocation2] sm:$0xff]
  %v1520 = vld [vmem:[#allocation3] sm:$0xff]
  %s1521 = scalar_lea.vmem %s0, 224
  %v1522 = vld [vmem:[%s1521] sm:$0xff]
  %v1523 = vld [vmem:[%s1521 + $0x8] sm:$0xff]
  %v1524 = vld [vmem:[%s1521 + $0x10] sm:$0xff]
  %v1525 = vld [vmem:[%s1521 + $0x18] sm:$0xff]
  %1526 = vmatprep.subr.mxu0 %v191
  %1527 = vmatpush1.msra.mxu0 %v190
  %1528 = vmatprep.subr.mxu0 %v195
  %1529 = vmatpush1.msra.mxu0 %v194
  %1530 = vmatprep.subr.mxu0 %v199
  %1531 = vmatpush1.msra.mxu0 %v198
  %1532 = vmatprep.subr.mxu0 %v203
  %1533 = vmatpush1.msra.mxu0 %v202
  %1534 = vmatprep.subr.mxu0 %v207
  %1535 = vmatpush1.msra.mxu0 %v206
  %1536 = vmatprep.subr.mxu0 %v211
  %1537 = vmatpush1.msra.mxu0 %v210
  %1538 = vmatprep.subr.mxu0 %v215
  %1539 = vmatpush1.msra.mxu0 %v214
  %1540 = vmatprep.subr.mxu0 %v219
  %1541 = vmatpush1.msra.mxu0 %v218
  %1542 = vmatprep.subr.mxu0 %v223
  %1543 = vmatpush1.msra.mxu0 %v222
  %1544 = vmatprep.subr.mxu0 %v227
  %1545 = vmatpush1.msra.mxu0 %v226
  %1546 = vmatprep.subr.mxu0 %v231
  %1547 = vmatpush1.msra.mxu0 %v230
  %1548 = vmatprep.subr.mxu0 %v235
  %1549 = vmatpush1.msra.mxu0 %v234
  %1550 = vmatprep.subr.mxu0 %v239
  %1551 = vmatpush1.msra.mxu0 %v238
  %1552 = vmatprep.subr.mxu0 %v243
  %1553 = vmatpush1.msra.mxu0 %v242
  %1554 = vmatprep.subr.mxu0 %v247
  %1555 = vmatpush1.msra.mxu0 %v246
  %1556 = vmatprep.subr.mxu0 %v251
  %1557 = vmatpush1.msra.mxu0 %v250
  %1558 = vmatprep.subr.mxu0 0.0
  %1559 = vmatpush1.msra.mxu0 0.0
  %1560 = vmatprep.subr.mxu0 0.0
  %1561 = vmatpush1.msra.mxu0 0.0
  %1562 = vmatprep.subr.mxu0 0.0
  %1563 = vmatpush1.msra.mxu0 0.0
  %1564 = vmatprep.subr.mxu0 0.0
  %1565 = vmatpush1.msra.mxu0 0.0
  %1566 = vmatprep.subr.mxu0 0.0
  %1567 = vmatpush1.msra.mxu0 0.0
  %1568 = vmatprep.subr.mxu0 0.0
  %1569 = vmatpush1.msra.mxu0 0.0
  %1570 = vmatprep.subr.mxu0 0.0
  %1571 = vmatpush1.msra.mxu0 0.0
  %1572 = vmatprep.subr.mxu0 0.0
  %1573 = vmatpush1.msra.mxu0 0.0
  %1574 = vmatprep.subr.mxu0 0.0
  %1575 = vmatpush1.msra.mxu0 0.0
  %1576 = vmatprep.subr.mxu0 0.0
  %1577 = vmatpush1.msra.mxu0 0.0
  %1578 = vmatprep.subr.mxu0 0.0
  %1579 = vmatpush1.msra.mxu0 0.0
  %1580 = vmatprep.subr.mxu0 0.0
  %1581 = vmatpush1.msra.mxu0 0.0
  %1582 = vmatprep.subr.mxu0 0.0
  %1583 = vmatpush1.msra.mxu0 0.0
  %1584 = vmatprep.subr.mxu0 0.0
  %1585 = vmatpush1.msra.mxu0 0.0
  %1586 = vmatprep.subr.mxu0 0.0
  %1587 = vmatpush1.msra.mxu0 0.0
  %1588 = vmatprep.subr.mxu0 0.0
  %1589 = vmatpush1.msra.mxu0 0.0
  %1590 = vmatprep.mubr.f32.mxu0 0.0
  %1591 = vmatmul.mubr.f32.gmra.mrb[0].mxu0 %v1519
  %v1592 = vpop.f32.mrb[0].mxu0
  %v1593 = vadd.f32 0.0, %v1592
  %v1594 = vpop.f32.mrb[0].mxu0
  %v1595 = vadd.f32 0.0, %v1594
  %1596 = vdwg.mxu0
  %1597 = vmatprep.subr.mxu0 %v193
  %1598 = vmatpush1.msra.mxu0 %v192
  %1599 = vmatprep.subr.mxu0 %v197
  %1600 = vmatpush1.msra.mxu0 %v196
  %1601 = vmatprep.subr.mxu0 %v201
  %1602 = vmatpush1.msra.mxu0 %v200
  %1603 = vmatprep.subr.mxu0 %v205
  %1604 = vmatpush1.msra.mxu0 %v204
  %1605 = vmatprep.subr.mxu0 %v209
  %1606 = vmatpush1.msra.mxu0 %v208
  %1607 = vmatprep.subr.mxu0 %v213
  %1608 = vmatpush1.msra.mxu0 %v212
  %1609 = vmatprep.subr.mxu0 %v217
  %1610 = vmatpush1.msra.mxu0 %v216
  %1611 = vmatprep.subr.mxu0 %v221
  %1612 = vmatpush1.msra.mxu0 %v220
  %1613 = vmatprep.subr.mxu0 %v225
  %1614 = vmatpush1.msra.mxu0 %v224
  %1615 = vmatprep.subr.mxu0 %v229
  %1616 = vmatpush1.msra.mxu0 %v228
  %1617 = vmatprep.subr.mxu0 %v233
  %1618 = vmatpush1.msra.mxu0 %v232
  %1619 = vmatprep.subr.mxu0 %v237
  %1620 = vmatpush1.msra.mxu0 %v236
  %1621 = vmatprep.subr.mxu0 %v241
  %1622 = vmatpush1.msra.mxu0 %v240
  %1623 = vmatprep.subr.mxu0 %v245
  %1624 = vmatpush1.msra.mxu0 %v244
  %1625 = vmatprep.subr.mxu0 %v249
  %1626 = vmatpush1.msra.mxu0 %v248
  %1627 = vmatprep.subr.mxu0 %v253
  %1628 = vmatpush1.msra.mxu0 %v252
  %1629 = vmatprep.subr.mxu0 0.0
  %1630 = vmatpush1.msra.mxu0 0.0
  %1631 = vmatprep.subr.mxu0 0.0
  %1632 = vmatpush1.msra.mxu0 0.0
  %1633 = vmatprep.subr.mxu0 0.0
  %1634 = vmatpush1.msra.mxu0 0.0
  %1635 = vmatprep.subr.mxu0 0.0
  %1636 = vmatpush1.msra.mxu0 0.0
  %1637 = vmatprep.subr.mxu0 0.0
  %1638 = vmatpush1.msra.mxu0 0.0
  %1639 = vmatprep.subr.mxu0 0.0
  %1640 = vmatpush1.msra.mxu0 0.0
  %1641 = vmatprep.subr.mxu0 0.0
  %1642 = vmatpush1.msra.mxu0 0.0
  %1643 = vmatprep.subr.mxu0 0.0
  %1644 = vmatpush1.msra.mxu0 0.0
  %1645 = vmatprep.subr.mxu0 0.0
  %1646 = vmatpush1.msra.mxu0 0.0
  %1647 = vmatprep.subr.mxu0 0.0
  %1648 = vmatpush1.msra.mxu0 0.0
  %1649 = vmatprep.subr.mxu0 0.0
  %1650 = vmatpush1.msra.mxu0 0.0
  %1651 = vmatprep.subr.mxu0 0.0
  %1652 = vmatpush1.msra.mxu0 0.0
  %1653 = vmatprep.subr.mxu0 0.0
  %1654 = vmatpush1.msra.mxu0 0.0
  %1655 = vmatprep.subr.mxu0 0.0
  %1656 = vmatpush1.msra.mxu0 0.0
  %1657 = vmatprep.subr.mxu0 0.0
  %1658 = vmatpush1.msra.mxu0 0.0
  %1659 = vmatprep.subr.mxu0 0.0
  %1660 = vmatpush1.msra.mxu0 0.0
  %1661 = vmatprep.mubr.f32.mxu0 0.0
  %1662 = vmatmul.mubr.f32.gmra.mrb[0].mxu0 %v1519
  %v1663 = vpop.f32.mrb[0].mxu0
  %v1664 = vadd.f32 0.0, %v1663
  %v1665 = vpop.f32.mrb[0].mxu0
  %v1666 = vadd.f32 0.0, %v1665
  %1667 = vdwg.mxu0
  %v1668 = vadd.f32 %v1522, %v1593
  %v1669 = vadd.f32 %v1523, %v1595
  %v1670 = vadd.f32 %v1524, %v1664
  %v1671 = vadd.f32 %v1525, %v1666
  %v1672 = vxor.u32 %v1668, 2147483648
  %v1673 = vmul.f32 %v1672, 1.442695
  %v1674 = vpow.pop %v1673
  %v1675 = vadd.f32 %v1674, 1.0
  %v1676 = vrcp.pop %v1675
  %v1677 = vmul.f32 1.0, %v1676
  %v1678 = vxor.u32 %v1669, 2147483648
  %v1679 = vmul.f32 %v1678, 1.442695
  %v1680 = vpow.pop %v1679
  %v1681 = vadd.f32 %v1680, 1.0
  %v1682 = vrcp.pop %v1681
  %v1683 = vmul.f32 1.0, %v1682
  %v1684 = vtanh.pop %v1670
  %v1685 = vxor.u32 %v1671, 2147483648
  %v1686 = vmul.f32 %v1685, 1.442695
  %v1687 = vpow.pop %v1686
  %v1688 = vadd.f32 %v1687, 1.0
  %v1689 = vrcp.pop %v1688
  %v1690 = vmul.f32 1.0, %v1689
  %v1691 = vmul.f32 %v1683, %v1520
  %v1692 = vmul.f32 %v1677, %v1684
  %v1693 = vadd.f32 %v1691, %v1692
  %v1694 = vtanh.pop %v1693
  %v1695 = vmul.f32 %v1690, %v1694
  %1696 = vst [vmem:[#allocation2] sm:$0xff] %v1695
  %1697 = vst [vmem:[#allocation3] sm:$0xff] %v1693
  %s1698 = scalar_lea.vmem %s2, 56
  %1699 = vst [vmem:[%s1698] sm:$0xff] %v1695
  // Predicated region
  $region44: #{encoder_forward.2} parent=0 // pred_check
    %p1700 = pneg %p12
  $region45: #{encoder_forward.2} parent=0 // pred_check_branch
    %1702 = sbr.rel (%p1700) target = $region47
  $region46: #{encoder_forward.2} parent=0 // pred_region
    %v1703 = vld [vmem:[#allocation2] sm:$0xff]
    %1704 = vst [vmem:[%s3] sm:$0xff] %v1703
    %v1705 = vld [vmem:[#allocation3] sm:$0xff]
    %1706 = vst [vmem:[%s4] sm:$0xff] %v1705
  $region47: #{encoder_forward.2} parent=0 // pred_fallthru
    _
  // Predicated region
  $region48: #{encoder_forward.2} parent=0 // pred_check
    _
  $region49: #{encoder_forward.2} parent=0 // pred_check_branch
    %1708 = sbr.rel (0) target = $region51
  $region50: #{encoder_forward.2} parent=0 // pred_region
    _
  $region51: #{encoder_forward.2} parent=0 // pred_fallthru
    _
  // Predicated region
  $region52: #{encoder_forward.2} parent=0 // pred_check
    _
  $region53: #{encoder_forward.2} parent=0 // pred_check_branch
    %1710 = sbr.rel (0) target = $region55
  $region54: #{encoder_forward.2} parent=0 // pred_region
    _
  $region55: #{encoder_forward.2} parent=0 // pred_fallthru
    _
  // Predicated region
  $region56: #{encoder_forward.2} parent=0 // pred_check
    _
  $region57: #{encoder_forward.2} parent=0 // pred_check_branch
    %1712 = sbr.rel (0) target = $region59
  $region58: #{encoder_forward.2} parent=0 // pred_region
    _
  $region59: #{encoder_forward.2} parent=0 // pred_fallthru
    _
  // Predicated region
  $region60: #{encoder_forward.2} parent=0 // pred_check
    _
  $region61: #{encoder_forward.2} parent=0 // pred_check_branch
    %1714 = sbr.rel (0) target = $region63
  $region62: #{encoder_forward.2} parent=0 // pred_region
    _
  $region63: #{encoder_forward.2} parent=0 // pred_fallthru
    _
  // Predicated region
  $region64: #{encoder_forward.2} parent=0 // pred_check
    _
  $region65: #{encoder_forward.2} parent=0 // pred_check_branch
    %1716 = sbr.rel (0) target = $region67
  $region66: #{encoder_forward.2} parent=0 // pred_region
    _
  $region67: #{encoder_forward.2} parent=0 // pred_fallthru
    _
  // Predicated region
  $region68: #{encoder_forward.2} parent=0 // pred_check
    _
  $region69: #{encoder_forward.2} parent=0 // pred_check_branch
    %1718 = sbr.rel (0) target = $region71
  $region70: #{encoder_forward.2} parent=0 // pred_region
    _
  $region71: #{encoder_forward.2} parent=0 // pred_fallthru
    _
  %1719 = vsyncmov [#allocation5]
  %s1720 = vpop.sfrf %1719
  %p1721 = scmp.eq.s32.totalorder %s1720, 0
  %p1722 = pneg %p1721
  %1724 = shalt.err (%p1722)

</llo_original>
